<compile_context>
chip_gen: v5e
topology: v5e:2x2
jax: 0.10.0
libtpu: 0.0.40
codegen_flags: <defaults>
</compile_context>

<pallas_src>
import functools
import math

import jax
import jax.numpy as jnp
from jax import lax
from jax.experimental import pallas as pl
from jax.experimental.pallas import tpu as pltpu


# ----------------------------------------------------------------------------
# Fused transformer-encoder layer kernel
#   optional prologue: label one-hot embedding + bbox projection  (layer 0)
#   optional epilogue: masked mean pool + slide projection        (last layer)
# ----------------------------------------------------------------------------

def _fused_layer_kernel(*refs, nhead, eps, tb, seq, num_label,
                        has_embed, has_pool):
    in_refs = list(refs[:-2])
    o_ref = refs[-2]
    attn_scr = refs[-1]                       # VMEM [TB*S, D] f32 accumulator
    it = iter(in_refs)

    if has_embed:
        lbl_ref = next(it)                    # [TB, S, 1] int32
        bbox_ref = next(it)                   # [TB, S, 4] f32
        emb_ref = next(it)                    # [num_label, D] bf16
        bw_ref = next(it)                     # [4, D] bf16
        bb_ref = next(it)                     # [1, D] f32
    else:
        x_ref = next(it)                      # [TB, S, D] f32
    mask_ref = next(it)                       # [TB, 1, S] f32 additive mask
    wqkv_ref = next(it); bqkv_ref = next(it)  # [D, 3D] bf16 / [1, 3D] f32
    wo_ref = next(it); bo_ref = next(it)      # [D, D]  bf16 / [1, D]  f32
    g1_ref = next(it); b1_ref = next(it)      # [1, D] f32
    w1_ref = next(it); bb1_ref = next(it)     # [D, Dff] bf16 / [1, Dff] f32
    w2_ref = next(it); bb2_ref = next(it)     # [Dff, D] bf16 / [1, D]  f32
    g2_ref = next(it); b2_ref = next(it)      # [1, D] f32
    if has_pool:
        keep_ref = next(it)                   # [TB, 1, S] f32 keep mask
        pw_ref = next(it)                     # [D, dim_slide] bf16
        pb_ref = next(it)                     # [1, dim_slide] f32

    d_model = wqkv_ref.shape[0]
    m = tb * seq
    dh = d_model // nhead
    scale = 1.0 / float(dh) ** 0.5

    # ---- input rows: either previous layer's activations or fused embedding
    if has_embed:
        lbl = lbl_ref[...].reshape(m, 1)                                 # [M,1]
        eq = lbl == lax.broadcasted_iota(jnp.int32, (m, num_label), 1)
        onehot = jnp.where(eq, 1.0, 0.0).astype(jnp.bfloat16)            # [M,V]
        emb = jnp.dot(onehot, emb_ref[...],
                      preferred_element_type=jnp.float32)                # [M,D]
        bb = bbox_ref[...].astype(jnp.bfloat16).reshape(m, 4)
        x = emb + jnp.dot(bb, bw_ref[...],
                          preferred_element_type=jnp.float32) + bb_ref[...]
    else:
        x = x_ref[...].astype(jnp.float32).reshape(m, d_model)

    add_mask = mask_ref[...].astype(jnp.float32)                         # [TB,1,S]

    # ---- QKV projection on flattened [TB*S, D] rows (bf16 in, f32 acc) ----
    qkv = jnp.dot(x.astype(jnp.bfloat16), wqkv_ref[...],
                  preferred_element_type=jnp.float32) + bqkv_ref[...]    # [M,3D]
    q = qkv[:, :d_model].reshape(tb, seq, d_model)
    k = qkv[:, d_model:2 * d_model].reshape(tb, seq, d_model)
    v = qkv[:, 2 * d_model:].reshape(tb, seq, d_model)

    # ---- attention: per-head (static unroll), batched over TB; each head's
    #      output is written straight into a lane slice of the VMEM scratch
    #      (no jnp.concatenate copies).  Padded query rows attend uniformly
    #      over masked keys; harmless because the masked-mean pool drops them.
    for h in range(nhead):
        sl = slice(h * dh, (h + 1) * dh)
        qh = q[:, :, sl].astype(jnp.bfloat16)
        kh = k[:, :, sl].astype(jnp.bfloat16)
        vh = v[:, :, sl].astype(jnp.bfloat16)
        s = jnp.einsum("bqd,bkd->bqk", qh, kh,
                       preferred_element_type=jnp.float32) * scale + add_mask
        s = s - jnp.max(s, axis=-1, keepdims=True)
        p = jnp.exp(s)
        p = p * pl.reciprocal(jnp.sum(p, axis=-1, keepdims=True), approx=False)
        oh = jnp.einsum("bqk,bkd->bqd", p.astype(jnp.bfloat16), vh,
                        preferred_element_type=jnp.float32)              # [TB,S,Dh]
        attn_scr[:, sl] = oh.reshape(m, dh)

    # ---- output projection + residual + LayerNorm1 (post-norm, f32) ----
    attn = jnp.dot(attn_scr[...].astype(jnp.bfloat16), wo_ref[...],
                   preferred_element_type=jnp.float32) + bo_ref[...]
    h1 = x + attn
    mu = jnp.mean(h1, axis=-1, keepdims=True)
    var = jnp.mean((h1 - mu) ** 2, axis=-1, keepdims=True)
    h1 = (h1 - mu) * lax.rsqrt(var + eps) * g1_ref[...] + b1_ref[...]

    # ---- feed forward + residual + LayerNorm2 ----
    f = jnp.dot(h1.astype(jnp.bfloat16), w1_ref[...],
                preferred_element_type=jnp.float32) + bb1_ref[...]
    f = jnp.maximum(f, 0.0)
    f = jnp.dot(f.astype(jnp.bfloat16), w2_ref[...],
                preferred_element_type=jnp.float32) + bb2_ref[...]
    h2 = h1 + f
    mu = jnp.mean(h2, axis=-1, keepdims=True)
    var = jnp.mean((h2 - mu) ** 2, axis=-1, keepdims=True)
    h2 = (h2 - mu) * lax.rsqrt(var + eps) * g2_ref[...] + b2_ref[...]

    if has_pool:
        # masked mean pool over the sequence + projection to dim_slide.
        # A fully padded slide falls back to the projection bias (cnt clamp).
        keep = keep_ref[...].astype(jnp.float32)                          # [TB,1,S]
        cnt = jnp.maximum(jnp.sum(keep, axis=-1, keepdims=True), 1.0)
        pooled = jnp.einsum("bks,bsd->bkd",
                            keep.astype(jnp.bfloat16),
                            h2.reshape(tb, seq, d_model).astype(jnp.bfloat16),
                            preferred_element_type=jnp.float32) / cnt     # [TB,1,D]
        pooled = pooled.reshape(tb, d_model)
        y = jnp.dot(pooled.astype(jnp.bfloat16), pw_ref[...],
                    preferred_element_type=jnp.float32) + pb_ref[...]
        o_ref[...] = y.astype(o_ref.dtype)                                # [TB,N]
    else:
        o_ref[...] = h2.reshape(tb, seq, d_model).astype(o_ref.dtype)


def _choose_batch_tile(nb, seq, max_rows=2048, target_rows=256):
    """Items per grid step. One step if everything fits comfortably, else a
    sublane-aligned (multiple-of-8) tile near the 256-row MXU target.
    (v7x note: prefer an even grid count so both TensorCores get work.)"""
    if nb * seq <= max_rows:
        return nb
    tb = max(8, ((target_rows // max(seq, 1)) // 8) * 8)
    return min(tb, ((nb + 7) // 8) * 8)


def _fused_encoder_layer(*, layer, nhead, tb, seq, d_model, eps=1e-5,
                         x=None, labels=None, bbox=None, emb_tbl=None,
                         bbox_w=None, bbox_b=None,
                         add_mask=None, keep=None, proj_w=None, proj_b=None):
    has_embed = x is None
    has_pool = proj_w is not None
    nb = labels.shape[0] if has_embed else x.shape[0]
    assert nb % tb == 0
    grid = (nb // tb,)
    num_label = emb_tbl.shape[0] if has_embed else 0
    dim_slide = proj_w.shape[1] if has_pool else 0

    def full(arr):
        nd = arr.ndim
        return pl.BlockSpec(arr.shape, lambda i, _nd=nd: (0,) * _nd)

    def per_b(shape):
        nd = len(shape)
        return pl.BlockSpec(shape, lambda i, _nd=nd: (i,) + (0,) * (_nd - 1))

    args, specs, blk = [], [], []

    def add_full(a):
        args.append(a); specs.append(full(a)); blk.append((a.shape, a.dtype))

    def add_perb(a, bshape):
        args.append(a); specs.append(per_b(bshape)); blk.append((bshape, a.dtype))

    if has_embed:
        add_perb(labels, (tb, seq, 1))
        add_perb(bbox, (tb, seq, 4))
        add_full(emb_tbl)
        add_full(bbox_w)
        add_full(bbox_b.reshape(1, -1))
    else:
        add_perb(x, (tb, seq, d_model))
    add_perb(add_mask, (tb, 1, seq))
    add_full(layer["in_proj_w"]);  add_full(layer["in_proj_b"].reshape(1, -1))
    add_full(layer["out_proj_w"]); add_full(layer["out_proj_b"].reshape(1, -1))
    add_full(layer["ln1_g"].reshape(1, -1)); add_full(layer["ln1_b"].reshape(1, -1))
    add_full(layer["ff1_w"]); add_full(layer["ff1_b"].reshape(1, -1))
    add_full(layer["ff2_w"]); add_full(layer["ff2_b"].reshape(1, -1))
    add_full(layer["ln2_g"].reshape(1, -1)); add_full(layer["ln2_b"].reshape(1, -1))
    if has_pool:
        add_perb(keep, (tb, 1, seq))
        add_full(proj_w)
        add_full(proj_b.reshape(1, -1))
        out_shape = jax.ShapeDtypeStruct((nb, dim_slide), jnp.float32)
        out_spec = pl.BlockSpec((tb, dim_slide), lambda i: (i, 0))
        out_blk = ((tb, dim_slide), jnp.float32)
    else:
        out_shape = jax.ShapeDtypeStruct((nb, seq, d_model), jnp.float32)
        out_spec = per_b((tb, seq, d_model))
        out_blk = ((tb, seq, d_model), jnp.float32)

    # Explicit VMEM budget from actual block sizes (x2 for double-buffering)
    # + scratch + headroom; clamped to v7x's 64 MiB physical VMEM.
    def nbytes(shape, dtype):
        return math.prod(shape) * jnp.dtype(dtype).itemsize
    vmem = sum(nbytes(s, d) for s, d in blk) + nbytes(*out_blk)
    vmem = 2 * vmem + nbytes((tb * seq, d_model), jnp.float32) + (4 << 20)
    vmem = int(min(max(vmem, 32 << 20), 64 << 20))

    kernel = functools.partial(_fused_layer_kernel, nhead=nhead, eps=eps,
                               tb=tb, seq=seq, num_label=num_label,
                               has_embed=has_embed, has_pool=has_pool)
    return pl.pallas_call(
        kernel,
        out_shape=out_shape,
        grid=grid,
        in_specs=specs,
        out_specs=out_spec,
        scratch_shapes=[pltpu.VMEM((tb * seq, d_model), jnp.float32)],
        compiler_params=pltpu.CompilerParams(
            dimension_semantics=("parallel",),
            vmem_limit_bytes=vmem),
    )(*args)


# ----------------------------------------------------------------------------
# Deck-level max pool + fc_out (tiny; whole arrays in VMEM)
# ----------------------------------------------------------------------------

def _deck_kernel(s_ref, w_ref, b_ref, o_ref):
    s = s_ref[...].astype(jnp.float32)                   # [num_slide, B, dim]
    pooled = jnp.max(s, axis=0)                          # [B, dim]
    y = jnp.dot(pooled.astype(jnp.bfloat16), w_ref[...],
                preferred_element_type=jnp.float32) + b_ref[...]
    o_ref[...] = y.astype(o_ref.dtype)


def deck_pool_fc(stacked, w, b):
    _, batch, _ = stacked.shape
    n = w.shape[1]
    return pl.pallas_call(
        _deck_kernel,
        out_shape=jax.ShapeDtypeStruct((batch, n), jnp.float32),
        in_specs=[pl.BlockSpec(memory_space=pltpu.MemorySpace.VMEM)] * 3,
        out_specs=pl.BlockSpec(memory_space=pltpu.MemorySpace.VMEM),
    )(stacked, w, b.reshape(1, n))


# ----------------------------------------------------------------------------
# Model glue
# ----------------------------------------------------------------------------

def slide_encoder_forward(params, bbox, labels, padding_mask):
    """bbox [NB,S,4] f32, labels [NB,S] int, padding_mask [NB,S] bool (True=pad)."""
    nb, seq = labels.shape
    d_model, nhead = params["d_model"], params["nhead"]
    tb = _choose_batch_tile(nb, seq)
    nb_pad = ((nb + tb - 1) // tb) * tb
    pad = nb_pad - nb
    if pad:   # pad with fully-masked dummy slides; results are sliced off below
        pad_idx = int(params["padding_idx"])
        bbox = jnp.concatenate([bbox, jnp.zeros((pad, seq, 4), bbox.dtype)], 0)
        labels = jnp.concatenate(
            [labels, jnp.full((pad, seq), pad_idx, labels.dtype)], 0)
        padding_mask = jnp.concatenate(
            [padding_mask, jnp.ones((pad, seq), dtype=bool)], 0)

    add_mask = jnp.where(padding_mask, -1e9, 0.0).astype(jnp.float32)[:, None, :]
    keep = (~padding_mask).astype(jnp.float32)[:, None, :]
    labels3 = labels.astype(jnp.int32)[:, :, None]

    layers = params["layers"]
    last = len(layers) - 1
    x = None
    for li, lyr in enumerate(layers):
        x = _fused_encoder_layer(
            layer=lyr, nhead=nhead, tb=tb, seq=seq, d_model=d_model,
            x=x,
            labels=labels3 if li == 0 else None,
            bbox=bbox if li == 0 else None,
            emb_tbl=params["label_emb"] if li == 0 else None,
            bbox_w=params["bbox_w"] if li == 0 else None,
            bbox_b=params["bbox_b"] if li == 0 else None,
            add_mask=add_mask,
            keep=keep if li == last else None,
            proj_w=params["proj_w"] if li == last else None,
            proj_b=params["proj_b"] if li == last else None)
    return x[:nb]                                        # [NB, dim_slide]


def slide_deck_encoder_forward(params, bboxes, labels, padding_masks):
    """bboxes [num_slide,B,S,4], labels [num_slide,B,S], padding_masks [num_slide,B,S]."""
    num_slide, batch, seq = labels.shape
    nb = num_slide * batch
    # Slide loop folded into the batch axis: one encoder pass for all slides.
    slides = slide_encoder_forward(params,
                                   bboxes.reshape(nb, seq, 4),
                                   labels.reshape(nb, seq),
                                   padding_masks.reshape(nb, seq))
    stacked = slides.reshape(num_slide, batch, -1)
    # max over slides + fc_out (reference defines LeakyReLU but never applies it)
    return deck_pool_fc(stacked, params["fc_out_w"], params["fc_out_b"])


# ----------------------------------------------------------------------------
# Deterministic parameter construction (MXU weight matrices stored in bf16)
# ----------------------------------------------------------------------------

def init_params(key, *, num_label, dim_slide, small_dim_slide, padding_idx,
                d_model, nhead, num_layers, d_ff):
    assert d_model % nhead == 0

    def mat(k, shape, scale=0.05):       # matmul operand -> bf16
        return (scale * jax.random.normal(k, shape)).astype(jnp.bfloat16)

    def vec(k, shape, scale=0.05):       # bias / f32 path
        return (scale * jax.random.normal(k, shape)).astype(jnp.float32)

    keys = iter(jax.random.split(key, 8 + 10 * num_layers))
    emb = mat(next(keys), (num_label, d_model))
    emb = emb.at[padding_idx].set(0.0)                   # padding row is zero
    params = {
        "d_model": d_model, "nhead": nhead, "padding_idx": padding_idx,
        "label_emb": emb,
        "bbox_w": mat(next(keys), (4, d_model)), "bbox_b": vec(next(keys), (d_model,)),
        "proj_w": mat(next(keys), (d_model, dim_slide)),
        "proj_b": vec(next(keys), (dim_slide,)),
        "fc_out_w": mat(next(keys), (dim_slide, small_dim_slide)),
        "fc_out_b": vec(next(keys), (small_dim_slide,)),
        "layers": [],
    }
    for _ in range(num_layers):
        params["layers"].append({
            "in_proj_w": mat(next(keys), (d_model, 3 * d_model)),
            "in_proj_b": vec(next(keys), (3 * d_model,)),
            "out_proj_w": mat(next(keys), (d_model, d_model)),
            "out_proj_b": vec(next(keys), (d_model,)),
            "ln1_g": jnp.ones((d_model,), jnp.float32),
            "ln1_b": jnp.zeros((d_model,), jnp.float32),
            "ff1_w": mat(next(keys), (d_model, d_ff)),
            "ff1_b": vec(next(keys), (d_ff,)),
            "ff2_w": mat(next(keys), (d_ff, d_model)),
            "ff2_b": vec(next(keys), (d_model,)),
            "ln2_g": jnp.ones((d_model,), jnp.float32),
            "ln2_b": jnp.zeros((d_model,), jnp.float32),
        })
    return params


# ----------------------------------------------------------------------------
# Demo
# ----------------------------------------------------------------------------

if __name__ == "__main__":
    num_label, padding_idx = 10, 0
    dim_slide, small_dim_slide = 32, 16
    num_slide, batch, seq = 3, 2, 8
    d_model, nhead, num_layers, d_ff = 32, 4, 2, 64

    root = jax.random.PRNGKey(0)
    kp, kb, kl = jax.random.split(root, 3)

    params = init_params(kp, num_label=num_label, dim_slide=dim_slide,
                         small_dim_slide=small_dim_slide, padding_idx=padding_idx,
                         d_model=d_model, nhead=nhead, num_layers=num_layers,
                         d_ff=d_ff)

    bboxes = jax.random.uniform(kb, (num_slide, batch, seq, 4), dtype=jnp.float32)
    labels = jax.random.randint(kl, (num_slide, batch, seq), 1, num_label).astype(jnp.int32)
    # last two tokens of every slide are padding
    pos = jnp.arange(seq)
    padding_masks = jnp.broadcast_to(pos >= seq - 2, (num_slide, batch, seq))
    labels = jnp.where(padding_masks, padding_idx, labels)

    out = slide_deck_encoder_forward(params, bboxes, labels, padding_masks)
    out = jax.block_until_ready(out)
    assert out.shape == (batch, small_dim_slide), out.shape
    assert bool(jnp.all(jnp.isfinite(out)))
    print("KERNEL_OK")
</pallas_src>

<mosaic_0001>
module attributes {stable_mosaic.version = 11 : i64} {
  func.func @_fused_layer_kernel(%arg0: i32, %arg1: memref<6x8x1xi32, #tpu.memory_space<vmem>>, %arg2: memref<6x8x4xf32, #tpu.memory_space<vmem>>, %arg3: memref<10x32xbf16, #tpu.memory_space<vmem>>, %arg4: memref<4x32xbf16, #tpu.memory_space<vmem>>, %arg5: memref<1x32xf32, #tpu.memory_space<vmem>>, %arg6: memref<6x1x8xf32, #tpu.memory_space<vmem>>, %arg7: memref<32x96xbf16, #tpu.memory_space<vmem>>, %arg8: memref<1x96xf32, #tpu.memory_space<vmem>>, %arg9: memref<32x32xbf16, #tpu.memory_space<vmem>>, %arg10: memref<1x32xf32, #tpu.memory_space<vmem>>, %arg11: memref<1x32xf32, #tpu.memory_space<vmem>>, %arg12: memref<1x32xf32, #tpu.memory_space<vmem>>, %arg13: memref<32x64xbf16, #tpu.memory_space<vmem>>, %arg14: memref<1x64xf32, #tpu.memory_space<vmem>>, %arg15: memref<64x32xbf16, #tpu.memory_space<vmem>>, %arg16: memref<1x32xf32, #tpu.memory_space<vmem>>, %arg17: memref<1x32xf32, #tpu.memory_space<vmem>>, %arg18: memref<1x32xf32, #tpu.memory_space<vmem>>, %arg19: memref<6x8x32xf32, #tpu.memory_space<vmem>>, %arg20: memref<48x32xf32, #tpu.memory_space<vmem>>) attributes {dimension_semantics = [#tpu.dimension_semantics<parallel>], iteration_bounds = array<i64: 1>, scalar_prefetch = 0 : i64, scratch_operands = 1 : i64, tpu.core_type = #tpu.core_type<tc>, window_params = [{transform_indices = @transform_0, window_bounds = array<i64: 6, 8, 1>}, {transform_indices = @transform_1, window_bounds = array<i64: 6, 8, 4>}, {pipeline_mode = #tpu.pipeline_mode<synchronous>, transform_indices = @transform_2, window_bounds = array<i64: 10, 32>}, {pipeline_mode = #tpu.pipeline_mode<synchronous>, transform_indices = @transform_3, window_bounds = array<i64: 4, 32>}, {pipeline_mode = #tpu.pipeline_mode<synchronous>, transform_indices = @transform_4, window_bounds = array<i64: 1, 32>}, {transform_indices = @transform_5, window_bounds = array<i64: 6, 1, 8>}, {pipeline_mode = #tpu.pipeline_mode<synchronous>, transform_indices = @transform_6, window_bounds = array<i64: 32, 96>}, {pipeline_mode = #tpu.pipeline_mode<synchronous>, transform_indices = @transform_7, window_bounds = array<i64: 1, 96>}, {pipeline_mode = #tpu.pipeline_mode<synchronous>, transform_indices = @transform_8, window_bounds = array<i64: 32, 32>}, {pipeline_mode = #tpu.pipeline_mode<synchronous>, transform_indices = @transform_9, window_bounds = array<i64: 1, 32>}, {pipeline_mode = #tpu.pipeline_mode<synchronous>, transform_indices = @transform_10, window_bounds = array<i64: 1, 32>}, {pipeline_mode = #tpu.pipeline_mode<synchronous>, transform_indices = @transform_11, window_bounds = array<i64: 1, 32>}, {pipeline_mode = #tpu.pipeline_mode<synchronous>, transform_indices = @transform_12, window_bounds = array<i64: 32, 64>}, {pipeline_mode = #tpu.pipeline_mode<synchronous>, transform_indices = @transform_13, window_bounds = array<i64: 1, 64>}, {pipeline_mode = #tpu.pipeline_mode<synchronous>, transform_indices = @transform_14, window_bounds = array<i64: 64, 32>}, {pipeline_mode = #tpu.pipeline_mode<synchronous>, transform_indices = @transform_15, window_bounds = array<i64: 1, 32>}, {pipeline_mode = #tpu.pipeline_mode<synchronous>, transform_indices = @transform_16, window_bounds = array<i64: 1, 32>}, {pipeline_mode = #tpu.pipeline_mode<synchronous>, transform_indices = @transform_17, window_bounds = array<i64: 1, 32>}, {transform_indices = @transform_18, window_bounds = array<i64: 6, 8, 32>}]} {
    %c0 = arith.constant 0 : index
    %c0_0 = arith.constant 0 : index
    %c0_1 = arith.constant 0 : index
    %0 = vector.load %arg1[%c0, %c0_0, %c0_1] : memref<6x8x1xi32, #tpu.memory_space<vmem>>, vector<6x8x1xi32>
    %1 = vector.shape_cast %0 : vector<6x8x1xi32> to vector<48x1xi32>
    %2 = tpu.iota {dimensions = array<i32: 1>} : vector<48x10xi32>
    %3 = vector.broadcast %1 : vector<48x1xi32> to vector<48x10xi32>
    %4 = arith.cmpi eq, %3, %2 : vector<48x10xi32>
    %cst = arith.constant 1.000000e+00 : f32
    %cst_2 = arith.constant 0.000000e+00 : f32
    %5 = vector.broadcast %cst : f32 to vector<48x10xf32>
    %6 = vector.broadcast %cst_2 : f32 to vector<48x10xf32>
    %7 = arith.select %4, %5, %6 : vector<48x10xi1>, vector<48x10xf32>
    %8 = arith.truncf %7 : vector<48x10xf32> to vector<48x10xbf16>
    %c0_3 = arith.constant 0 : index
    %c0_4 = arith.constant 0 : index
    %9 = vector.load %arg3[%c0_3, %c0_4] : memref<10x32xbf16, #tpu.memory_space<vmem>>, vector<10x32xbf16>
    %cst_5 = arith.constant dense<0.000000e+00> : vector<48x32xf32>
    %10 = tpu.matmul %8, %9, %cst_5 {dimension_numbers = #tpu.dot_dimension_numbers<[1], [0], [0], [1], [0, 0, 1, 1], [], []>} : vector<48x10xbf16>, vector<10x32xbf16>, vector<48x32xf32> -> vector<48x32xf32>
    %c0_6 = arith.constant 0 : index
    %c0_7 = arith.constant 0 : index
    %c0_8 = arith.constant 0 : index
    %11 = vector.load %arg2[%c0_6, %c0_7, %c0_8] : memref<6x8x4xf32, #tpu.memory_space<vmem>>, vector<6x8x4xf32>
    %12 = arith.truncf %11 : vector<6x8x4xf32> to vector<6x8x4xbf16>
    %13 = vector.shape_cast %12 : vector<6x8x4xbf16> to vector<48x4xbf16>
    %c0_9 = arith.constant 0 : index
    %c0_10 = arith.constant 0 : index
    %14 = vector.load %arg4[%c0_9, %c0_10] : memref<4x32xbf16, #tpu.memory_space<vmem>>, vector<4x32xbf16>
    %cst_11 = arith.constant dense<0.000000e+00> : vector<48x32xf32>
    %15 = tpu.matmul %13, %14, %cst_11 {dimension_numbers = #tpu.dot_dimension_numbers<[1], [0], [0], [1], [0, 0, 1, 1], [], []>} : vector<48x4xbf16>, vector<4x32xbf16>, vector<48x32xf32> -> vector<48x32xf32>
    %16 = arith.addf %10, %15 : vector<48x32xf32>
    %c0_12 = arith.constant 0 : index
    %c0_13 = arith.constant 0 : index
    %17 = vector.load %arg5[%c0_12, %c0_13] : memref<1x32xf32, #tpu.memory_space<vmem>>, vector<1x32xf32>
    %18 = vector.broadcast %17 : vector<1x32xf32> to vector<48x32xf32>
    %19 = arith.addf %16, %18 : vector<48x32xf32>
    %c0_14 = arith.constant 0 : index
    %c0_15 = arith.constant 0 : index
    %c0_16 = arith.constant 0 : index
    %20 = vector.load %arg6[%c0_14, %c0_15, %c0_16] : memref<6x1x8xf32, #tpu.memory_space<vmem>>, vector<6x1x8xf32>
    %21 = arith.truncf %19 : vector<48x32xf32> to vector<48x32xbf16>
    %c0_17 = arith.constant 0 : index
    %c0_18 = arith.constant 0 : index
    %22 = vector.load %arg7[%c0_17, %c0_18] : memref<32x96xbf16, #tpu.memory_space<vmem>>, vector<32x96xbf16>
    %cst_19 = arith.constant dense<0.000000e+00> : vector<48x96xf32>
    %23 = tpu.matmul %21, %22, %cst_19 {dimension_numbers = #tpu.dot_dimension_numbers<[1], [0], [0], [1], [0, 0, 1, 1], [], []>} : vector<48x32xbf16>, vector<32x96xbf16>, vector<48x96xf32> -> vector<48x96xf32>
    %c0_20 = arith.constant 0 : index
    %c0_21 = arith.constant 0 : index
    %24 = vector.load %arg8[%c0_20, %c0_21] : memref<1x96xf32, #tpu.memory_space<vmem>>, vector<1x96xf32>
    %25 = vector.broadcast %24 : vector<1x96xf32> to vector<48x96xf32>
    %26 = arith.addf %23, %25 : vector<48x96xf32>
    %27 = vector.extract_strided_slice %26 {offsets = [0, 0], sizes = [48, 32], strides = [1, 1]} : vector<48x96xf32> to vector<48x32xf32>
    %28 = vector.shape_cast %27 : vector<48x32xf32> to vector<6x8x32xf32>
    %29 = vector.extract_strided_slice %26 {offsets = [0, 32], sizes = [48, 32], strides = [1, 1]} : vector<48x96xf32> to vector<48x32xf32>
    %30 = vector.shape_cast %29 : vector<48x32xf32> to vector<6x8x32xf32>
    %31 = vector.extract_strided_slice %26 {offsets = [0, 64], sizes = [48, 32], strides = [1, 1]} : vector<48x96xf32> to vector<48x32xf32>
    %32 = vector.shape_cast %31 : vector<48x32xf32> to vector<6x8x32xf32>
    %33 = vector.extract_strided_slice %28 {offsets = [0, 0, 0], sizes = [6, 8, 8], strides = [1, 1, 1]} : vector<6x8x32xf32> to vector<6x8x8xf32>
    %34 = arith.truncf %33 : vector<6x8x8xf32> to vector<6x8x8xbf16>
    %35 = vector.extract_strided_slice %30 {offsets = [0, 0, 0], sizes = [6, 8, 8], strides = [1, 1, 1]} : vector<6x8x32xf32> to vector<6x8x8xf32>
    %36 = arith.truncf %35 : vector<6x8x8xf32> to vector<6x8x8xbf16>
    %37 = vector.extract_strided_slice %32 {offsets = [0, 0, 0], sizes = [6, 8, 8], strides = [1, 1, 1]} : vector<6x8x32xf32> to vector<6x8x8xf32>
    %38 = arith.truncf %37 : vector<6x8x8xf32> to vector<6x8x8xbf16>
    "tpu.trace_start"() <{level = 10 : i32, message = "bqd,bkd->bqk"}> : () -> ()
    %cst_22 = arith.constant dense<0.000000e+00> : vector<6x8x8xf32>
    %39 = tpu.matmul %34, %36, %cst_22 {dimension_numbers = #tpu.dot_dimension_numbers<[2], [2], [1], [1], [0, 0, 0, 1, 1, 1], [0], [0]>} : vector<6x8x8xbf16>, vector<6x8x8xbf16>, vector<6x8x8xf32> -> vector<6x8x8xf32>
    "tpu.trace_stop"() : () -> ()
    %cst_23 = arith.constant 0.353553385 : f32
    %40 = vector.broadcast %cst_23 : f32 to vector<6x8x8xf32>
    %41 = arith.mulf %39, %40 : vector<6x8x8xf32>
    %42 = vector.broadcast %20 : vector<6x1x8xf32> to vector<6x8x8xf32>
    %43 = arith.addf %41, %42 : vector<6x8x8xf32>
    %cst_24 = arith.constant dense<0xFF800000> : vector<6x8xf32>
    %44 = vector.multi_reduction <maximumf>, %43, %cst_24 [2] : vector<6x8x8xf32> to vector<6x8xf32>
    %45 = vector.shape_cast %44 : vector<6x8xf32> to vector<6x8x1xf32>
    %46 = vector.broadcast %45 : vector<6x8x1xf32> to vector<6x8x8xf32>
    %47 = arith.subf %43, %46 : vector<6x8x8xf32>
    %48 = math.exp %47 : vector<6x8x8xf32>
    %cst_25 = arith.constant dense<0.000000e+00> : vector<6x8xf32>
    %49 = vector.multi_reduction <add>, %48, %cst_25 [2] : vector<6x8x8xf32> to vector<6x8xf32>
    %50 = vector.shape_cast %49 : vector<6x8xf32> to vector<6x8x1xf32>
    %51 = tpu.reciprocal %50 : vector<6x8x1xf32> -> vector<6x8x1xf32>
    %52 = vector.broadcast %51 : vector<6x8x1xf32> to vector<6x8x8xf32>
    %53 = arith.mulf %48, %52 : vector<6x8x8xf32>
    %54 = arith.truncf %53 : vector<6x8x8xf32> to vector<6x8x8xbf16>
    "tpu.trace_start"() <{level = 10 : i32, message = "bqk,bkd->bqd"}> : () -> ()
    %cst_26 = arith.constant dense<0.000000e+00> : vector<6x8x8xf32>
    %55 = tpu.matmul %54, %38, %cst_26 {dimension_numbers = #tpu.dot_dimension_numbers<[2], [1], [1], [2], [0, 0, 0, 1, 1, 2], [0], [0]>} : vector<6x8x8xbf16>, vector<6x8x8xbf16>, vector<6x8x8xf32> -> vector<6x8x8xf32>
    "tpu.trace_stop"() : () -> ()
    %56 = vector.shape_cast %55 : vector<6x8x8xf32> to vector<48x8xf32>
    %c0_27 = arith.constant 0 : index
    %c0_28 = arith.constant 0 : index
    %57 = vector.load %arg20[%c0_27, %c0_28] : memref<48x32xf32, #tpu.memory_space<vmem>>, vector<48x8xf32>
    tpu.vector_store %arg20[%c0_27, %c0_28], %56 {strides = array<i32>} : memref<48x32xf32, #tpu.memory_space<vmem>>, vector<48x8xf32>,
    %58 = vector.extract_strided_slice %28 {offsets = [0, 0, 8], sizes = [6, 8, 8], strides = [1, 1, 1]} : vector<6x8x32xf32> to vector<6x8x8xf32>
    %59 = arith.truncf %58 : vector<6x8x8xf32> to vector<6x8x8xbf16>
    %60 = vector.extract_strided_slice %30 {offsets = [0, 0, 8], sizes = [6, 8, 8], strides = [1, 1, 1]} : vector<6x8x32xf32> to vector<6x8x8xf32>
    %61 = arith.truncf %60 : vector<6x8x8xf32> to vector<6x8x8xbf16>
    %62 = vector.extract_strided_slice %32 {offsets = [0, 0, 8], sizes = [6, 8, 8], strides = [1, 1, 1]} : vector<6x8x32xf32> to vector<6x8x8xf32>
    %63 = arith.truncf %62 : vector<6x8x8xf32> to vector<6x8x8xbf16>
    "tpu.trace_start"() <{level = 10 : i32, message = "bqd,bkd->bqk"}> : () -> ()
    %cst_29 = arith.constant dense<0.000000e+00> : vector<6x8x8xf32>
    %64 = tpu.matmul %59, %61, %cst_29 {dimension_numbers = #tpu.dot_dimension_numbers<[2], [2], [1], [1], [0, 0, 0, 1, 1, 1], [0], [0]>} : vector<6x8x8xbf16>, vector<6x8x8xbf16>, vector<6x8x8xf32> -> vector<6x8x8xf32>
    "tpu.trace_stop"() : () -> ()
    %cst_30 = arith.constant 0.353553385 : f32
    %65 = vector.broadcast %cst_30 : f32 to vector<6x8x8xf32>
    %66 = arith.mulf %64, %65 : vector<6x8x8xf32>
    %67 = vector.broadcast %20 : vector<6x1x8xf32> to vector<6x8x8xf32>
    %68 = arith.addf %66, %67 : vector<6x8x8xf32>
    %cst_31 = arith.constant dense<0xFF800000> : vector<6x8xf32>
    %69 = vector.multi_reduction <maximumf>, %68, %cst_31 [2] : vector<6x8x8xf32> to vector<6x8xf32>
    %70 = vector.shape_cast %69 : vector<6x8xf32> to vector<6x8x1xf32>
    %71 = vector.broadcast %70 : vector<6x8x1xf32> to vector<6x8x8xf32>
    %72 = arith.subf %68, %71 : vector<6x8x8xf32>
    %73 = math.exp %72 : vector<6x8x8xf32>
    %cst_32 = arith.constant dense<0.000000e+00> : vector<6x8xf32>
    %74 = vector.multi_reduction <add>, %73, %cst_32 [2] : vector<6x8x8xf32> to vector<6x8xf32>
    %75 = vector.shape_cast %74 : vector<6x8xf32> to vector<6x8x1xf32>
    %76 = tpu.reciprocal %75 : vector<6x8x1xf32> -> vector<6x8x1xf32>
    %77 = vector.broadcast %76 : vector<6x8x1xf32> to vector<6x8x8xf32>
    %78 = arith.mulf %73, %77 : vector<6x8x8xf32>
    %79 = arith.truncf %78 : vector<6x8x8xf32> to vector<6x8x8xbf16>
    "tpu.trace_start"() <{level = 10 : i32, message = "bqk,bkd->bqd"}> : () -> ()
    %cst_33 = arith.constant dense<0.000000e+00> : vector<6x8x8xf32>
    %80 = tpu.matmul %79, %63, %cst_33 {dimension_numbers = #tpu.dot_dimension_numbers<[2], [1], [1], [2], [0, 0, 0, 1, 1, 2], [0], [0]>} : vector<6x8x8xbf16>, vector<6x8x8xbf16>, vector<6x8x8xf32> -> vector<6x8x8xf32>
    "tpu.trace_stop"() : () -> ()
    %81 = vector.shape_cast %80 : vector<6x8x8xf32> to vector<48x8xf32>
    %c0_34 = arith.constant 0 : index
    %c8 = arith.constant 8 : index
    %82 = vector.load %arg20[%c0_34, %c8] : memref<48x32xf32, #tpu.memory_space<vmem>>, vector<48x8xf32>
    tpu.vector_store %arg20[%c0_34, %c8], %81 {strides = array<i32>} : memref<48x32xf32, #tpu.memory_space<vmem>>, vector<48x8xf32>,
    %83 = vector.extract_strided_slice %28 {offsets = [0, 0, 16], sizes = [6, 8, 8], strides = [1, 1, 1]} : vector<6x8x32xf32> to vector<6x8x8xf32>
    %84 = arith.truncf %83 : vector<6x8x8xf32> to vector<6x8x8xbf16>
    %85 = vector.extract_strided_slice %30 {offsets = [0, 0, 16], sizes = [6, 8, 8], strides = [1, 1, 1]} : vector<6x8x32xf32> to vector<6x8x8xf32>
    %86 = arith.truncf %85 : vector<6x8x8xf32> to vector<6x8x8xbf16>
    %87 = vector.extract_strided_slice %32 {offsets = [0, 0, 16], sizes = [6, 8, 8], strides = [1, 1, 1]} : vector<6x8x32xf32> to vector<6x8x8xf32>
    %88 = arith.truncf %87 : vector<6x8x8xf32> to vector<6x8x8xbf16>
    "tpu.trace_start"() <{level = 10 : i32, message = "bqd,bkd->bqk"}> : () -> ()
    %cst_35 = arith.constant dense<0.000000e+00> : vector<6x8x8xf32>
    %89 = tpu.matmul %84, %86, %cst_35 {dimension_numbers = #tpu.dot_dimension_numbers<[2], [2], [1], [1], [0, 0, 0, 1, 1, 1], [0], [0]>} : vector<6x8x8xbf16>, vector<6x8x8xbf16>, vector<6x8x8xf32> -> vector<6x8x8xf32>
    "tpu.trace_stop"() : () -> ()
    %cst_36 = arith.constant 0.353553385 : f32
    %90 = vector.broadcast %cst_36 : f32 to vector<6x8x8xf32>
    %91 = arith.mulf %89, %90 : vector<6x8x8xf32>
    %92 = vector.broadcast %20 : vector<6x1x8xf32> to vector<6x8x8xf32>
    %93 = arith.addf %91, %92 : vector<6x8x8xf32>
    %cst_37 = arith.constant dense<0xFF800000> : vector<6x8xf32>
    %94 = vector.multi_reduction <maximumf>, %93, %cst_37 [2] : vector<6x8x8xf32> to vector<6x8xf32>
    %95 = vector.shape_cast %94 : vector<6x8xf32> to vector<6x8x1xf32>
    %96 = vector.broadcast %95 : vector<6x8x1xf32> to vector<6x8x8xf32>
    %97 = arith.subf %93, %96 : vector<6x8x8xf32>
    %98 = math.exp %97 : vector<6x8x8xf32>
    %cst_38 = arith.constant dense<0.000000e+00> : vector<6x8xf32>
    %99 = vector.multi_reduction <add>, %98, %cst_38 [2] : vector<6x8x8xf32> to vector<6x8xf32>
    %100 = vector.shape_cast %99 : vector<6x8xf32> to vector<6x8x1xf32>
    %101 = tpu.reciprocal %100 : vector<6x8x1xf32> -> vector<6x8x1xf32>
    %102 = vector.broadcast %101 : vector<6x8x1xf32> to vector<6x8x8xf32>
    %103 = arith.mulf %98, %102 : vector<6x8x8xf32>
    %104 = arith.truncf %103 : vector<6x8x8xf32> to vector<6x8x8xbf16>
    "tpu.trace_start"() <{level = 10 : i32, message = "bqk,bkd->bqd"}> : () -> ()
    %cst_39 = arith.constant dense<0.000000e+00> : vector<6x8x8xf32>
    %105 = tpu.matmul %104, %88, %cst_39 {dimension_numbers = #tpu.dot_dimension_numbers<[2], [1], [1], [2], [0, 0, 0, 1, 1, 2], [0], [0]>} : vector<6x8x8xbf16>, vector<6x8x8xbf16>, vector<6x8x8xf32> -> vector<6x8x8xf32>
    "tpu.trace_stop"() : () -> ()
    %106 = vector.shape_cast %105 : vector<6x8x8xf32> to vector<48x8xf32>
    %c0_40 = arith.constant 0 : index
    %c16 = arith.constant 16 : index
    %107 = vector.load %arg20[%c0_40, %c16] : memref<48x32xf32, #tpu.memory_space<vmem>>, vector<48x8xf32>
    tpu.vector_store %arg20[%c0_40, %c16], %106 {strides = array<i32>} : memref<48x32xf32, #tpu.memory_space<vmem>>, vector<48x8xf32>,
    %108 = vector.extract_strided_slice %28 {offsets = [0, 0, 24], sizes = [6, 8, 8], strides = [1, 1, 1]} : vector<6x8x32xf32> to vector<6x8x8xf32>
    %109 = arith.truncf %108 : vector<6x8x8xf32> to vector<6x8x8xbf16>
    %110 = vector.extract_strided_slice %30 {offsets = [0, 0, 24], sizes = [6, 8, 8], strides = [1, 1, 1]} : vector<6x8x32xf32> to vector<6x8x8xf32>
    %111 = arith.truncf %110 : vector<6x8x8xf32> to vector<6x8x8xbf16>
    %112 = vector.extract_strided_slice %32 {offsets = [0, 0, 24], sizes = [6, 8, 8], strides = [1, 1, 1]} : vector<6x8x32xf32> to vector<6x8x8xf32>
    %113 = arith.truncf %112 : vector<6x8x8xf32> to vector<6x8x8xbf16>
    "tpu.trace_start"() <{level = 10 : i32, message = "bqd,bkd->bqk"}> : () -> ()
    %cst_41 = arith.constant dense<0.000000e+00> : vector<6x8x8xf32>
    %114 = tpu.matmul %109, %111, %cst_41 {dimension_numbers = #tpu.dot_dimension_numbers<[2], [2], [1], [1], [0, 0, 0, 1, 1, 1], [0], [0]>} : vector<6x8x8xbf16>, vector<6x8x8xbf16>, vector<6x8x8xf32> -> vector<6x8x8xf32>
    "tpu.trace_stop"() : () -> ()
    %cst_42 = arith.constant 0.353553385 : f32
    %115 = vector.broadcast %cst_42 : f32 to vector<6x8x8xf32>
    %116 = arith.mulf %114, %115 : vector<6x8x8xf32>
    %117 = vector.broadcast %20 : vector<6x1x8xf32> to vector<6x8x8xf32>
    %118 = arith.addf %116, %117 : vector<6x8x8xf32>
    %cst_43 = arith.constant dense<0xFF800000> : vector<6x8xf32>
    %119 = vector.multi_reduction <maximumf>, %118, %cst_43 [2] : vector<6x8x8xf32> to vector<6x8xf32>
    %120 = vector.shape_cast %119 : vector<6x8xf32> to vector<6x8x1xf32>
    %121 = vector.broadcast %120 : vector<6x8x1xf32> to vector<6x8x8xf32>
    %122 = arith.subf %118, %121 : vector<6x8x8xf32>
    %123 = math.exp %122 : vector<6x8x8xf32>
    %cst_44 = arith.constant dense<0.000000e+00> : vector<6x8xf32>
    %124 = vector.multi_reduction <add>, %123, %cst_44 [2] : vector<6x8x8xf32> to vector<6x8xf32>
    %125 = vector.shape_cast %124 : vector<6x8xf32> to vector<6x8x1xf32>
    %126 = tpu.reciprocal %125 : vector<6x8x1xf32> -> vector<6x8x1xf32>
    %127 = vector.broadcast %126 : vector<6x8x1xf32> to vector<6x8x8xf32>
    %128 = arith.mulf %123, %127 : vector<6x8x8xf32>
    %129 = arith.truncf %128 : vector<6x8x8xf32> to vector<6x8x8xbf16>
    "tpu.trace_start"() <{level = 10 : i32, message = "bqk,bkd->bqd"}> : () -> ()
    %cst_45 = arith.constant dense<0.000000e+00> : vector<6x8x8xf32>
    %130 = tpu.matmul %129, %113, %cst_45 {dimension_numbers = #tpu.dot_dimension_numbers<[2], [1], [1], [2], [0, 0, 0, 1, 1, 2], [0], [0]>} : vector<6x8x8xbf16>, vector<6x8x8xbf16>, vector<6x8x8xf32> -> vector<6x8x8xf32>
    "tpu.trace_stop"() : () -> ()
    %131 = vector.shape_cast %130 : vector<6x8x8xf32> to vector<48x8xf32>
    %c0_46 = arith.constant 0 : index
    %c24 = arith.constant 24 : index
    %132 = vector.load %arg20[%c0_46, %c24] : memref<48x32xf32, #tpu.memory_space<vmem>>, vector<48x8xf32>
    tpu.vector_store %arg20[%c0_46, %c24], %131 {strides = array<i32>} : memref<48x32xf32, #tpu.memory_space<vmem>>, vector<48x8xf32>,
    %c0_47 = arith.constant 0 : index
    %c0_48 = arith.constant 0 : index
    %133 = vector.load %arg20[%c0_47, %c0_48] : memref<48x32xf32, #tpu.memory_space<vmem>>, vector<48x32xf32>
    %134 = arith.truncf %133 : vector<48x32xf32> to vector<48x32xbf16>
    %c0_49 = arith.constant 0 : index
    %c0_50 = arith.constant 0 : index
    %135 = vector.load %arg9[%c0_49, %c0_50] : memref<32x32xbf16, #tpu.memory_space<vmem>>, vector<32x32xbf16>
    %cst_51 = arith.constant dense<0.000000e+00> : vector<48x32xf32>
    %136 = tpu.matmul %134, %135, %cst_51 {dimension_numbers = #tpu.dot_dimension_numbers<[1], [0], [0], [1], [0, 0, 1, 1], [], []>} : vector<48x32xbf16>, vector<32x32xbf16>, vector<48x32xf32> -> vector<48x32xf32>
    %c0_52 = arith.constant 0 : index
    %c0_53 = arith.constant 0 : index
    %137 = vector.load %arg10[%c0_52, %c0_53] : memref<1x32xf32, #tpu.memory_space<vmem>>, vector<1x32xf32>
    %138 = vector.broadcast %137 : vector<1x32xf32> to vector<48x32xf32>
    %139 = arith.addf %136, %138 : vector<48x32xf32>
    %140 = arith.addf %19, %139 : vector<48x32xf32>
    %cst_54 = arith.constant dense<0.000000e+00> : vector<48xf32>
    %141 = vector.multi_reduction <add>, %140, %cst_54 [1] : vector<48x32xf32> to vector<48xf32>
    %142 = vector.shape_cast %141 : vector<48xf32> to vector<48x1xf32>
    %cst_55 = arith.constant 3.200000e+01 : f32
    %143 = vector.broadcast %cst_55 : f32 to vector<48x1xf32>
    %144 = arith.divf %142, %143 : vector<48x1xf32>
    %145 = vector.broadcast %144 : vector<48x1xf32> to vector<48x32xf32>
    %146 = arith.subf %140, %145 : vector<48x32xf32>
    %147 = arith.mulf %146, %146 : vector<48x32xf32>
    %cst_56 = arith.constant dense<0.000000e+00> : vector<48xf32>
    %148 = vector.multi_reduction <add>, %147, %cst_56 [1] : vector<48x32xf32> to vector<48xf32>
    %149 = vector.shape_cast %148 : vector<48xf32> to vector<48x1xf32>
    %cst_57 = arith.constant 3.200000e+01 : f32
    %150 = vector.broadcast %cst_57 : f32 to vector<48x1xf32>
    %151 = arith.divf %149, %150 : vector<48x1xf32>
    %152 = vector.broadcast %144 : vector<48x1xf32> to vector<48x32xf32>
    %153 = arith.subf %140, %152 : vector<48x32xf32>
    %cst_58 = arith.constant 9.99999974E-6 : f32
    %154 = vector.broadcast %cst_58 : f32 to vector<48x1xf32>
    %155 = arith.addf %151, %154 : vector<48x1xf32>
    %156 = math.rsqrt %155 : vector<48x1xf32>
    %157 = vector.broadcast %156 : vector<48x1xf32> to vector<48x32xf32>
    %158 = arith.mulf %153, %157 : vector<48x32xf32>
    %c0_59 = arith.constant 0 : index
    %c0_60 = arith.constant 0 : index
    %159 = vector.load %arg11[%c0_59, %c0_60] : memref<1x32xf32, #tpu.memory_space<vmem>>, vector<1x32xf32>
    %160 = vector.broadcast %159 : vector<1x32xf32> to vector<48x32xf32>
    %161 = arith.mulf %158, %160 : vector<48x32xf32>
    %c0_61 = arith.constant 0 : index
    %c0_62 = arith.constant 0 : index
    %162 = vector.load %arg12[%c0_61, %c0_62] : memref<1x32xf32, #tpu.memory_space<vmem>>, vector<1x32xf32>
    %163 = vector.broadcast %162 : vector<1x32xf32> to vector<48x32xf32>
    %164 = arith.addf %161, %163 : vector<48x32xf32>
    %165 = arith.truncf %164 : vector<48x32xf32> to vector<48x32xbf16>
    %c0_63 = arith.constant 0 : index
    %c0_64 = arith.constant 0 : index
    %166 = vector.load %arg13[%c0_63, %c0_64] : memref<32x64xbf16, #tpu.memory_space<vmem>>, vector<32x64xbf16>
    %cst_65 = arith.constant dense<0.000000e+00> : vector<48x64xf32>
    %167 = tpu.matmul %165, %166, %cst_65 {dimension_numbers = #tpu.dot_dimension_numbers<[1], [0], [0], [1], [0, 0, 1, 1], [], []>} : vector<48x32xbf16>, vector<32x64xbf16>, vector<48x64xf32> -> vector<48x64xf32>
    %c0_66 = arith.constant 0 : index
    %c0_67 = arith.constant 0 : index
    %168 = vector.load %arg14[%c0_66, %c0_67] : memref<1x64xf32, #tpu.memory_space<vmem>>, vector<1x64xf32>
    %169 = vector.broadcast %168 : vector<1x64xf32> to vector<48x64xf32>
    %170 = arith.addf %167, %169 : vector<48x64xf32>
    %cst_68 = arith.constant 0.000000e+00 : f32
    %171 = vector.broadcast %cst_68 : f32 to vector<48x64xf32>
    %172 = arith.maximumf %170, %171 : vector<48x64xf32>
    %173 = arith.truncf %172 : vector<48x64xf32> to vector<48x64xbf16>
    %c0_69 = arith.constant 0 : index
    %c0_70 = arith.constant 0 : index
    %174 = vector.load %arg15[%c0_69, %c0_70] : memref<64x32xbf16, #tpu.memory_space<vmem>>, vector<64x32xbf16>
    %cst_71 = arith.constant dense<0.000000e+00> : vector<48x32xf32>
    %175 = tpu.matmul %173, %174, %cst_71 {dimension_numbers = #tpu.dot_dimension_numbers<[1], [0], [0], [1], [0, 0, 1, 1], [], []>} : vector<48x64xbf16>, vector<64x32xbf16>, vector<48x32xf32> -> vector<48x32xf32>
    %c0_72 = arith.constant 0 : index
    %c0_73 = arith.constant 0 : index
    %176 = vector.load %arg16[%c0_72, %c0_73] : memref<1x32xf32, #tpu.memory_space<vmem>>, vector<1x32xf32>
    %177 = vector.broadcast %176 : vector<1x32xf32> to vector<48x32xf32>
    %178 = arith.addf %175, %177 : vector<48x32xf32>
    %179 = arith.addf %164, %178 : vector<48x32xf32>
    %cst_74 = arith.constant dense<0.000000e+00> : vector<48xf32>
    %180 = vector.multi_reduction <add>, %179, %cst_74 [1] : vector<48x32xf32> to vector<48xf32>
    %181 = vector.shape_cast %180 : vector<48xf32> to vector<48x1xf32>
    %cst_75 = arith.constant 3.200000e+01 : f32
    %182 = vector.broadcast %cst_75 : f32 to vector<48x1xf32>
    %183 = arith.divf %181, %182 : vector<48x1xf32>
    %184 = vector.broadcast %183 : vector<48x1xf32> to vector<48x32xf32>
    %185 = arith.subf %179, %184 : vector<48x32xf32>
    %186 = arith.mulf %185, %185 : vector<48x32xf32>
    %cst_76 = arith.constant dense<0.000000e+00> : vector<48xf32>
    %187 = vector.multi_reduction <add>, %186, %cst_76 [1] : vector<48x32xf32> to vector<48xf32>
    %188 = vector.shape_cast %187 : vector<48xf32> to vector<48x1xf32>
    %cst_77 = arith.constant 3.200000e+01 : f32
    %189 = vector.broadcast %cst_77 : f32 to vector<48x1xf32>
    %190 = arith.divf %188, %189 : vector<48x1xf32>
    %191 = vector.broadcast %183 : vector<48x1xf32> to vector<48x32xf32>
    %192 = arith.subf %179, %191 : vector<48x32xf32>
    %cst_78 = arith.constant 9.99999974E-6 : f32
    %193 = vector.broadcast %cst_78 : f32 to vector<48x1xf32>
    %194 = arith.addf %190, %193 : vector<48x1xf32>
    %195 = math.rsqrt %194 : vector<48x1xf32>
    %196 = vector.broadcast %195 : vector<48x1xf32> to vector<48x32xf32>
    %197 = arith.mulf %192, %196 : vector<48x32xf32>
    %c0_79 = arith.constant 0 : index
    %c0_80 = arith.constant 0 : index
    %198 = vector.load %arg17[%c0_79, %c0_80] : memref<1x32xf32, #tpu.memory_space<vmem>>, vector<1x32xf32>
    %199 = vector.broadcast %198 : vector<1x32xf32> to vector<48x32xf32>
    %200 = arith.mulf %197, %199 : vector<48x32xf32>
    %c0_81 = arith.constant 0 : index
    %c0_82 = arith.constant 0 : index
    %201 = vector.load %arg18[%c0_81, %c0_82] : memref<1x32xf32, #tpu.memory_space<vmem>>, vector<1x32xf32>
    %202 = vector.broadcast %201 : vector<1x32xf32> to vector<48x32xf32>
    %203 = arith.addf %200, %202 : vector<48x32xf32>
    %204 = vector.shape_cast %203 : vector<48x32xf32> to vector<6x8x32xf32>
    %c0_83 = arith.constant 0 : index
    %c0_84 = arith.constant 0 : index
    %c0_85 = arith.constant 0 : index
    %205 = vector.load %arg19[%c0_83, %c0_84, %c0_85] : memref<6x8x32xf32, #tpu.memory_space<vmem>>, vector<6x8x32xf32>
    tpu.vector_store %arg19[%c0_83, %c0_84, %c0_85], %204 {strides = array<i32>} : memref<6x8x32xf32, #tpu.memory_space<vmem>>, vector<6x8x32xf32>,
    return
  }
  func.func @transform_0(%arg0: i32) -> (i32, i32, i32) {
    %c0_i32 = arith.constant 0 : i32
    %c0_i32_0 = arith.constant 0 : i32
    %c0_i32_1 = arith.constant 0 : i32
    return %arg0, %c0_i32, %c0_i32_0 : i32, i32, i32
  }
  func.func @transform_1(%arg0: i32) -> (i32, i32, i32) {
    %c0_i32 = arith.constant 0 : i32
    %c0_i32_0 = arith.constant 0 : i32
    %c0_i32_1 = arith.constant 0 : i32
    return %arg0, %c0_i32, %c0_i32_0 : i32, i32, i32
  }
  func.func @transform_2(%arg0: i32) -> (i32, i32) {
    %c0_i32 = arith.constant 0 : i32
    %c0_i32_0 = arith.constant 0 : i32
    %c0_i32_1 = arith.constant 0 : i32
    return %c0_i32, %c0_i32_0 : i32, i32
  }
  func.func @transform_3(%arg0: i32) -> (i32, i32) {
    %c0_i32 = arith.constant 0 : i32
    %c0_i32_0 = arith.constant 0 : i32
    %c0_i32_1 = arith.constant 0 : i32
    return %c0_i32, %c0_i32_0 : i32, i32
  }
  func.func @transform_4(%arg0: i32) -> (i32, i32) {
    %c0_i32 = arith.constant 0 : i32
    %c0_i32_0 = arith.constant 0 : i32
    %c0_i32_1 = arith.constant 0 : i32
    return %c0_i32, %c0_i32_0 : i32, i32
  }
  func.func @transform_5(%arg0: i32) -> (i32, i32, i32) {
    %c0_i32 = arith.constant 0 : i32
    %c0_i32_0 = arith.constant 0 : i32
    %c0_i32_1 = arith.constant 0 : i32
    return %arg0, %c0_i32, %c0_i32_0 : i32, i32, i32
  }
  func.func @transform_6(%arg0: i32) -> (i32, i32) {
    %c0_i32 = arith.constant 0 : i32
    %c0_i32_0 = arith.constant 0 : i32
    %c0_i32_1 = arith.constant 0 : i32
    return %c0_i32, %c0_i32_0 : i32, i32
  }
  func.func @transform_7(%arg0: i32) -> (i32, i32) {
    %c0_i32 = arith.constant 0 : i32
    %c0_i32_0 = arith.constant 0 : i32
    %c0_i32_1 = arith.constant 0 : i32
    return %c0_i32, %c0_i32_0 : i32, i32
  }
  func.func @transform_8(%arg0: i32) -> (i32, i32) {
    %c0_i32 = arith.constant 0 : i32
    %c0_i32_0 = arith.constant 0 : i32
    %c0_i32_1 = arith.constant 0 : i32
    return %c0_i32, %c0_i32_0 : i32, i32
  }
  func.func @transform_9(%arg0: i32) -> (i32, i32) {
    %c0_i32 = arith.constant 0 : i32
    %c0_i32_0 = arith.constant 0 : i32
    %c0_i32_1 = arith.constant 0 : i32
    return %c0_i32, %c0_i32_0 : i32, i32
  }
  func.func @transform_10(%arg0: i32) -> (i32, i32) {
    %c0_i32 = arith.constant 0 : i32
    %c0_i32_0 = arith.constant 0 : i32
    %c0_i32_1 = arith.constant 0 : i32
    return %c0_i32, %c0_i32_0 : i32, i32
  }
  func.func @transform_11(%arg0: i32) -> (i32, i32) {
    %c0_i32 = arith.constant 0 : i32
    %c0_i32_0 = arith.constant 0 : i32
    %c0_i32_1 = arith.constant 0 : i32
    return %c0_i32, %c0_i32_0 : i32, i32
  }
  func.func @transform_12(%arg0: i32) -> (i32, i32) {
    %c0_i32 = arith.constant 0 : i32
    %c0_i32_0 = arith.constant 0 : i32
    %c0_i32_1 = arith.constant 0 : i32
    return %c0_i32, %c0_i32_0 : i32, i32
  }
  func.func @transform_13(%arg0: i32) -> (i32, i32) {
    %c0_i32 = arith.constant 0 : i32
    %c0_i32_0 = arith.constant 0 : i32
    %c0_i32_1 = arith.constant 0 : i32
    return %c0_i32, %c0_i32_0 : i32, i32
  }
  func.func @transform_14(%arg0: i32) -> (i32, i32) {
    %c0_i32 = arith.constant 0 : i32
    %c0_i32_0 = arith.constant 0 : i32
    %c0_i32_1 = arith.constant 0 : i32
    return %c0_i32, %c0_i32_0 : i32, i32
  }
  func.func @transform_15(%arg0: i32) -> (i32, i32) {
    %c0_i32 = arith.constant 0 : i32
    %c0_i32_0 = arith.constant 0 : i32
    %c0_i32_1 = arith.constant 0 : i32
    return %c0_i32, %c0_i32_0 : i32, i32
  }
  func.func @transform_16(%arg0: i32) -> (i32, i32) {
    %c0_i32 = arith.constant 0 : i32
    %c0_i32_0 = arith.constant 0 : i32
    %c0_i32_1 = arith.constant 0 : i32
    return %c0_i32, %c0_i32_0 : i32, i32
  }
  func.func @transform_17(%arg0: i32) -> (i32, i32) {
    %c0_i32 = arith.constant 0 : i32
    %c0_i32_0 = arith.constant 0 : i32
    %c0_i32_1 = arith.constant 0 : i32
    return %c0_i32, %c0_i32_0 : i32, i32
  }
  func.func @transform_18(%arg0: i32) -> (i32, i32, i32) {
    %c0_i32 = arith.constant 0 : i32
    %c0_i32_0 = arith.constant 0 : i32
    %c0_i32_1 = arith.constant 0 : i32
    return %arg0, %c0_i32, %c0_i32_0 : i32, i32, i32
  }
}

</mosaic_0001>

<llo_original>
// kernel: tpu_custom_call.1
$region0: #{tpu_custom_call.1}
  #allocation0 [shape = 'u32[]', space=smem, size = 0x4, offset = 0x4, fixed_abs, tag = 'smem constant byte address 0x4 - core index']
  #allocation1 [shape = 'u32[72,128]{1,0:T(1,128)}', space=vmem, size = 0x9000, scoped, tag = 'internal scratch']
  #allocation2 [shape = 'f32[48,32]{1,0:T(8,128)}', space=vmem, size = 0x6000, scoped, tag = 'scratch operand']
  %s0 = inlined_call_operand.vmem [shape: s32[6,8,1], index: 0, kind: input, shape index: {}]
  %s1 = inlined_call_operand.vmem [shape: f32[6,8,4], index: 1, kind: input, shape index: {}]
  %s2 = inlined_call_operand.vmem [shape: bf16[10,32], index: 2, kind: input, shape index: {}]
  %s3 = inlined_call_operand.vmem [shape: bf16[4,32], index: 3, kind: input, shape index: {}]
  %s4 = inlined_call_operand.vmem [shape: f32[1,32], index: 4, kind: input, shape index: {}]
  %s5 = inlined_call_operand.vmem [shape: f32[6,1,8], index: 5, kind: input, shape index: {}]
  %s6 = inlined_call_operand.vmem [shape: bf16[32,96], index: 6, kind: input, shape index: {}]
  %s7 = inlined_call_operand.vmem [shape: f32[1,96], index: 7, kind: input, shape index: {}]
  %s8 = inlined_call_operand.vmem [shape: bf16[32,32], index: 8, kind: input, shape index: {}]
  %s9 = inlined_call_operand.vmem [shape: f32[1,32], index: 9, kind: input, shape index: {}]
  %s10 = inlined_call_operand.vmem [shape: f32[1,32], index: 10, kind: input, shape index: {}]
  %s11 = inlined_call_operand.vmem [shape: f32[1,32], index: 11, kind: input, shape index: {}]
  %s12 = inlined_call_operand.vmem [shape: bf16[32,64], index: 12, kind: input, shape index: {}]
  %s13 = inlined_call_operand.vmem [shape: f32[1,64], index: 13, kind: input, shape index: {}]
  %s14 = inlined_call_operand.vmem [shape: bf16[64,32], index: 14, kind: input, shape index: {}]
  %s15 = inlined_call_operand.vmem [shape: f32[1,32], index: 15, kind: input, shape index: {}]
  %s16 = inlined_call_operand.vmem [shape: f32[1,32], index: 16, kind: input, shape index: {}]
  %s17 = inlined_call_operand.vmem [shape: f32[1,32], index: 17, kind: input, shape index: {}]
  %s18 = inlined_call_operand.hbm [shape: f32[6,8,32], index: 18, kind: output, shape index: {}]
  %s19 = sld [smem:[#allocation0]]
  $region82: #{tpu_custom_call.1} parent=0
    _
  %s21 = ssub.s32 1, %s19
  %s22 = scalar_select 0, %s21, %s19
  $region1: #{tpu_custom_call.1} parent=0
    #allocation3 [shape = 'u8[24576]{0}', space=vmem, size = 0x6000, scoped, tag = 'output window, operand 0, single buffered']
    #allocation4 [shape = 's32[1]{0}', space=sflag, size = 0x4, scoped, tag = 'scoped memory for tpu_custom_call.1']
    %23 = vsyncpa [#allocation4], 0
    // Predicated region
    $region2: #{tpu_custom_call.1} parent=1 // pred_check
      _
    $region3: #{tpu_custom_call.1} parent=1 // pred_check_branch
      %25 = sbr.rel (0) target = $region5
    $region4: #{tpu_custom_call.1} parent=1 // pred_region
      _
    $region5: #{tpu_custom_call.1} parent=1 // pred_fallthru
      _
    // Predicated region
    $region6: #{tpu_custom_call.1} parent=1 // pred_check
      _
    $region7: #{tpu_custom_call.1} parent=1 // pred_check_branch
      %27 = sbr.rel (0) target = $region9
    $region8: #{tpu_custom_call.1} parent=1 // pred_region
      _
    $region9: #{tpu_custom_call.1} parent=1 // pred_fallthru
      _
    // Predicated region
    $region10: #{tpu_custom_call.1} parent=1 // pred_check
      _
    $region11: #{tpu_custom_call.1} parent=1 // pred_check_branch
      %29 = sbr.rel (0) target = $region13
    $region12: #{tpu_custom_call.1} parent=1 // pred_region
      _
    $region13: #{tpu_custom_call.1} parent=1 // pred_fallthru
      _
    // Predicated region
    $region14: #{tpu_custom_call.1} parent=1 // pred_check
      _
    $region15: #{tpu_custom_call.1} parent=1 // pred_check_branch
      %31 = sbr.rel (0) target = $region17
    $region16: #{tpu_custom_call.1} parent=1 // pred_region
      _
    $region17: #{tpu_custom_call.1} parent=1 // pred_fallthru
      _
    // Predicated region
    $region18: #{tpu_custom_call.1} parent=1 // pred_check
      _
    $region19: #{tpu_custom_call.1} parent=1 // pred_check_branch
      %33 = sbr.rel (0) target = $region21
    $region20: #{tpu_custom_call.1} parent=1 // pred_region
      _
    $region21: #{tpu_custom_call.1} parent=1 // pred_fallthru
      _
    // Predicated region
    $region22: #{tpu_custom_call.1} parent=1 // pred_check
      _
    $region23: #{tpu_custom_call.1} parent=1 // pred_check_branch
      %35 = sbr.rel (0) target = $region25
    $region24: #{tpu_custom_call.1} parent=1 // pred_region
      _
    $region25: #{tpu_custom_call.1} parent=1 // pred_fallthru
      _
    // Predicated region
    $region26: #{tpu_custom_call.1} parent=1 // pred_check
      _
    $region27: #{tpu_custom_call.1} parent=1 // pred_check_branch
      %37 = sbr.rel (0) target = $region29
    $region28: #{tpu_custom_call.1} parent=1 // pred_region
      _
    $region29: #{tpu_custom_call.1} parent=1 // pred_fallthru
      _
    // Predicated region
    $region30: #{tpu_custom_call.1} parent=1 // pred_check
      _
    $region31: #{tpu_custom_call.1} parent=1 // pred_check_branch
      %39 = sbr.rel (0) target = $region33
    $region32: #{tpu_custom_call.1} parent=1 // pred_region
      _
    $region33: #{tpu_custom_call.1} parent=1 // pred_fallthru
      _
    // Predicated region
    $region34: #{tpu_custom_call.1} parent=1 // pred_check
      _
    $region35: #{tpu_custom_call.1} parent=1 // pred_check_branch
      %41 = sbr.rel (0) target = $region37
    $region36: #{tpu_custom_call.1} parent=1 // pred_region
      _
    $region37: #{tpu_custom_call.1} parent=1 // pred_fallthru
      _
    // Predicated region
    $region38: #{tpu_custom_call.1} parent=1 // pred_check
      _
    $region39: #{tpu_custom_call.1} parent=1 // pred_check_branch
      %43 = sbr.rel (0) target = $region41
    $region40: #{tpu_custom_call.1} parent=1 // pred_region
      _
    $region41: #{tpu_custom_call.1} parent=1 // pred_fallthru
      _
    // Predicated region
    $region42: #{tpu_custom_call.1} parent=1 // pred_check
      _
    $region43: #{tpu_custom_call.1} parent=1 // pred_check_branch
      %45 = sbr.rel (0) target = $region45
    $region44: #{tpu_custom_call.1} parent=1 // pred_region
      _
    $region45: #{tpu_custom_call.1} parent=1 // pred_fallthru
      _
    // Predicated region
    $region46: #{tpu_custom_call.1} parent=1 // pred_check
      _
    $region47: #{tpu_custom_call.1} parent=1 // pred_check_branch
      %47 = sbr.rel (0) target = $region49
    $region48: #{tpu_custom_call.1} parent=1 // pred_region
      _
    $region49: #{tpu_custom_call.1} parent=1 // pred_fallthru
      _
    // Predicated region
    $region50: #{tpu_custom_call.1} parent=1 // pred_check
      _
    $region51: #{tpu_custom_call.1} parent=1 // pred_check_branch
      %49 = sbr.rel (0) target = $region53
    $region52: #{tpu_custom_call.1} parent=1 // pred_region
      _
    $region53: #{tpu_custom_call.1} parent=1 // pred_fallthru
      _
    // Predicated region
    $region54: #{tpu_custom_call.1} parent=1 // pred_check
      _
    $region55: #{tpu_custom_call.1} parent=1 // pred_check_branch
      %51 = sbr.rel (0) target = $region57
    $region56: #{tpu_custom_call.1} parent=1 // pred_region
      _
    $region57: #{tpu_custom_call.1} parent=1 // pred_fallthru
      _
    // Predicated region
    $region58: #{tpu_custom_call.1} parent=1 // pred_check
      _
    $region59: #{tpu_custom_call.1} parent=1 // pred_check_branch
      %53 = sbr.rel (0) target = $region61
    $region60: #{tpu_custom_call.1} parent=1 // pred_region
      _
    $region61: #{tpu_custom_call.1} parent=1 // pred_fallthru
      _
    // Predicated region
    $region62: #{tpu_custom_call.1} parent=1 // pred_check
      _
    $region63: #{tpu_custom_call.1} parent=1 // pred_check_branch
      %55 = sbr.rel (0) target = $region65
    $region64: #{tpu_custom_call.1} parent=1 // pred_region
      _
    $region65: #{tpu_custom_call.1} parent=1 // pred_fallthru
      _
    // Predicated region
    $region66: #{tpu_custom_call.1} parent=1 // pred_check
      _
    $region67: #{tpu_custom_call.1} parent=1 // pred_check_branch
      %57 = sbr.rel (0) target = $region69
    $region68: #{tpu_custom_call.1} parent=1 // pred_region
      _
    $region69: #{tpu_custom_call.1} parent=1 // pred_fallthru
      _
    // Predicated region
    $region70: #{tpu_custom_call.1} parent=1 // pred_check
      _
    $region71: #{tpu_custom_call.1} parent=1 // pred_check_branch
      %59 = sbr.rel (0) target = $region73
    $region72: #{tpu_custom_call.1} parent=1 // pred_region
      _
    $region73: #{tpu_custom_call.1} parent=1 // pred_fallthru
      _
    %v61 = vld [vmem:[%s0] sm:$0xff]
    %v62 = vld [vmem:[%s0 + $0x8] sm:$0xff]
    %v63 = vld [vmem:[%s0 + $0x10] sm:$0xff]
    %v64 = vld [vmem:[%s0 + $0x18] sm:$0xff]
    %v65 = vld [vmem:[%s0 + $0x20] sm:$0xff]
    %v66 = vld [vmem:[%s0 + $0x28] sm:$0xff]
    %v67 = vlaneseq
    %v68 = vand.u32 %v67, 127
    %69 = vset.pattern.permute.xlu0 0
    %70 = vperm.xlu0 %69, %v61
    %v71 = vpop.permute.xlu0 %70
    %72 = vset.pattern.permute.xlu0 0
    %73 = vperm.xlu0 %72, %v62
    %v74 = vpop.permute.xlu0 %73
    %75 = vset.pattern.permute.xlu0 0
    %76 = vperm.xlu0 %75, %v63
    %v77 = vpop.permute.xlu0 %76
    %78 = vset.pattern.permute.xlu0 0
    %79 = vperm.xlu0 %78, %v64
    %v80 = vpop.permute.xlu0 %79
    %81 = vset.pattern.permute.xlu0 0
    %82 = vperm.xlu0 %81, %v65
    %v83 = vpop.permute.xlu0 %82
    %84 = vset.pattern.permute.xlu0 0
    %85 = vperm.xlu0 %84, %v66
    %v86 = vpop.permute.xlu0 %85
    %vm87 = vcmp.eq.s32.totalorder %v71, %v68
    %vm88 = vcmp.eq.s32.totalorder %v74, %v68
    %vm89 = vcmp.eq.s32.totalorder %v77, %v68
    %vm90 = vcmp.eq.s32.totalorder %v80, %v68
    %vm91 = vcmp.eq.s32.totalorder %v83, %v68
    %vm92 = vcmp.eq.s32.totalorder %v86, %v68
    %v93 = vsel %vm87, 1.0, 0.0
    %v94 = vsel %vm88, 1.0, 0.0
    %v95 = vsel %vm89, 1.0, 0.0
    %v96 = vsel %vm90, 1.0, 0.0
    %v97 = vsel %vm91, 1.0, 0.0
    %v98 = vsel %vm92, 1.0, 0.0
    %v99 = vpack.c.bf16 %v94, %v93
    %v100 = vpack.c.bf16 %v96, %v95
    %v101 = vpack.c.bf16 %v98, %v97
    %v102 = vld [vmem:[%s2] sm:$0xf]
    %v103 = vld [vmem:[%s2 + $0x4] sm:$0x1]
    %v104 = vld [vmem:[%s1] sm:$0xff]
    %v105 = vld [vmem:[%s1 + $0x8] sm:$0xff]
    %v106 = vld [vmem:[%s1 + $0x10] sm:$0xff]
    %v107 = vld [vmem:[%s1 + $0x18] sm:$0xff]
    %v108 = vld [vmem:[%s1 + $0x20] sm:$0xff]
    %v109 = vld [vmem:[%s1 + $0x28] sm:$0xff]
    %v110 = vpack.c.bf16 %v104, %v104
    %v111 = vpack.c.bf16 %v105, %v105
    %v112 = vpack.c.bf16 %v106, %v106
    %v113 = vpack.c.bf16 %v107, %v107
    %v114 = vpack.c.bf16 %v108, %v108
    %v115 = vpack.c.bf16 %v109, %v109
    %v116 = vld [vmem:[%s3] sm:$0x3]
    %v123 = vunpack.c.l.b16 %v110
    %v124 = vunpack.c.l.b16 %v111
    %v125 = vunpack.c.l.b16 %v112
    %v126 = vunpack.c.l.b16 %v113
    %v127 = vunpack.c.l.b16 %v114
    %v128 = vunpack.c.l.b16 %v115
    %v129 = vpack.c.b16 %v124, %v123
    %v130 = vpack.c.b16 %v126, %v125
    %v131 = vpack.c.b16 %v128, %v127
    %vm132 = vcmask 31744
    %v134 = vsel %vm132, %v129, 0
    %v137 = vsel %vm132, %v130, 0
    %v140 = vsel %vm132, %v131, 0
    %vm142 = vcmask 1041408
    %v144 = vsel %vm142, %v116, 0
    %146 = vmatpush.bf16.msra.mxu0 0
    %147 = vmatpush.bf16.msra.mxu0 0
    %148 = vmatpush.bf16.msra.mxu0 0
    %149 = vmatpush.bf16.msra.mxu0 0
    %150 = vmatpush.bf16.msra.mxu0 0
    %151 = vmatpush.bf16.msra.mxu0 0
    %152 = vmatpush.bf16.msra.mxu0 0
    %153 = vmatpush.bf16.msra.mxu0 %v144
    %154 = vmatmul.bf16.gmra.mxu0 %v134
    %v155 = vpop.f32.mrf.mxu0
    %v156 = vadd.f32 0.0, %v155
    %v157 = vpop.f32.mrf.mxu0
    %v158 = vadd.f32 0.0, %v157
    %159 = vmatmul.bf16.gmra.mxu0 %v137
    %v160 = vpop.f32.mrf.mxu0
    %v161 = vadd.f32 0.0, %v160
    %v162 = vpop.f32.mrf.mxu0
    %v163 = vadd.f32 0.0, %v162
    %164 = vmatmul.bf16.gmra.mxu0 %v140
    %v165 = vpop.f32.mrf.mxu0
    %v166 = vadd.f32 0.0, %v165
    %v167 = vpop.f32.mrf.mxu0
    %v168 = vadd.f32 0.0, %v167
    %169 = vdwg.mxu0
    %v172 = vunpack.c.l.b16 %v102
    %v173 = vunpack.c.l.b16 %v103
    %v174 = vpack.c.b16 %v173, %v172
    %vm175 = vcmask 80896
    %v177 = vsel %vm175, %v99, 0
    %v180 = vsel %vm175, %v100, 0
    %v183 = vsel %vm175, %v101, 0
    %vm185 = vcmask 1044480
    %v187 = vsel %vm185, %v174, 0
    %189 = vmatpush.bf16.msra.mxu0 0
    %190 = vmatpush.bf16.msra.mxu0 0
    %191 = vmatpush.bf16.msra.mxu0 0
    %192 = vmatpush.bf16.msra.mxu0 0
    %193 = vmatpush.bf16.msra.mxu0 0
    %194 = vmatpush.bf16.msra.mxu0 0
    %195 = vmatpush.bf16.msra.mxu0 0
    %196 = vmatpush.bf16.msra.mxu0 %v187
    %197 = vmatmul.bf16.gmra.mxu0 %v177
    %v198 = vpop.f32.mrf.mxu0
    %v199 = vadd.f32 %v156, %v198
    %v200 = vpop.f32.mrf.mxu0
    %v201 = vadd.f32 %v158, %v200
    %202 = vmatmul.bf16.gmra.mxu0 %v180
    %v203 = vpop.f32.mrf.mxu0
    %v204 = vadd.f32 %v161, %v203
    %v205 = vpop.f32.mrf.mxu0
    %v206 = vadd.f32 %v163, %v205
    %207 = vmatmul.bf16.gmra.mxu0 %v183
    %v208 = vpop.f32.mrf.mxu0
    %v209 = vadd.f32 %v166, %v208
    %v210 = vpop.f32.mrf.mxu0
    %v211 = vadd.f32 %v168, %v210
    %212 = vdwg.mxu0
    %v213 = vld [vmem:[%s4] sm:$0x1]
    %v215 = vperm.slane %v213, 0
    %v217 = vadd.f32 %v199, %v215
    %v218 = vadd.f32 %v201, %v215
    %v219 = vadd.f32 %v204, %v215
    %v220 = vadd.f32 %v206, %v215
    %v221 = vadd.f32 %v209, %v215
    %v222 = vadd.f32 %v211, %v215
    %v223 = vld [vmem:[%s5] sm:$0x1]
    %v224 = vld [vmem:[%s5 + $0x1] sm:$0x1]
    %v225 = vld [vmem:[%s5 + $0x2] sm:$0x1]
    %v226 = vld [vmem:[%s5 + $0x3] sm:$0x1]
    %v227 = vld [vmem:[%s5 + $0x4] sm:$0x1]
    %v228 = vld [vmem:[%s5 + $0x5] sm:$0x1]
    %v229 = vpack.c.bf16 %v218, %v217
    %v230 = vpack.c.bf16 %v220, %v219
    %v231 = vpack.c.bf16 %v222, %v221
    %v232 = vld [vmem:[%s6] sm:$0xf]
    %v233 = vld [vmem:[%s6 + $0x4] sm:$0xf]
    %v234 = vld [vmem:[%s6 + $0x8] sm:$0xf]
    %v235 = vld [vmem:[%s6 + $0xc] sm:$0xf]
    %v236 = vld [vmem:[%s7] sm:$0x1]
    %v238 = vperm.slane %v236, 0
    %v244 = vunpack.c.l.b16 %v232
    %v245 = vunpack.c.l.b16 %v233
    %v246 = vunpack.c.l.b16 %v234
    %v247 = vunpack.c.l.b16 %v235
    %v248 = vpack.c.b16 %v245, %v244
    %v249 = vpack.c.b16 %v247, %v246
    %vm252 = vcmask 261120
    %v254 = vsel %vm252, %v229, 0
    %v257 = vsel %vm252, %v230, 0
    %v260 = vsel %vm252, %v231, 0
    %262 = vmatpush.bf16.msra.mxu0 0
    %263 = vmatpush.bf16.msra.mxu0 0
    %264 = vmatpush.bf16.msra.mxu0 0
    %265 = vmatpush.bf16.msra.mxu0 0
    %266 = vmatpush.bf16.msra.mxu0 0
    %267 = vmatpush.bf16.msra.mxu0 0
    %268 = vmatpush.bf16.msra.mxu0 %v249
    %269 = vmatpush.bf16.msra.mxu0 %v248
    %270 = vmatmul.bf16.gmra.mxu0 %v254
    %v271 = vpop.f32.mrf.mxu0
    %v272 = vadd.f32 %v238, %v271
    %v273 = vpop.f32.mrf.mxu0
    %v274 = vadd.f32 %v238, %v273
    %275 = vmatmul.bf16.gmra.mxu0 %v257
    %v276 = vpop.f32.mrf.mxu0
    %v277 = vadd.f32 %v238, %v276
    %v278 = vpop.f32.mrf.mxu0
    %v279 = vadd.f32 %v238, %v278
    %280 = vmatmul.bf16.gmra.mxu0 %v260
    %v281 = vpop.f32.mrf.mxu0
    %v282 = vadd.f32 %v238, %v281
    %v283 = vpop.f32.mrf.mxu0
    %v284 = vadd.f32 %v238, %v283
    %285 = vdwg.mxu0
    %v286 = vpack.c.bf16 %v272, %v272
    %v287 = vpack.c.bf16 %v274, %v274
    %v288 = vpack.c.bf16 %v277, %v277
    %v289 = vpack.c.bf16 %v279, %v279
    %v290 = vpack.c.bf16 %v282, %v282
    %v291 = vpack.c.bf16 %v284, %v284
    %v293 = vunpack.c.l.b16 %v286
    %v294 = vpack.c.b16 %v293, %v293
    %295 = vrot.lane.b32.xlu0 %v294, 96
    %v296 = vpop.permute.xlu0 %295
    %vm297 = vcmask 64512
    %v299 = vsel %vm297, %v286, 0
    %v302 = vsel %vm297, %v296, 0
    %304 = vmatpush.bf16.xpose.msra.mxu0 0
    %305 = vmatpush.bf16.xpose.msra.mxu0 0
    %306 = vmatpush.bf16.xpose.msra.mxu0 0
    %307 = vmatpush.bf16.xpose.msra.mxu0 0
    %308 = vmatpush.bf16.xpose.msra.mxu0 0
    %309 = vmatpush.bf16.xpose.msra.mxu0 0
    %310 = vmatpush.bf16.xpose.msra.mxu0 0
    %311 = vmatpush.bf16.xpose.msra.mxu0 %v302
    %312 = vmatmul.bf16.gmra.mxu0 %v299
    %v313 = vpop.f32.mrf.mxu0
    %v314 = vadd.f32 0.0, %v313
    %v315 = vpop.f32.mrf.mxu0
    %316 = vdwg.mxu0
    %v318 = vunpack.c.l.b16 %v287
    %v319 = vpack.c.b16 %v318, %v318
    %320 = vrot.lane.b32.xlu0 %v319, 96
    %v321 = vpop.permute.xlu0 %320
    %v323 = vsel %vm297, %v287, 0
    %v326 = vsel %vm297, %v321, 0
    %328 = vmatpush.bf16.xpose.msra.mxu0 0
    %329 = vmatpush.bf16.xpose.msra.mxu0 0
    %330 = vmatpush.bf16.xpose.msra.mxu0 0
    %331 = vmatpush.bf16.xpose.msra.mxu0 0
    %332 = vmatpush.bf16.xpose.msra.mxu0 0
    %333 = vmatpush.bf16.xpose.msra.mxu0 0
    %334 = vmatpush.bf16.xpose.msra.mxu0 0
    %335 = vmatpush.bf16.xpose.msra.mxu0 %v326
    %336 = vmatmul.bf16.gmra.mxu0 %v323
    %v337 = vpop.f32.mrf.mxu0
    %v338 = vadd.f32 0.0, %v337
    %v339 = vpop.f32.mrf.mxu0
    %340 = vdwg.mxu0
    %v342 = vunpack.c.l.b16 %v288
    %v343 = vpack.c.b16 %v342, %v342
    %344 = vrot.lane.b32.xlu0 %v343, 96
    %v345 = vpop.permute.xlu0 %344
    %v347 = vsel %vm297, %v288, 0
    %v350 = vsel %vm297, %v345, 0
    %352 = vmatpush.bf16.xpose.msra.mxu0 0
    %353 = vmatpush.bf16.xpose.msra.mxu0 0
    %354 = vmatpush.bf16.xpose.msra.mxu0 0
    %355 = vmatpush.bf16.xpose.msra.mxu0 0
    %356 = vmatpush.bf16.xpose.msra.mxu0 0
    %357 = vmatpush.bf16.xpose.msra.mxu0 0
    %358 = vmatpush.bf16.xpose.msra.mxu0 0
    %359 = vmatpush.bf16.xpose.msra.mxu0 %v350
    %360 = vmatmul.bf16.gmra.mxu0 %v347
    %v361 = vpop.f32.mrf.mxu0
    %v362 = vadd.f32 0.0, %v361
    %v363 = vpop.f32.mrf.mxu0
    %364 = vdwg.mxu0
    %v366 = vunpack.c.l.b16 %v289
    %v367 = vpack.c.b16 %v366, %v366
    %368 = vrot.lane.b32.xlu0 %v367, 96
    %v369 = vpop.permute.xlu0 %368
    %v371 = vsel %vm297, %v289, 0
    %v374 = vsel %vm297, %v369, 0
    %376 = vmatpush.bf16.xpose.msra.mxu0 0
    %377 = vmatpush.bf16.xpose.msra.mxu0 0
    %378 = vmatpush.bf16.xpose.msra.mxu0 0
    %379 = vmatpush.bf16.xpose.msra.mxu0 0
    %380 = vmatpush.bf16.xpose.msra.mxu0 0
    %381 = vmatpush.bf16.xpose.msra.mxu0 0
    %382 = vmatpush.bf16.xpose.msra.mxu0 0
    %383 = vmatpush.bf16.xpose.msra.mxu0 %v374
    %384 = vmatmul.bf16.gmra.mxu0 %v371
    %v385 = vpop.f32.mrf.mxu0
    %v386 = vadd.f32 0.0, %v385
    %v387 = vpop.f32.mrf.mxu0
    %388 = vdwg.mxu0
    %v390 = vunpack.c.l.b16 %v290
    %v391 = vpack.c.b16 %v390, %v390
    %392 = vrot.lane.b32.xlu0 %v391, 96
    %v393 = vpop.permute.xlu0 %392
    %v395 = vsel %vm297, %v290, 0
    %v398 = vsel %vm297, %v393, 0
    %400 = vmatpush.bf16.xpose.msra.mxu0 0
    %401 = vmatpush.bf16.xpose.msra.mxu0 0
    %402 = vmatpush.bf16.xpose.msra.mxu0 0
    %403 = vmatpush.bf16.xpose.msra.mxu0 0
    %404 = vmatpush.bf16.xpose.msra.mxu0 0
    %405 = vmatpush.bf16.xpose.msra.mxu0 0
    %406 = vmatpush.bf16.xpose.msra.mxu0 0
    %407 = vmatpush.bf16.xpose.msra.mxu0 %v398
    %408 = vmatmul.bf16.gmra.mxu0 %v395
    %v409 = vpop.f32.mrf.mxu0
    %v410 = vadd.f32 0.0, %v409
    %v411 = vpop.f32.mrf.mxu0
    %412 = vdwg.mxu0
    %v414 = vunpack.c.l.b16 %v291
    %v415 = vpack.c.b16 %v414, %v414
    %416 = vrot.lane.b32.xlu0 %v415, 96
    %v417 = vpop.permute.xlu0 %416
    %v419 = vsel %vm297, %v291, 0
    %v422 = vsel %vm297, %v417, 0
    %424 = vmatpush.bf16.xpose.msra.mxu0 0
    %425 = vmatpush.bf16.xpose.msra.mxu0 0
    %426 = vmatpush.bf16.xpose.msra.mxu0 0
    %427 = vmatpush.bf16.xpose.msra.mxu0 0
    %428 = vmatpush.bf16.xpose.msra.mxu0 0
    %429 = vmatpush.bf16.xpose.msra.mxu0 0
    %430 = vmatpush.bf16.xpose.msra.mxu0 0
    %431 = vmatpush.bf16.xpose.msra.mxu0 %v422
    %432 = vmatmul.bf16.gmra.mxu0 %v419
    %v433 = vpop.f32.mrf.mxu0
    %v434 = vadd.f32 0.0, %v433
    %v435 = vpop.f32.mrf.mxu0
    %436 = vdwg.mxu0
    %v437 = vmul.f32 %v314, 0.35355338
    %v438 = vmul.f32 %v338, 0.35355338
    %v439 = vmul.f32 %v362, 0.35355338
    %v440 = vmul.f32 %v386, 0.35355338
    %v441 = vmul.f32 %v410, 0.35355338
    %v442 = vmul.f32 %v434, 0.35355338
    %v449 = vperm.slane %v223, 0
    %v450 = vperm.slane %v224, 0
    %v451 = vperm.slane %v225, 0
    %v452 = vperm.slane %v226, 0
    %v453 = vperm.slane %v227, 0
    %v454 = vperm.slane %v228, 0
    %v461 = vadd.f32 %v437, %v449
    %v462 = vadd.f32 %v438, %v450
    %v463 = vadd.f32 %v439, %v451
    %v464 = vadd.f32 %v440, %v452
    %v465 = vadd.f32 %v441, %v453
    %v466 = vadd.f32 %v442, %v454
    %v467 = vsel %vm297, %v461, -inf
    %468 = vmax.xlane.f32.xlu0 %v467
    %v469 = vpop.xlane.xlu0 %468
    %v470 = vsel %vm297, %v462, -inf
    %471 = vmax.xlane.f32.xlu0 %v470
    %v472 = vpop.xlane.xlu0 %471
    %v473 = vsel %vm297, %v463, -inf
    %474 = vmax.xlane.f32.xlu0 %v473
    %v475 = vpop.xlane.xlu0 %474
    %v476 = vsel %vm297, %v464, -inf
    %477 = vmax.xlane.f32.xlu0 %v476
    %v478 = vpop.xlane.xlu0 %477
    %v479 = vsel %vm297, %v465, -inf
    %480 = vmax.xlane.f32.xlu0 %v479
    %v481 = vpop.xlane.xlu0 %480
    %v482 = vsel %vm297, %v466, -inf
    %483 = vmax.xlane.f32.xlu0 %v482
    %v484 = vpop.xlane.xlu0 %483
    %v485 = vsub.f32 %v461, %v469
    %v486 = vsub.f32 %v462, %v472
    %v487 = vsub.f32 %v463, %v475
    %v488 = vsub.f32 %v464, %v478
    %v489 = vsub.f32 %v465, %v481
    %v490 = vsub.f32 %v466, %v484
    %v491 = vmul.f32 %v485, 1.442695
    %v492 = vpow.pop %v491
    %v493 = vmul.f32 %v486, 1.442695
    %v494 = vpow.pop %v493
    %v495 = vmul.f32 %v487, 1.442695
    %v496 = vpow.pop %v495
    %v497 = vmul.f32 %v488, 1.442695
    %v498 = vpow.pop %v497
    %v499 = vmul.f32 %v489, 1.442695
    %v500 = vpow.pop %v499
    %v501 = vmul.f32 %v490, 1.442695
    %v502 = vpow.pop %v501
    %v503 = vsel %vm297, %v492, 0.0
    %504 = vadd.xlane.f32.xlu0 %v503
    %v505 = vpop.xlane.xlu0 %504
    %v506 = vsel %vm297, %v494, 0.0
    %507 = vadd.xlane.f32.xlu0 %v506
    %v508 = vpop.xlane.xlu0 %507
    %v509 = vsel %vm297, %v496, 0.0
    %510 = vadd.xlane.f32.xlu0 %v509
    %v511 = vpop.xlane.xlu0 %510
    %v512 = vsel %vm297, %v498, 0.0
    %513 = vadd.xlane.f32.xlu0 %v512
    %v514 = vpop.xlane.xlu0 %513
    %v515 = vsel %vm297, %v500, 0.0
    %516 = vadd.xlane.f32.xlu0 %v515
    %v517 = vpop.xlane.xlu0 %516
    %v518 = vsel %vm297, %v502, 0.0
    %519 = vadd.xlane.f32.xlu0 %v518
    %v520 = vpop.xlane.xlu0 %519
    %v521 = vrcp.pop %v505
    %v522 = vmul.f32 %v505, %v521
    %v523 = vsub.f32 1.0, %v522
    %v524 = vmul.f32 %v521, %v523
    %v525 = vadd.f32 %v521, %v524
    %vm526 = vweird.f32 %v505
    %vm527 = vweird.f32 %v521
    %vm528 = vmor %vm526, %vm527
    %v529 = vsel %vm528, %v521, %v525
    %v530 = vand.u32 2147483647, %v505
    %vm531 = vcmp.eq.f32.partialorder %v530, 8.507059e+37
    %v532 = vand.u32 %v505, 2147483648
    %v533 = vor.u32 1.1754944e-38, %v532
    %v534 = vsel %vm531, %v533, %v529
    %v535 = vrcp.pop %v508
    %v536 = vmul.f32 %v508, %v535
    %v537 = vsub.f32 1.0, %v536
    %v538 = vmul.f32 %v535, %v537
    %v539 = vadd.f32 %v535, %v538
    %vm540 = vweird.f32 %v508
    %vm541 = vweird.f32 %v535
    %vm542 = vmor %vm540, %vm541
    %v543 = vsel %vm542, %v535, %v539
    %v544 = vand.u32 2147483647, %v508
    %vm545 = vcmp.eq.f32.partialorder %v544, 8.507059e+37
    %v546 = vand.u32 %v508, 2147483648
    %v547 = vor.u32 1.1754944e-38, %v546
    %v548 = vsel %vm545, %v547, %v543
    %v549 = vrcp.pop %v511
    %v550 = vmul.f32 %v511, %v549
    %v551 = vsub.f32 1.0, %v550
    %v552 = vmul.f32 %v549, %v551
    %v553 = vadd.f32 %v549, %v552
    %vm554 = vweird.f32 %v511
    %vm555 = vweird.f32 %v549
    %vm556 = vmor %vm554, %vm555
    %v557 = vsel %vm556, %v549, %v553
    %v558 = vand.u32 2147483647, %v511
    %vm559 = vcmp.eq.f32.partialorder %v558, 8.507059e+37
    %v560 = vand.u32 %v511, 2147483648
    %v561 = vor.u32 1.1754944e-38, %v560
    %v562 = vsel %vm559, %v561, %v557
    %v563 = vrcp.pop %v514
    %v564 = vmul.f32 %v514, %v563
    %v565 = vsub.f32 1.0, %v564
    %v566 = vmul.f32 %v563, %v565
    %v567 = vadd.f32 %v563, %v566
    %vm568 = vweird.f32 %v514
    %vm569 = vweird.f32 %v563
    %vm570 = vmor %vm568, %vm569
    %v571 = vsel %vm570, %v563, %v567
    %v572 = vand.u32 2147483647, %v514
    %vm573 = vcmp.eq.f32.partialorder %v572, 8.507059e+37
    %v574 = vand.u32 %v514, 2147483648
    %v575 = vor.u32 1.1754944e-38, %v574
    %v576 = vsel %vm573, %v575, %v571
    %v577 = vrcp.pop %v517
    %v578 = vmul.f32 %v517, %v577
    %v579 = vsub.f32 1.0, %v578
    %v580 = vmul.f32 %v577, %v579
    %v581 = vadd.f32 %v577, %v580
    %vm582 = vweird.f32 %v517
    %vm583 = vweird.f32 %v577
    %vm584 = vmor %vm582, %vm583
    %v585 = vsel %vm584, %v577, %v581
    %v586 = vand.u32 2147483647, %v517
    %vm587 = vcmp.eq.f32.partialorder %v586, 8.507059e+37
    %v588 = vand.u32 %v517, 2147483648
    %v589 = vor.u32 1.1754944e-38, %v588
    %v590 = vsel %vm587, %v589, %v585
    %v591 = vrcp.pop %v520
    %v592 = vmul.f32 %v520, %v591
    %v593 = vsub.f32 1.0, %v592
    %v594 = vmul.f32 %v591, %v593
    %v595 = vadd.f32 %v591, %v594
    %vm596 = vweird.f32 %v520
    %vm597 = vweird.f32 %v591
    %vm598 = vmor %vm596, %vm597
    %v599 = vsel %vm598, %v591, %v595
    %v600 = vand.u32 2147483647, %v520
    %vm601 = vcmp.eq.f32.partialorder %v600, 8.507059e+37
    %v602 = vand.u32 %v520, 2147483648
    %v603 = vor.u32 1.1754944e-38, %v602
    %v604 = vsel %vm601, %v603, %v599
    %v605 = vmul.f32 %v492, %v534
    %v606 = vmul.f32 %v494, %v548
    %v607 = vmul.f32 %v496, %v562
    %v608 = vmul.f32 %v498, %v576
    %v609 = vmul.f32 %v500, %v590
    %v610 = vmul.f32 %v502, %v604
    %v611 = vpack.c.bf16 %v605, %v605
    %v612 = vpack.c.bf16 %v606, %v606
    %v613 = vpack.c.bf16 %v607, %v607
    %v614 = vpack.c.bf16 %v608, %v608
    %v615 = vpack.c.bf16 %v609, %v609
    %v616 = vpack.c.bf16 %v610, %v610
    %617 = vrot.lane.b32.xlu0 %v294, 64
    %v618 = vpop.permute.xlu0 %617
    %v620 = vsel %vm297, %v611, 0
    %vm622 = vcmask 1043456
    %v624 = vsel %vm622, %v618, 0
    %626 = vmatpush.bf16.msra.mxu0 0
    %627 = vmatpush.bf16.msra.mxu0 0
    %628 = vmatpush.bf16.msra.mxu0 0
    %629 = vmatpush.bf16.msra.mxu0 0
    %630 = vmatpush.bf16.msra.mxu0 0
    %631 = vmatpush.bf16.msra.mxu0 0
    %632 = vmatpush.bf16.msra.mxu0 0
    %633 = vmatpush.bf16.msra.mxu0 %v624
    %634 = vmatmul.bf16.gmra.mxu0 %v620
    %v635 = vpop.f32.mrf.mxu0
    %v636 = vadd.f32 0.0, %v635
    %v637 = vpop.f32.mrf.mxu0
    %638 = vdwg.mxu0
    %639 = vrot.lane.b32.xlu0 %v319, 64
    %v640 = vpop.permute.xlu0 %639
    %v642 = vsel %vm297, %v612, 0
    %v645 = vsel %vm622, %v640, 0
    %647 = vmatpush.bf16.msra.mxu0 0
    %648 = vmatpush.bf16.msra.mxu0 0
    %649 = vmatpush.bf16.msra.mxu0 0
    %650 = vmatpush.bf16.msra.mxu0 0
    %651 = vmatpush.bf16.msra.mxu0 0
    %652 = vmatpush.bf16.msra.mxu0 0
    %653 = vmatpush.bf16.msra.mxu0 0
    %654 = vmatpush.bf16.msra.mxu0 %v645
    %655 = vmatmul.bf16.gmra.mxu0 %v642
    %v656 = vpop.f32.mrf.mxu0
    %v657 = vadd.f32 0.0, %v656
    %v658 = vpop.f32.mrf.mxu0
    %659 = vdwg.mxu0
    %660 = vrot.lane.b32.xlu0 %v343, 64
    %v661 = vpop.permute.xlu0 %660
    %v663 = vsel %vm297, %v613, 0
    %v666 = vsel %vm622, %v661, 0
    %668 = vmatpush.bf16.msra.mxu0 0
    %669 = vmatpush.bf16.msra.mxu0 0
    %670 = vmatpush.bf16.msra.mxu0 0
    %671 = vmatpush.bf16.msra.mxu0 0
    %672 = vmatpush.bf16.msra.mxu0 0
    %673 = vmatpush.bf16.msra.mxu0 0
    %674 = vmatpush.bf16.msra.mxu0 0
    %675 = vmatpush.bf16.msra.mxu0 %v666
    %676 = vmatmul.bf16.gmra.mxu0 %v663
    %v677 = vpop.f32.mrf.mxu0
    %v678 = vadd.f32 0.0, %v677
    %v679 = vpop.f32.mrf.mxu0
    %680 = vdwg.mxu0
    %681 = vrot.lane.b32.xlu0 %v367, 64
    %v682 = vpop.permute.xlu0 %681
    %v684 = vsel %vm297, %v614, 0
    %v687 = vsel %vm622, %v682, 0
    %689 = vmatpush.bf16.msra.mxu0 0
    %690 = vmatpush.bf16.msra.mxu0 0
    %691 = vmatpush.bf16.msra.mxu0 0
    %692 = vmatpush.bf16.msra.mxu0 0
    %693 = vmatpush.bf16.msra.mxu0 0
    %694 = vmatpush.bf16.msra.mxu0 0
    %695 = vmatpush.bf16.msra.mxu0 0
    %696 = vmatpush.bf16.msra.mxu0 %v687
    %697 = vmatmul.bf16.gmra.mxu0 %v684
    %v698 = vpop.f32.mrf.mxu0
    %v699 = vadd.f32 0.0, %v698
    %v700 = vpop.f32.mrf.mxu0
    %701 = vdwg.mxu0
    %702 = vrot.lane.b32.xlu0 %v391, 64
    %v703 = vpop.permute.xlu0 %702
    %v705 = vsel %vm297, %v615, 0
    %v708 = vsel %vm622, %v703, 0
    %710 = vmatpush.bf16.msra.mxu0 0
    %711 = vmatpush.bf16.msra.mxu0 0
    %712 = vmatpush.bf16.msra.mxu0 0
    %713 = vmatpush.bf16.msra.mxu0 0
    %714 = vmatpush.bf16.msra.mxu0 0
    %715 = vmatpush.bf16.msra.mxu0 0
    %716 = vmatpush.bf16.msra.mxu0 0
    %717 = vmatpush.bf16.msra.mxu0 %v708
    %718 = vmatmul.bf16.gmra.mxu0 %v705
    %v719 = vpop.f32.mrf.mxu0
    %v720 = vadd.f32 0.0, %v719
    %v721 = vpop.f32.mrf.mxu0
    %722 = vdwg.mxu0
    %723 = vrot.lane.b32.xlu0 %v415, 64
    %v724 = vpop.permute.xlu0 %723
    %v726 = vsel %vm297, %v616, 0
    %v729 = vsel %vm622, %v724, 0
    %731 = vmatpush.bf16.msra.mxu0 0
    %732 = vmatpush.bf16.msra.mxu0 0
    %733 = vmatpush.bf16.msra.mxu0 0
    %734 = vmatpush.bf16.msra.mxu0 0
    %735 = vmatpush.bf16.msra.mxu0 0
    %736 = vmatpush.bf16.msra.mxu0 0
    %737 = vmatpush.bf16.msra.mxu0 0
    %738 = vmatpush.bf16.msra.mxu0 %v729
    %739 = vmatmul.bf16.gmra.mxu0 %v726
    %v740 = vpop.f32.mrf.mxu0
    %v741 = vadd.f32 0.0, %v740
    %v742 = vpop.f32.mrf.mxu0
    %743 = vdwg.mxu0
    %744 = vst.msk [vmem:[#allocation2] sm:$0xff] %vm297, %v636
    %745 = vst.msk [vmem:[#allocation2 + $0x8] sm:$0xff] %vm297, %v657
    %746 = vst.msk [vmem:[#allocation2 + $0x10] sm:$0xff] %vm297, %v678
    %747 = vst.msk [vmem:[#allocation2 + $0x18] sm:$0xff] %vm297, %v699
    %748 = vst.msk [vmem:[#allocation2 + $0x20] sm:$0xff] %vm297, %v720
    %749 = vst.msk [vmem:[#allocation2 + $0x28] sm:$0xff] %vm297, %v741
    %750 = vrot.lane.b32.xlu0 %v294, 120
    %v751 = vpop.permute.xlu0 %750
    %752 = vrot.lane.b32.xlu0 %v294, 88
    %v753 = vpop.permute.xlu0 %752
    %v755 = vsel %vm297, %v751, 0
    %v758 = vsel %vm297, %v753, 0
    %760 = vmatpush.bf16.xpose.msra.mxu0 0
    %761 = vmatpush.bf16.xpose.msra.mxu0 0
    %762 = vmatpush.bf16.xpose.msra.mxu0 0
    %763 = vmatpush.bf16.xpose.msra.mxu0 0
    %764 = vmatpush.bf16.xpose.msra.mxu0 0
    %765 = vmatpush.bf16.xpose.msra.mxu0 0
    %766 = vmatpush.bf16.xpose.msra.mxu0 0
    %767 = vmatpush.bf16.xpose.msra.mxu0 %v758
    %768 = vmatmul.bf16.gmra.mxu0 %v755
    %v769 = vpop.f32.mrf.mxu0
    %v770 = vadd.f32 0.0, %v769
    %v771 = vpop.f32.mrf.mxu0
    %772 = vdwg.mxu0
    %773 = vrot.lane.b32.xlu0 %v319, 120
    %v774 = vpop.permute.xlu0 %773
    %775 = vrot.lane.b32.xlu0 %v319, 88
    %v776 = vpop.permute.xlu0 %775
    %v778 = vsel %vm297, %v774, 0
    %v781 = vsel %vm297, %v776, 0
    %783 = vmatpush.bf16.xpose.msra.mxu0 0
    %784 = vmatpush.bf16.xpose.msra.mxu0 0
    %785 = vmatpush.bf16.xpose.msra.mxu0 0
    %786 = vmatpush.bf16.xpose.msra.mxu0 0
    %787 = vmatpush.bf16.xpose.msra.mxu0 0
    %788 = vmatpush.bf16.xpose.msra.mxu0 0
    %789 = vmatpush.bf16.xpose.msra.mxu0 0
    %790 = vmatpush.bf16.xpose.msra.mxu0 %v781
    %791 = vmatmul.bf16.gmra.mxu0 %v778
    %v792 = vpop.f32.mrf.mxu0
    %v793 = vadd.f32 0.0, %v792
    %v794 = vpop.f32.mrf.mxu0
    %795 = vdwg.mxu0
    %796 = vrot.lane.b32.xlu0 %v343, 120
    %v797 = vpop.permute.xlu0 %796
    %798 = vrot.lane.b32.xlu0 %v343, 88
    %v799 = vpop.permute.xlu0 %798
    %v801 = vsel %vm297, %v797, 0
    %v804 = vsel %vm297, %v799, 0
    %806 = vmatpush.bf16.xpose.msra.mxu0 0
    %807 = vmatpush.bf16.xpose.msra.mxu0 0
    %808 = vmatpush.bf16.xpose.msra.mxu0 0
    %809 = vmatpush.bf16.xpose.msra.mxu0 0
    %810 = vmatpush.bf16.xpose.msra.mxu0 0
    %811 = vmatpush.bf16.xpose.msra.mxu0 0
    %812 = vmatpush.bf16.xpose.msra.mxu0 0
    %813 = vmatpush.bf16.xpose.msra.mxu0 %v804
    %814 = vmatmul.bf16.gmra.mxu0 %v801
    %v815 = vpop.f32.mrf.mxu0
    %v816 = vadd.f32 0.0, %v815
    %v817 = vpop.f32.mrf.mxu0
    %818 = vdwg.mxu0
    %819 = vrot.lane.b32.xlu0 %v367, 120
    %v820 = vpop.permute.xlu0 %819
    %821 = vrot.lane.b32.xlu0 %v367, 88
    %v822 = vpop.permute.xlu0 %821
    %v824 = vsel %vm297, %v820, 0
    %v827 = vsel %vm297, %v822, 0
    %829 = vmatpush.bf16.xpose.msra.mxu0 0
    %830 = vmatpush.bf16.xpose.msra.mxu0 0
    %831 = vmatpush.bf16.xpose.msra.mxu0 0
    %832 = vmatpush.bf16.xpose.msra.mxu0 0
    %833 = vmatpush.bf16.xpose.msra.mxu0 0
    %834 = vmatpush.bf16.xpose.msra.mxu0 0
    %835 = vmatpush.bf16.xpose.msra.mxu0 0
    %836 = vmatpush.bf16.xpose.msra.mxu0 %v827
    %837 = vmatmul.bf16.gmra.mxu0 %v824
    %v838 = vpop.f32.mrf.mxu0
    %v839 = vadd.f32 0.0, %v838
    %v840 = vpop.f32.mrf.mxu0
    %841 = vdwg.mxu0
    %842 = vrot.lane.b32.xlu0 %v391, 120
    %v843 = vpop.permute.xlu0 %842
    %844 = vrot.lane.b32.xlu0 %v391, 88
    %v845 = vpop.permute.xlu0 %844
    %v847 = vsel %vm297, %v843, 0
    %v850 = vsel %vm297, %v845, 0
    %852 = vmatpush.bf16.xpose.msra.mxu0 0
    %853 = vmatpush.bf16.xpose.msra.mxu0 0
    %854 = vmatpush.bf16.xpose.msra.mxu0 0
    %855 = vmatpush.bf16.xpose.msra.mxu0 0
    %856 = vmatpush.bf16.xpose.msra.mxu0 0
    %857 = vmatpush.bf16.xpose.msra.mxu0 0
    %858 = vmatpush.bf16.xpose.msra.mxu0 0
    %859 = vmatpush.bf16.xpose.msra.mxu0 %v850
    %860 = vmatmul.bf16.gmra.mxu0 %v847
    %v861 = vpop.f32.mrf.mxu0
    %v862 = vadd.f32 0.0, %v861
    %v863 = vpop.f32.mrf.mxu0
    %864 = vdwg.mxu0
    %865 = vrot.lane.b32.xlu0 %v415, 120
    %v866 = vpop.permute.xlu0 %865
    %867 = vrot.lane.b32.xlu0 %v415, 88
    %v868 = vpop.permute.xlu0 %867
    %v870 = vsel %vm297, %v866, 0
    %v873 = vsel %vm297, %v868, 0
    %875 = vmatpush.bf16.xpose.msra.mxu0 0
    %876 = vmatpush.bf16.xpose.msra.mxu0 0
    %877 = vmatpush.bf16.xpose.msra.mxu0 0
    %878 = vmatpush.bf16.xpose.msra.mxu0 0
    %879 = vmatpush.bf16.xpose.msra.mxu0 0
    %880 = vmatpush.bf16.xpose.msra.mxu0 0
    %881 = vmatpush.bf16.xpose.msra.mxu0 0
    %882 = vmatpush.bf16.xpose.msra.mxu0 %v873
    %883 = vmatmul.bf16.gmra.mxu0 %v870
    %v884 = vpop.f32.mrf.mxu0
    %v885 = vadd.f32 0.0, %v884
    %v886 = vpop.f32.mrf.mxu0
    %887 = vdwg.mxu0
    %v888 = vmul.f32 %v770, 0.35355338
    %v889 = vmul.f32 %v793, 0.35355338
    %v890 = vmul.f32 %v816, 0.35355338
    %v891 = vmul.f32 %v839, 0.35355338
    %v892 = vmul.f32 %v862, 0.35355338
    %v893 = vmul.f32 %v885, 0.35355338
    %v894 = vadd.f32 %v888, %v449
    %v895 = vadd.f32 %v889, %v450
    %v896 = vadd.f32 %v890, %v451
    %v897 = vadd.f32 %v891, %v452
    %v898 = vadd.f32 %v892, %v453
    %v899 = vadd.f32 %v893, %v454
    %v900 = vsel %vm297, %v894, -inf
    %901 = vmax.xlane.f32.xlu0 %v900
    %v902 = vpop.xlane.xlu0 %901
    %v903 = vsel %vm297, %v895, -inf
    %904 = vmax.xlane.f32.xlu0 %v903
    %v905 = vpop.xlane.xlu0 %904
    %v906 = vsel %vm297, %v896, -inf
    %907 = vmax.xlane.f32.xlu0 %v906
    %v908 = vpop.xlane.xlu0 %907
    %v909 = vsel %vm297, %v897, -inf
    %910 = vmax.xlane.f32.xlu0 %v909
    %v911 = vpop.xlane.xlu0 %910
    %v912 = vsel %vm297, %v898, -inf
    %913 = vmax.xlane.f32.xlu0 %v912
    %v914 = vpop.xlane.xlu0 %913
    %v915 = vsel %vm297, %v899, -inf
    %916 = vmax.xlane.f32.xlu0 %v915
    %v917 = vpop.xlane.xlu0 %916
    %v918 = vsub.f32 %v894, %v902
    %v919 = vsub.f32 %v895, %v905
    %v920 = vsub.f32 %v896, %v908
    %v921 = vsub.f32 %v897, %v911
    %v922 = vsub.f32 %v898, %v914
    %v923 = vsub.f32 %v899, %v917
    %v924 = vmul.f32 %v918, 1.442695
    %v925 = vpow.pop %v924
    %v926 = vmul.f32 %v919, 1.442695
    %v927 = vpow.pop %v926
    %v928 = vmul.f32 %v920, 1.442695
    %v929 = vpow.pop %v928
    %v930 = vmul.f32 %v921, 1.442695
    %v931 = vpow.pop %v930
    %v932 = vmul.f32 %v922, 1.442695
    %v933 = vpow.pop %v932
    %v934 = vmul.f32 %v923, 1.442695
    %v935 = vpow.pop %v934
    %v936 = vsel %vm297, %v925, 0.0
    %937 = vadd.xlane.f32.xlu0 %v936
    %v938 = vpop.xlane.xlu0 %937
    %v939 = vsel %vm297, %v927, 0.0
    %940 = vadd.xlane.f32.xlu0 %v939
    %v941 = vpop.xlane.xlu0 %940
    %v942 = vsel %vm297, %v929, 0.0
    %943 = vadd.xlane.f32.xlu0 %v942
    %v944 = vpop.xlane.xlu0 %943
    %v945 = vsel %vm297, %v931, 0.0
    %946 = vadd.xlane.f32.xlu0 %v945
    %v947 = vpop.xlane.xlu0 %946
    %v948 = vsel %vm297, %v933, 0.0
    %949 = vadd.xlane.f32.xlu0 %v948
    %v950 = vpop.xlane.xlu0 %949
    %v951 = vsel %vm297, %v935, 0.0
    %952 = vadd.xlane.f32.xlu0 %v951
    %v953 = vpop.xlane.xlu0 %952
    %v954 = vrcp.pop %v938
    %v955 = vmul.f32 %v938, %v954
    %v956 = vsub.f32 1.0, %v955
    %v957 = vmul.f32 %v954, %v956
    %v958 = vadd.f32 %v954, %v957
    %vm959 = vweird.f32 %v938
    %vm960 = vweird.f32 %v954
    %vm961 = vmor %vm959, %vm960
    %v962 = vsel %vm961, %v954, %v958
    %v963 = vand.u32 2147483647, %v938
    %vm964 = vcmp.eq.f32.partialorder %v963, 8.507059e+37
    %v965 = vand.u32 %v938, 2147483648
    %v966 = vor.u32 1.1754944e-38, %v965
    %v967 = vsel %vm964, %v966, %v962
    %v968 = vrcp.pop %v941
    %v969 = vmul.f32 %v941, %v968
    %v970 = vsub.f32 1.0, %v969
    %v971 = vmul.f32 %v968, %v970
    %v972 = vadd.f32 %v968, %v971
    %vm973 = vweird.f32 %v941
    %vm974 = vweird.f32 %v968
    %vm975 = vmor %vm973, %vm974
    %v976 = vsel %vm975, %v968, %v972
    %v977 = vand.u32 2147483647, %v941
    %vm978 = vcmp.eq.f32.partialorder %v977, 8.507059e+37
    %v979 = vand.u32 %v941, 2147483648
    %v980 = vor.u32 1.1754944e-38, %v979
    %v981 = vsel %vm978, %v980, %v976
    %v982 = vrcp.pop %v944
    %v983 = vmul.f32 %v944, %v982
    %v984 = vsub.f32 1.0, %v983
    %v985 = vmul.f32 %v982, %v984
    %v986 = vadd.f32 %v982, %v985
    %vm987 = vweird.f32 %v944
    %vm988 = vweird.f32 %v982
    %vm989 = vmor %vm987, %vm988
    %v990 = vsel %vm989, %v982, %v986
    %v991 = vand.u32 2147483647, %v944
    %vm992 = vcmp.eq.f32.partialorder %v991, 8.507059e+37
    %v993 = vand.u32 %v944, 2147483648
    %v994 = vor.u32 1.1754944e-38, %v993
    %v995 = vsel %vm992, %v994, %v990
    %v996 = vrcp.pop %v947
    %v997 = vmul.f32 %v947, %v996
    %v998 = vsub.f32 1.0, %v997
    %v999 = vmul.f32 %v996, %v998
    %v1000 = vadd.f32 %v996, %v999
    %vm1001 = vweird.f32 %v947
    %vm1002 = vweird.f32 %v996
    %vm1003 = vmor %vm1001, %vm1002
    %v1004 = vsel %vm1003, %v996, %v1000
    %v1005 = vand.u32 2147483647, %v947
    %vm1006 = vcmp.eq.f32.partialorder %v1005, 8.507059e+37
    %v1007 = vand.u32 %v947, 2147483648
    %v1008 = vor.u32 1.1754944e-38, %v1007
    %v1009 = vsel %vm1006, %v1008, %v1004
    %v1010 = vrcp.pop %v950
    %v1011 = vmul.f32 %v950, %v1010
    %v1012 = vsub.f32 1.0, %v1011
    %v1013 = vmul.f32 %v1010, %v1012
    %v1014 = vadd.f32 %v1010, %v1013
    %vm1015 = vweird.f32 %v950
    %vm1016 = vweird.f32 %v1010
    %vm1017 = vmor %vm1015, %vm1016
    %v1018 = vsel %vm1017, %v1010, %v1014
    %v1019 = vand.u32 2147483647, %v950
    %vm1020 = vcmp.eq.f32.partialorder %v1019, 8.507059e+37
    %v1021 = vand.u32 %v950, 2147483648
    %v1022 = vor.u32 1.1754944e-38, %v1021
    %v1023 = vsel %vm1020, %v1022, %v1018
    %v1024 = vrcp.pop %v953
    %v1025 = vmul.f32 %v953, %v1024
    %v1026 = vsub.f32 1.0, %v1025
    %v1027 = vmul.f32 %v1024, %v1026
    %v1028 = vadd.f32 %v1024, %v1027
    %vm1029 = vweird.f32 %v953
    %vm1030 = vweird.f32 %v1024
    %vm1031 = vmor %vm1029, %vm1030
    %v1032 = vsel %vm1031, %v1024, %v1028
    %v1033 = vand.u32 2147483647, %v953
    %vm1034 = vcmp.eq.f32.partialorder %v1033, 8.507059e+37
    %v1035 = vand.u32 %v953, 2147483648
    %v1036 = vor.u32 1.1754944e-38, %v1035
    %v1037 = vsel %vm1034, %v1036, %v1032
    %v1038 = vmul.f32 %v925, %v967
    %v1039 = vmul.f32 %v927, %v981
    %v1040 = vmul.f32 %v929, %v995
    %v1041 = vmul.f32 %v931, %v1009
    %v1042 = vmul.f32 %v933, %v1023
    %v1043 = vmul.f32 %v935, %v1037
    %v1044 = vpack.c.bf16 %v1038, %v1038
    %v1045 = vpack.c.bf16 %v1039, %v1039
    %v1046 = vpack.c.bf16 %v1040, %v1040
    %v1047 = vpack.c.bf16 %v1041, %v1041
    %v1048 = vpack.c.bf16 %v1042, %v1042
    %v1049 = vpack.c.bf16 %v1043, %v1043
    %1050 = vrot.lane.b32.xlu0 %v294, 56
    %v1051 = vpop.permute.xlu0 %1050
    %v1053 = vsel %vm297, %v1044, 0
    %v1056 = vsel %vm622, %v1051, 0
    %1058 = vmatpush.bf16.msra.mxu0 0
    %1059 = vmatpush.bf16.msra.mxu0 0
    %1060 = vmatpush.bf16.msra.mxu0 0
    %1061 = vmatpush.bf16.msra.mxu0 0
    %1062 = vmatpush.bf16.msra.mxu0 0
    %1063 = vmatpush.bf16.msra.mxu0 0
    %1064 = vmatpush.bf16.msra.mxu0 0
    %1065 = vmatpush.bf16.msra.mxu0 %v1056
    %1066 = vmatmul.bf16.gmra.mxu0 %v1053
    %v1067 = vpop.f32.mrf.mxu0
    %v1068 = vadd.f32 0.0, %v1067
    %v1069 = vpop.f32.mrf.mxu0
    %1070 = vdwg.mxu0
    %1071 = vrot.lane.b32.xlu0 %v319, 56
    %v1072 = vpop.permute.xlu0 %1071
    %v1074 = vsel %vm297, %v1045, 0
    %v1077 = vsel %vm622, %v1072, 0
    %1079 = vmatpush.bf16.msra.mxu0 0
    %1080 = vmatpush.bf16.msra.mxu0 0
    %1081 = vmatpush.bf16.msra.mxu0 0
    %1082 = vmatpush.bf16.msra.mxu0 0
    %1083 = vmatpush.bf16.msra.mxu0 0
    %1084 = vmatpush.bf16.msra.mxu0 0
    %1085 = vmatpush.bf16.msra.mxu0 0
    %1086 = vmatpush.bf16.msra.mxu0 %v1077
    %1087 = vmatmul.bf16.gmra.mxu0 %v1074
    %v1088 = vpop.f32.mrf.mxu0
    %v1089 = vadd.f32 0.0, %v1088
    %v1090 = vpop.f32.mrf.mxu0
    %1091 = vdwg.mxu0
    %1092 = vrot.lane.b32.xlu0 %v343, 56
    %v1093 = vpop.permute.xlu0 %1092
    %v1095 = vsel %vm297, %v1046, 0
    %v1098 = vsel %vm622, %v1093, 0
    %1100 = vmatpush.bf16.msra.mxu0 0
    %1101 = vmatpush.bf16.msra.mxu0 0
    %1102 = vmatpush.bf16.msra.mxu0 0
    %1103 = vmatpush.bf16.msra.mxu0 0
    %1104 = vmatpush.bf16.msra.mxu0 0
    %1105 = vmatpush.bf16.msra.mxu0 0
    %1106 = vmatpush.bf16.msra.mxu0 0
    %1107 = vmatpush.bf16.msra.mxu0 %v1098
    %1108 = vmatmul.bf16.gmra.mxu0 %v1095
    %v1109 = vpop.f32.mrf.mxu0
    %v1110 = vadd.f32 0.0, %v1109
    %v1111 = vpop.f32.mrf.mxu0
    %1112 = vdwg.mxu0
    %1113 = vrot.lane.b32.xlu0 %v367, 56
    %v1114 = vpop.permute.xlu0 %1113
    %v1116 = vsel %vm297, %v1047, 0
    %v1119 = vsel %vm622, %v1114, 0
    %1121 = vmatpush.bf16.msra.mxu0 0
    %1122 = vmatpush.bf16.msra.mxu0 0
    %1123 = vmatpush.bf16.msra.mxu0 0
    %1124 = vmatpush.bf16.msra.mxu0 0
    %1125 = vmatpush.bf16.msra.mxu0 0
    %1126 = vmatpush.bf16.msra.mxu0 0
    %1127 = vmatpush.bf16.msra.mxu0 0
    %1128 = vmatpush.bf16.msra.mxu0 %v1119
    %1129 = vmatmul.bf16.gmra.mxu0 %v1116
    %v1130 = vpop.f32.mrf.mxu0
    %v1131 = vadd.f32 0.0, %v1130
    %v1132 = vpop.f32.mrf.mxu0
    %1133 = vdwg.mxu0
    %1134 = vrot.lane.b32.xlu0 %v391, 56
    %v1135 = vpop.permute.xlu0 %1134
    %v1137 = vsel %vm297, %v1048, 0
    %v1140 = vsel %vm622, %v1135, 0
    %1142 = vmatpush.bf16.msra.mxu0 0
    %1143 = vmatpush.bf16.msra.mxu0 0
    %1144 = vmatpush.bf16.msra.mxu0 0
    %1145 = vmatpush.bf16.msra.mxu0 0
    %1146 = vmatpush.bf16.msra.mxu0 0
    %1147 = vmatpush.bf16.msra.mxu0 0
    %1148 = vmatpush.bf16.msra.mxu0 0
    %1149 = vmatpush.bf16.msra.mxu0 %v1140
    %1150 = vmatmul.bf16.gmra.mxu0 %v1137
    %v1151 = vpop.f32.mrf.mxu0
    %v1152 = vadd.f32 0.0, %v1151
    %v1153 = vpop.f32.mrf.mxu0
    %1154 = vdwg.mxu0
    %1155 = vrot.lane.b32.xlu0 %v415, 56
    %v1156 = vpop.permute.xlu0 %1155
    %v1158 = vsel %vm297, %v1049, 0
    %v1161 = vsel %vm622, %v1156, 0
    %1163 = vmatpush.bf16.msra.mxu0 0
    %1164 = vmatpush.bf16.msra.mxu0 0
    %1165 = vmatpush.bf16.msra.mxu0 0
    %1166 = vmatpush.bf16.msra.mxu0 0
    %1167 = vmatpush.bf16.msra.mxu0 0
    %1168 = vmatpush.bf16.msra.mxu0 0
    %1169 = vmatpush.bf16.msra.mxu0 0
    %1170 = vmatpush.bf16.msra.mxu0 %v1161
    %1171 = vmatmul.bf16.gmra.mxu0 %v1158
    %v1172 = vpop.f32.mrf.mxu0
    %v1173 = vadd.f32 0.0, %v1172
    %v1174 = vpop.f32.mrf.mxu0
    %1175 = vdwg.mxu0
    %1182 = vrot.lane.b32.xlu0 %v1068, 8
    %v1183 = vpop.permute.xlu0 %1182
    %1184 = vrot.lane.b32.xlu0 %v1089, 8
    %v1185 = vpop.permute.xlu0 %1184
    %1186 = vrot.lane.b32.xlu0 %v1110, 8
    %v1187 = vpop.permute.xlu0 %1186
    %1188 = vrot.lane.b32.xlu0 %v1131, 8
    %v1189 = vpop.permute.xlu0 %1188
    %1190 = vrot.lane.b32.xlu0 %v1152, 8
    %v1191 = vpop.permute.xlu0 %1190
    %1192 = vrot.lane.b32.xlu0 %v1173, 8
    %v1193 = vpop.permute.xlu0 %1192
    %vm1200 = vcmask 130112
    %1201 = vst.msk [vmem:[#allocation2] sm:$0xff] %vm1200, %v1183
    %1202 = vst.msk [vmem:[#allocation2 + $0x8] sm:$0xff] %vm1200, %v1185
    %1203 = vst.msk [vmem:[#allocation2 + $0x10] sm:$0xff] %vm1200, %v1187
    %1204 = vst.msk [vmem:[#allocation2 + $0x18] sm:$0xff] %vm1200, %v1189
    %1205 = vst.msk [vmem:[#allocation2 + $0x20] sm:$0xff] %vm1200, %v1191
    %1206 = vst.msk [vmem:[#allocation2 + $0x28] sm:$0xff] %vm1200, %v1193
    %1207 = vrot.lane.b32.xlu0 %v294, 112
    %v1208 = vpop.permute.xlu0 %1207
    %1209 = vrot.lane.b32.xlu0 %v294, 80
    %v1210 = vpop.permute.xlu0 %1209
    %v1212 = vsel %vm297, %v1208, 0
    %v1215 = vsel %vm297, %v1210, 0
    %1217 = vmatpush.bf16.xpose.msra.mxu0 0
    %1218 = vmatpush.bf16.xpose.msra.mxu0 0
    %1219 = vmatpush.bf16.xpose.msra.mxu0 0
    %1220 = vmatpush.bf16.xpose.msra.mxu0 0
    %1221 = vmatpush.bf16.xpose.msra.mxu0 0
    %1222 = vmatpush.bf16.xpose.msra.mxu0 0
    %1223 = vmatpush.bf16.xpose.msra.mxu0 0
    %1224 = vmatpush.bf16.xpose.msra.mxu0 %v1215
    %1225 = vmatmul.bf16.gmra.mxu0 %v1212
    %v1226 = vpop.f32.mrf.mxu0
    %v1227 = vadd.f32 0.0, %v1226
    %v1228 = vpop.f32.mrf.mxu0
    %1229 = vdwg.mxu0
    %1230 = vrot.lane.b32.xlu0 %v319, 112
    %v1231 = vpop.permute.xlu0 %1230
    %1232 = vrot.lane.b32.xlu0 %v319, 80
    %v1233 = vpop.permute.xlu0 %1232
    %v1235 = vsel %vm297, %v1231, 0
    %v1238 = vsel %vm297, %v1233, 0
    %1240 = vmatpush.bf16.xpose.msra.mxu0 0
    %1241 = vmatpush.bf16.xpose.msra.mxu0 0
    %1242 = vmatpush.bf16.xpose.msra.mxu0 0
    %1243 = vmatpush.bf16.xpose.msra.mxu0 0
    %1244 = vmatpush.bf16.xpose.msra.mxu0 0
    %1245 = vmatpush.bf16.xpose.msra.mxu0 0
    %1246 = vmatpush.bf16.xpose.msra.mxu0 0
    %1247 = vmatpush.bf16.xpose.msra.mxu0 %v1238
    %1248 = vmatmul.bf16.gmra.mxu0 %v1235
    %v1249 = vpop.f32.mrf.mxu0
    %v1250 = vadd.f32 0.0, %v1249
    %v1251 = vpop.f32.mrf.mxu0
    %1252 = vdwg.mxu0
    %1253 = vrot.lane.b32.xlu0 %v343, 112
    %v1254 = vpop.permute.xlu0 %1253
    %1255 = vrot.lane.b32.xlu0 %v343, 80
    %v1256 = vpop.permute.xlu0 %1255
    %v1258 = vsel %vm297, %v1254, 0
    %v1261 = vsel %vm297, %v1256, 0
    %1263 = vmatpush.bf16.xpose.msra.mxu0 0
    %1264 = vmatpush.bf16.xpose.msra.mxu0 0
    %1265 = vmatpush.bf16.xpose.msra.mxu0 0
    %1266 = vmatpush.bf16.xpose.msra.mxu0 0
    %1267 = vmatpush.bf16.xpose.msra.mxu0 0
    %1268 = vmatpush.bf16.xpose.msra.mxu0 0
    %1269 = vmatpush.bf16.xpose.msra.mxu0 0
    %1270 = vmatpush.bf16.xpose.msra.mxu0 %v1261
    %1271 = vmatmul.bf16.gmra.mxu0 %v1258
    %v1272 = vpop.f32.mrf.mxu0
    %v1273 = vadd.f32 0.0, %v1272
    %v1274 = vpop.f32.mrf.mxu0
    %1275 = vdwg.mxu0
    %1276 = vrot.lane.b32.xlu0 %v367, 112
    %v1277 = vpop.permute.xlu0 %1276
    %1278 = vrot.lane.b32.xlu0 %v367, 80
    %v1279 = vpop.permute.xlu0 %1278
    %v1281 = vsel %vm297, %v1277, 0
    %v1284 = vsel %vm297, %v1279, 0
    %1286 = vmatpush.bf16.xpose.msra.mxu0 0
    %1287 = vmatpush.bf16.xpose.msra.mxu0 0
    %1288 = vmatpush.bf16.xpose.msra.mxu0 0
    %1289 = vmatpush.bf16.xpose.msra.mxu0 0
    %1290 = vmatpush.bf16.xpose.msra.mxu0 0
    %1291 = vmatpush.bf16.xpose.msra.mxu0 0
    %1292 = vmatpush.bf16.xpose.msra.mxu0 0
    %1293 = vmatpush.bf16.xpose.msra.mxu0 %v1284
    %1294 = vmatmul.bf16.gmra.mxu0 %v1281
    %v1295 = vpop.f32.mrf.mxu0
    %v1296 = vadd.f32 0.0, %v1295
    %v1297 = vpop.f32.mrf.mxu0
    %1298 = vdwg.mxu0
    %1299 = vrot.lane.b32.xlu0 %v391, 112
    %v1300 = vpop.permute.xlu0 %1299
    %1301 = vrot.lane.b32.xlu0 %v391, 80
    %v1302 = vpop.permute.xlu0 %1301
    %v1304 = vsel %vm297, %v1300, 0
    %v1307 = vsel %vm297, %v1302, 0
    %1309 = vmatpush.bf16.xpose.msra.mxu0 0
    %1310 = vmatpush.bf16.xpose.msra.mxu0 0
    %1311 = vmatpush.bf16.xpose.msra.mxu0 0
    %1312 = vmatpush.bf16.xpose.msra.mxu0 0
    %1313 = vmatpush.bf16.xpose.msra.mxu0 0
    %1314 = vmatpush.bf16.xpose.msra.mxu0 0
    %1315 = vmatpush.bf16.xpose.msra.mxu0 0
    %1316 = vmatpush.bf16.xpose.msra.mxu0 %v1307
    %1317 = vmatmul.bf16.gmra.mxu0 %v1304
    %v1318 = vpop.f32.mrf.mxu0
    %v1319 = vadd.f32 0.0, %v1318
    %v1320 = vpop.f32.mrf.mxu0
    %1321 = vdwg.mxu0
    %1322 = vrot.lane.b32.xlu0 %v415, 112
    %v1323 = vpop.permute.xlu0 %1322
    %1324 = vrot.lane.b32.xlu0 %v415, 80
    %v1325 = vpop.permute.xlu0 %1324
    %v1327 = vsel %vm297, %v1323, 0
    %v1330 = vsel %vm297, %v1325, 0
    %1332 = vmatpush.bf16.xpose.msra.mxu0 0
    %1333 = vmatpush.bf16.xpose.msra.mxu0 0
    %1334 = vmatpush.bf16.xpose.msra.mxu0 0
    %1335 = vmatpush.bf16.xpose.msra.mxu0 0
    %1336 = vmatpush.bf16.xpose.msra.mxu0 0
    %1337 = vmatpush.bf16.xpose.msra.mxu0 0
    %1338 = vmatpush.bf16.xpose.msra.mxu0 0
    %1339 = vmatpush.bf16.xpose.msra.mxu0 %v1330
    %1340 = vmatmul.bf16.gmra.mxu0 %v1327
    %v1341 = vpop.f32.mrf.mxu0
    %v1342 = vadd.f32 0.0, %v1341
    %v1343 = vpop.f32.mrf.mxu0
    %1344 = vdwg.mxu0
    %v1345 = vmul.f32 %v1227, 0.35355338
    %v1346 = vmul.f32 %v1250, 0.35355338
    %v1347 = vmul.f32 %v1273, 0.35355338
    %v1348 = vmul.f32 %v1296, 0.35355338
    %v1349 = vmul.f32 %v1319, 0.35355338
    %v1350 = vmul.f32 %v1342, 0.35355338
    %v1351 = vadd.f32 %v1345, %v449
    %v1352 = vadd.f32 %v1346, %v450
    %v1353 = vadd.f32 %v1347, %v451
    %v1354 = vadd.f32 %v1348, %v452
    %v1355 = vadd.f32 %v1349, %v453
    %v1356 = vadd.f32 %v1350, %v454
    %v1357 = vsel %vm297, %v1351, -inf
    %1358 = vmax.xlane.f32.xlu0 %v1357
    %v1359 = vpop.xlane.xlu0 %1358
    %v1360 = vsel %vm297, %v1352, -inf
    %1361 = vmax.xlane.f32.xlu0 %v1360
    %v1362 = vpop.xlane.xlu0 %1361
    %v1363 = vsel %vm297, %v1353, -inf
    %1364 = vmax.xlane.f32.xlu0 %v1363
    %v1365 = vpop.xlane.xlu0 %1364
    %v1366 = vsel %vm297, %v1354, -inf
    %1367 = vmax.xlane.f32.xlu0 %v1366
    %v1368 = vpop.xlane.xlu0 %1367
    %v1369 = vsel %vm297, %v1355, -inf
    %1370 = vmax.xlane.f32.xlu0 %v1369
    %v1371 = vpop.xlane.xlu0 %1370
    %v1372 = vsel %vm297, %v1356, -inf
    %1373 = vmax.xlane.f32.xlu0 %v1372
    %v1374 = vpop.xlane.xlu0 %1373
    %v1375 = vsub.f32 %v1351, %v1359
    %v1376 = vsub.f32 %v1352, %v1362
    %v1377 = vsub.f32 %v1353, %v1365
    %v1378 = vsub.f32 %v1354, %v1368
    %v1379 = vsub.f32 %v1355, %v1371
    %v1380 = vsub.f32 %v1356, %v1374
    %v1381 = vmul.f32 %v1375, 1.442695
    %v1382 = vpow.pop %v1381
    %v1383 = vmul.f32 %v1376, 1.442695
    %v1384 = vpow.pop %v1383
    %v1385 = vmul.f32 %v1377, 1.442695
    %v1386 = vpow.pop %v1385
    %v1387 = vmul.f32 %v1378, 1.442695
    %v1388 = vpow.pop %v1387
    %v1389 = vmul.f32 %v1379, 1.442695
    %v1390 = vpow.pop %v1389
    %v1391 = vmul.f32 %v1380, 1.442695
    %v1392 = vpow.pop %v1391
    %v1393 = vsel %vm297, %v1382, 0.0
    %1394 = vadd.xlane.f32.xlu0 %v1393
    %v1395 = vpop.xlane.xlu0 %1394
    %v1396 = vsel %vm297, %v1384, 0.0
    %1397 = vadd.xlane.f32.xlu0 %v1396
    %v1398 = vpop.xlane.xlu0 %1397
    %v1399 = vsel %vm297, %v1386, 0.0
    %1400 = vadd.xlane.f32.xlu0 %v1399
    %v1401 = vpop.xlane.xlu0 %1400
    %v1402 = vsel %vm297, %v1388, 0.0
    %1403 = vadd.xlane.f32.xlu0 %v1402
    %v1404 = vpop.xlane.xlu0 %1403
    %v1405 = vsel %vm297, %v1390, 0.0
    %1406 = vadd.xlane.f32.xlu0 %v1405
    %v1407 = vpop.xlane.xlu0 %1406
    %v1408 = vsel %vm297, %v1392, 0.0
    %1409 = vadd.xlane.f32.xlu0 %v1408
    %v1410 = vpop.xlane.xlu0 %1409
    %v1411 = vrcp.pop %v1395
    %v1412 = vmul.f32 %v1395, %v1411
    %v1413 = vsub.f32 1.0, %v1412
    %v1414 = vmul.f32 %v1411, %v1413
    %v1415 = vadd.f32 %v1411, %v1414
    %vm1416 = vweird.f32 %v1395
    %vm1417 = vweird.f32 %v1411
    %vm1418 = vmor %vm1416, %vm1417
    %v1419 = vsel %vm1418, %v1411, %v1415
    %v1420 = vand.u32 2147483647, %v1395
    %vm1421 = vcmp.eq.f32.partialorder %v1420, 8.507059e+37
    %v1422 = vand.u32 %v1395, 2147483648
    %v1423 = vor.u32 1.1754944e-38, %v1422
    %v1424 = vsel %vm1421, %v1423, %v1419
    %v1425 = vrcp.pop %v1398
    %v1426 = vmul.f32 %v1398, %v1425
    %v1427 = vsub.f32 1.0, %v1426
    %v1428 = vmul.f32 %v1425, %v1427
    %v1429 = vadd.f32 %v1425, %v1428
    %vm1430 = vweird.f32 %v1398
    %vm1431 = vweird.f32 %v1425
    %vm1432 = vmor %vm1430, %vm1431
    %v1433 = vsel %vm1432, %v1425, %v1429
    %v1434 = vand.u32 2147483647, %v1398
    %vm1435 = vcmp.eq.f32.partialorder %v1434, 8.507059e+37
    %v1436 = vand.u32 %v1398, 2147483648
    %v1437 = vor.u32 1.1754944e-38, %v1436
    %v1438 = vsel %vm1435, %v1437, %v1433
    %v1439 = vrcp.pop %v1401
    %v1440 = vmul.f32 %v1401, %v1439
    %v1441 = vsub.f32 1.0, %v1440
    %v1442 = vmul.f32 %v1439, %v1441
    %v1443 = vadd.f32 %v1439, %v1442
    %vm1444 = vweird.f32 %v1401
    %vm1445 = vweird.f32 %v1439
    %vm1446 = vmor %vm1444, %vm1445
    %v1447 = vsel %vm1446, %v1439, %v1443
    %v1448 = vand.u32 2147483647, %v1401
    %vm1449 = vcmp.eq.f32.partialorder %v1448, 8.507059e+37
    %v1450 = vand.u32 %v1401, 2147483648
    %v1451 = vor.u32 1.1754944e-38, %v1450
    %v1452 = vsel %vm1449, %v1451, %v1447
    %v1453 = vrcp.pop %v1404
    %v1454 = vmul.f32 %v1404, %v1453
    %v1455 = vsub.f32 1.0, %v1454
    %v1456 = vmul.f32 %v1453, %v1455
    %v1457 = vadd.f32 %v1453, %v1456
    %vm1458 = vweird.f32 %v1404
    %vm1459 = vweird.f32 %v1453
    %vm1460 = vmor %vm1458, %vm1459
    %v1461 = vsel %vm1460, %v1453, %v1457
    %v1462 = vand.u32 2147483647, %v1404
    %vm1463 = vcmp.eq.f32.partialorder %v1462, 8.507059e+37
    %v1464 = vand.u32 %v1404, 2147483648
    %v1465 = vor.u32 1.1754944e-38, %v1464
    %v1466 = vsel %vm1463, %v1465, %v1461
    %v1467 = vrcp.pop %v1407
    %v1468 = vmul.f32 %v1407, %v1467
    %v1469 = vsub.f32 1.0, %v1468
    %v1470 = vmul.f32 %v1467, %v1469
    %v1471 = vadd.f32 %v1467, %v1470
    %vm1472 = vweird.f32 %v1407
    %vm1473 = vweird.f32 %v1467
    %vm1474 = vmor %vm1472, %vm1473
    %v1475 = vsel %vm1474, %v1467, %v1471
    %v1476 = vand.u32 2147483647, %v1407
    %vm1477 = vcmp.eq.f32.partialorder %v1476, 8.507059e+37
    %v1478 = vand.u32 %v1407, 2147483648
    %v1479 = vor.u32 1.1754944e-38, %v1478
    %v1480 = vsel %vm1477, %v1479, %v1475
    %v1481 = vrcp.pop %v1410
    %v1482 = vmul.f32 %v1410, %v1481
    %v1483 = vsub.f32 1.0, %v1482
    %v1484 = vmul.f32 %v1481, %v1483
    %v1485 = vadd.f32 %v1481, %v1484
    %vm1486 = vweird.f32 %v1410
    %vm1487 = vweird.f32 %v1481
    %vm1488 = vmor %vm1486, %vm1487
    %v1489 = vsel %vm1488, %v1481, %v1485
    %v1490 = vand.u32 2147483647, %v1410
    %vm1491 = vcmp.eq.f32.partialorder %v1490, 8.507059e+37
    %v1492 = vand.u32 %v1410, 2147483648
    %v1493 = vor.u32 1.1754944e-38, %v1492
    %v1494 = vsel %vm1491, %v1493, %v1489
    %v1495 = vmul.f32 %v1382, %v1424
    %v1496 = vmul.f32 %v1384, %v1438
    %v1497 = vmul.f32 %v1386, %v1452
    %v1498 = vmul.f32 %v1388, %v1466
    %v1499 = vmul.f32 %v1390, %v1480
    %v1500 = vmul.f32 %v1392, %v1494
    %v1501 = vpack.c.bf16 %v1495, %v1495
    %v1502 = vpack.c.bf16 %v1496, %v1496
    %v1503 = vpack.c.bf16 %v1497, %v1497
    %v1504 = vpack.c.bf16 %v1498, %v1498
    %v1505 = vpack.c.bf16 %v1499, %v1499
    %v1506 = vpack.c.bf16 %v1500, %v1500
    %1507 = vrot.lane.b32.xlu0 %v294, 48
    %v1508 = vpop.permute.xlu0 %1507
    %v1510 = vsel %vm297, %v1501, 0
    %v1513 = vsel %vm622, %v1508, 0
    %1515 = vmatpush.bf16.msra.mxu0 0
    %1516 = vmatpush.bf16.msra.mxu0 0
    %1517 = vmatpush.bf16.msra.mxu0 0
    %1518 = vmatpush.bf16.msra.mxu0 0
    %1519 = vmatpush.bf16.msra.mxu0 0
    %1520 = vmatpush.bf16.msra.mxu0 0
    %1521 = vmatpush.bf16.msra.mxu0 0
    %1522 = vmatpush.bf16.msra.mxu0 %v1513
    %1523 = vmatmul.bf16.gmra.mxu0 %v1510
    %v1524 = vpop.f32.mrf.mxu0
    %v1525 = vadd.f32 0.0, %v1524
    %v1526 = vpop.f32.mrf.mxu0
    %1527 = vdwg.mxu0
    %1528 = vrot.lane.b32.xlu0 %v319, 48
    %v1529 = vpop.permute.xlu0 %1528
    %v1531 = vsel %vm297, %v1502, 0
    %v1534 = vsel %vm622, %v1529, 0
    %1536 = vmatpush.bf16.msra.mxu0 0
    %1537 = vmatpush.bf16.msra.mxu0 0
    %1538 = vmatpush.bf16.msra.mxu0 0
    %1539 = vmatpush.bf16.msra.mxu0 0
    %1540 = vmatpush.bf16.msra.mxu0 0
    %1541 = vmatpush.bf16.msra.mxu0 0
    %1542 = vmatpush.bf16.msra.mxu0 0
    %1543 = vmatpush.bf16.msra.mxu0 %v1534
    %1544 = vmatmul.bf16.gmra.mxu0 %v1531
    %v1545 = vpop.f32.mrf.mxu0
    %v1546 = vadd.f32 0.0, %v1545
    %v1547 = vpop.f32.mrf.mxu0
    %1548 = vdwg.mxu0
    %1549 = vrot.lane.b32.xlu0 %v343, 48
    %v1550 = vpop.permute.xlu0 %1549
    %v1552 = vsel %vm297, %v1503, 0
    %v1555 = vsel %vm622, %v1550, 0
    %1557 = vmatpush.bf16.msra.mxu0 0
    %1558 = vmatpush.bf16.msra.mxu0 0
    %1559 = vmatpush.bf16.msra.mxu0 0
    %1560 = vmatpush.bf16.msra.mxu0 0
    %1561 = vmatpush.bf16.msra.mxu0 0
    %1562 = vmatpush.bf16.msra.mxu0 0
    %1563 = vmatpush.bf16.msra.mxu0 0
    %1564 = vmatpush.bf16.msra.mxu0 %v1555
    %1565 = vmatmul.bf16.gmra.mxu0 %v1552
    %v1566 = vpop.f32.mrf.mxu0
    %v1567 = vadd.f32 0.0, %v1566
    %v1568 = vpop.f32.mrf.mxu0
    %1569 = vdwg.mxu0
    %1570 = vrot.lane.b32.xlu0 %v367, 48
    %v1571 = vpop.permute.xlu0 %1570
    %v1573 = vsel %vm297, %v1504, 0
    %v1576 = vsel %vm622, %v1571, 0
    %1578 = vmatpush.bf16.msra.mxu0 0
    %1579 = vmatpush.bf16.msra.mxu0 0
    %1580 = vmatpush.bf16.msra.mxu0 0
    %1581 = vmatpush.bf16.msra.mxu0 0
    %1582 = vmatpush.bf16.msra.mxu0 0
    %1583 = vmatpush.bf16.msra.mxu0 0
    %1584 = vmatpush.bf16.msra.mxu0 0
    %1585 = vmatpush.bf16.msra.mxu0 %v1576
    %1586 = vmatmul.bf16.gmra.mxu0 %v1573
    %v1587 = vpop.f32.mrf.mxu0
    %v1588 = vadd.f32 0.0, %v1587
    %v1589 = vpop.f32.mrf.mxu0
    %1590 = vdwg.mxu0
    %1591 = vrot.lane.b32.xlu0 %v391, 48
    %v1592 = vpop.permute.xlu0 %1591
    %v1594 = vsel %vm297, %v1505, 0
    %v1597 = vsel %vm622, %v1592, 0
    %1599 = vmatpush.bf16.msra.mxu0 0
    %1600 = vmatpush.bf16.msra.mxu0 0
    %1601 = vmatpush.bf16.msra.mxu0 0
    %1602 = vmatpush.bf16.msra.mxu0 0
    %1603 = vmatpush.bf16.msra.mxu0 0
    %1604 = vmatpush.bf16.msra.mxu0 0
    %1605 = vmatpush.bf16.msra.mxu0 0
    %1606 = vmatpush.bf16.msra.mxu0 %v1597
    %1607 = vmatmul.bf16.gmra.mxu0 %v1594
    %v1608 = vpop.f32.mrf.mxu0
    %v1609 = vadd.f32 0.0, %v1608
    %v1610 = vpop.f32.mrf.mxu0
    %1611 = vdwg.mxu0
    %1612 = vrot.lane.b32.xlu0 %v415, 48
    %v1613 = vpop.permute.xlu0 %1612
    %v1615 = vsel %vm297, %v1506, 0
    %v1618 = vsel %vm622, %v1613, 0
    %1620 = vmatpush.bf16.msra.mxu0 0
    %1621 = vmatpush.bf16.msra.mxu0 0
    %1622 = vmatpush.bf16.msra.mxu0 0
    %1623 = vmatpush.bf16.msra.mxu0 0
    %1624 = vmatpush.bf16.msra.mxu0 0
    %1625 = vmatpush.bf16.msra.mxu0 0
    %1626 = vmatpush.bf16.msra.mxu0 0
    %1627 = vmatpush.bf16.msra.mxu0 %v1618
    %1628 = vmatmul.bf16.gmra.mxu0 %v1615
    %v1629 = vpop.f32.mrf.mxu0
    %v1630 = vadd.f32 0.0, %v1629
    %v1631 = vpop.f32.mrf.mxu0
    %1632 = vdwg.mxu0
    %1639 = vrot.lane.b32.xlu0 %v1525, 16
    %v1640 = vpop.permute.xlu0 %1639
    %1641 = vrot.lane.b32.xlu0 %v1546, 16
    %v1642 = vpop.permute.xlu0 %1641
    %1643 = vrot.lane.b32.xlu0 %v1567, 16
    %v1644 = vpop.permute.xlu0 %1643
    %1645 = vrot.lane.b32.xlu0 %v1588, 16
    %v1646 = vpop.permute.xlu0 %1645
    %1647 = vrot.lane.b32.xlu0 %v1609, 16
    %v1648 = vpop.permute.xlu0 %1647
    %1649 = vrot.lane.b32.xlu0 %v1630, 16
    %v1650 = vpop.permute.xlu0 %1649
    %vm1657 = vcmask 195712
    %1658 = vst.msk [vmem:[#allocation2] sm:$0xff] %vm1657, %v1640
    %1659 = vst.msk [vmem:[#allocation2 + $0x8] sm:$0xff] %vm1657, %v1642
    %1660 = vst.msk [vmem:[#allocation2 + $0x10] sm:$0xff] %vm1657, %v1644
    %1661 = vst.msk [vmem:[#allocation2 + $0x18] sm:$0xff] %vm1657, %v1646
    %1662 = vst.msk [vmem:[#allocation2 + $0x20] sm:$0xff] %vm1657, %v1648
    %1663 = vst.msk [vmem:[#allocation2 + $0x28] sm:$0xff] %vm1657, %v1650
    %1664 = vrot.lane.b32.xlu0 %v294, 104
    %v1665 = vpop.permute.xlu0 %1664
    %1666 = vrot.lane.b32.xlu0 %v294, 72
    %v1667 = vpop.permute.xlu0 %1666
    %v1669 = vsel %vm297, %v1665, 0
    %v1672 = vsel %vm297, %v1667, 0
    %1674 = vmatpush.bf16.xpose.msra.mxu0 0
    %1675 = vmatpush.bf16.xpose.msra.mxu0 0
    %1676 = vmatpush.bf16.xpose.msra.mxu0 0
    %1677 = vmatpush.bf16.xpose.msra.mxu0 0
    %1678 = vmatpush.bf16.xpose.msra.mxu0 0
    %1679 = vmatpush.bf16.xpose.msra.mxu0 0
    %1680 = vmatpush.bf16.xpose.msra.mxu0 0
    %1681 = vmatpush.bf16.xpose.msra.mxu0 %v1672
    %1682 = vmatmul.bf16.gmra.mxu0 %v1669
    %v1683 = vpop.f32.mrf.mxu0
    %v1684 = vadd.f32 0.0, %v1683
    %v1685 = vpop.f32.mrf.mxu0
    %1686 = vdwg.mxu0
    %1687 = vrot.lane.b32.xlu0 %v319, 104
    %v1688 = vpop.permute.xlu0 %1687
    %1689 = vrot.lane.b32.xlu0 %v319, 72
    %v1690 = vpop.permute.xlu0 %1689
    %v1692 = vsel %vm297, %v1688, 0
    %v1695 = vsel %vm297, %v1690, 0
    %1697 = vmatpush.bf16.xpose.msra.mxu0 0
    %1698 = vmatpush.bf16.xpose.msra.mxu0 0
    %1699 = vmatpush.bf16.xpose.msra.mxu0 0
    %1700 = vmatpush.bf16.xpose.msra.mxu0 0
    %1701 = vmatpush.bf16.xpose.msra.mxu0 0
    %1702 = vmatpush.bf16.xpose.msra.mxu0 0
    %1703 = vmatpush.bf16.xpose.msra.mxu0 0
    %1704 = vmatpush.bf16.xpose.msra.mxu0 %v1695
    %1705 = vmatmul.bf16.gmra.mxu0 %v1692
    %v1706 = vpop.f32.mrf.mxu0
    %v1707 = vadd.f32 0.0, %v1706
    %v1708 = vpop.f32.mrf.mxu0
    %1709 = vdwg.mxu0
    %1710 = vrot.lane.b32.xlu0 %v343, 104
    %v1711 = vpop.permute.xlu0 %1710
    %1712 = vrot.lane.b32.xlu0 %v343, 72
    %v1713 = vpop.permute.xlu0 %1712
    %v1715 = vsel %vm297, %v1711, 0
    %v1718 = vsel %vm297, %v1713, 0
    %1720 = vmatpush.bf16.xpose.msra.mxu0 0
    %1721 = vmatpush.bf16.xpose.msra.mxu0 0
    %1722 = vmatpush.bf16.xpose.msra.mxu0 0
    %1723 = vmatpush.bf16.xpose.msra.mxu0 0
    %1724 = vmatpush.bf16.xpose.msra.mxu0 0
    %1725 = vmatpush.bf16.xpose.msra.mxu0 0
    %1726 = vmatpush.bf16.xpose.msra.mxu0 0
    %1727 = vmatpush.bf16.xpose.msra.mxu0 %v1718
    %1728 = vmatmul.bf16.gmra.mxu0 %v1715
    %v1729 = vpop.f32.mrf.mxu0
    %v1730 = vadd.f32 0.0, %v1729
    %v1731 = vpop.f32.mrf.mxu0
    %1732 = vdwg.mxu0
    %1733 = vrot.lane.b32.xlu0 %v367, 104
    %v1734 = vpop.permute.xlu0 %1733
    %1735 = vrot.lane.b32.xlu0 %v367, 72
    %v1736 = vpop.permute.xlu0 %1735
    %v1738 = vsel %vm297, %v1734, 0
    %v1741 = vsel %vm297, %v1736, 0
    %1743 = vmatpush.bf16.xpose.msra.mxu0 0
    %1744 = vmatpush.bf16.xpose.msra.mxu0 0
    %1745 = vmatpush.bf16.xpose.msra.mxu0 0
    %1746 = vmatpush.bf16.xpose.msra.mxu0 0
    %1747 = vmatpush.bf16.xpose.msra.mxu0 0
    %1748 = vmatpush.bf16.xpose.msra.mxu0 0
    %1749 = vmatpush.bf16.xpose.msra.mxu0 0
    %1750 = vmatpush.bf16.xpose.msra.mxu0 %v1741
    %1751 = vmatmul.bf16.gmra.mxu0 %v1738
    %v1752 = vpop.f32.mrf.mxu0
    %v1753 = vadd.f32 0.0, %v1752
    %v1754 = vpop.f32.mrf.mxu0
    %1755 = vdwg.mxu0
    %1756 = vrot.lane.b32.xlu0 %v391, 104
    %v1757 = vpop.permute.xlu0 %1756
    %1758 = vrot.lane.b32.xlu0 %v391, 72
    %v1759 = vpop.permute.xlu0 %1758
    %v1761 = vsel %vm297, %v1757, 0
    %v1764 = vsel %vm297, %v1759, 0
    %1766 = vmatpush.bf16.xpose.msra.mxu0 0
    %1767 = vmatpush.bf16.xpose.msra.mxu0 0
    %1768 = vmatpush.bf16.xpose.msra.mxu0 0
    %1769 = vmatpush.bf16.xpose.msra.mxu0 0
    %1770 = vmatpush.bf16.xpose.msra.mxu0 0
    %1771 = vmatpush.bf16.xpose.msra.mxu0 0
    %1772 = vmatpush.bf16.xpose.msra.mxu0 0
    %1773 = vmatpush.bf16.xpose.msra.mxu0 %v1764
    %1774 = vmatmul.bf16.gmra.mxu0 %v1761
    %v1775 = vpop.f32.mrf.mxu0
    %v1776 = vadd.f32 0.0, %v1775
    %v1777 = vpop.f32.mrf.mxu0
    %1778 = vdwg.mxu0
    %1779 = vrot.lane.b32.xlu0 %v415, 104
    %v1780 = vpop.permute.xlu0 %1779
    %1781 = vrot.lane.b32.xlu0 %v415, 72
    %v1782 = vpop.permute.xlu0 %1781
    %v1784 = vsel %vm297, %v1780, 0
    %v1787 = vsel %vm297, %v1782, 0
    %1789 = vmatpush.bf16.xpose.msra.mxu0 0
    %1790 = vmatpush.bf16.xpose.msra.mxu0 0
    %1791 = vmatpush.bf16.xpose.msra.mxu0 0
    %1792 = vmatpush.bf16.xpose.msra.mxu0 0
    %1793 = vmatpush.bf16.xpose.msra.mxu0 0
    %1794 = vmatpush.bf16.xpose.msra.mxu0 0
    %1795 = vmatpush.bf16.xpose.msra.mxu0 0
    %1796 = vmatpush.bf16.xpose.msra.mxu0 %v1787
    %1797 = vmatmul.bf16.gmra.mxu0 %v1784
    %v1798 = vpop.f32.mrf.mxu0
    %v1799 = vadd.f32 0.0, %v1798
    %v1800 = vpop.f32.mrf.mxu0
    %1801 = vdwg.mxu0
    %v1802 = vmul.f32 %v1684, 0.35355338
    %v1803 = vmul.f32 %v1707, 0.35355338
    %v1804 = vmul.f32 %v1730, 0.35355338
    %v1805 = vmul.f32 %v1753, 0.35355338
    %v1806 = vmul.f32 %v1776, 0.35355338
    %v1807 = vmul.f32 %v1799, 0.35355338
    %v1808 = vadd.f32 %v1802, %v449
    %v1809 = vadd.f32 %v1803, %v450
    %v1810 = vadd.f32 %v1804, %v451
    %v1811 = vadd.f32 %v1805, %v452
    %v1812 = vadd.f32 %v1806, %v453
    %v1813 = vadd.f32 %v1807, %v454
    %v1814 = vsel %vm297, %v1808, -inf
    %1815 = vmax.xlane.f32.xlu0 %v1814
    %v1816 = vpop.xlane.xlu0 %1815
    %v1817 = vsel %vm297, %v1809, -inf
    %1818 = vmax.xlane.f32.xlu0 %v1817
    %v1819 = vpop.xlane.xlu0 %1818
    %v1820 = vsel %vm297, %v1810, -inf
    %1821 = vmax.xlane.f32.xlu0 %v1820
    %v1822 = vpop.xlane.xlu0 %1821
    %v1823 = vsel %vm297, %v1811, -inf
    %1824 = vmax.xlane.f32.xlu0 %v1823
    %v1825 = vpop.xlane.xlu0 %1824
    %v1826 = vsel %vm297, %v1812, -inf
    %1827 = vmax.xlane.f32.xlu0 %v1826
    %v1828 = vpop.xlane.xlu0 %1827
    %v1829 = vsel %vm297, %v1813, -inf
    %1830 = vmax.xlane.f32.xlu0 %v1829
    %v1831 = vpop.xlane.xlu0 %1830
    %v1832 = vsub.f32 %v1808, %v1816
    %v1833 = vsub.f32 %v1809, %v1819
    %v1834 = vsub.f32 %v1810, %v1822
    %v1835 = vsub.f32 %v1811, %v1825
    %v1836 = vsub.f32 %v1812, %v1828
    %v1837 = vsub.f32 %v1813, %v1831
    %v1838 = vmul.f32 %v1832, 1.442695
    %v1839 = vpow.pop %v1838
    %v1840 = vmul.f32 %v1833, 1.442695
    %v1841 = vpow.pop %v1840
    %v1842 = vmul.f32 %v1834, 1.442695
    %v1843 = vpow.pop %v1842
    %v1844 = vmul.f32 %v1835, 1.442695
    %v1845 = vpow.pop %v1844
    %v1846 = vmul.f32 %v1836, 1.442695
    %v1847 = vpow.pop %v1846
    %v1848 = vmul.f32 %v1837, 1.442695
    %v1849 = vpow.pop %v1848
    %v1850 = vsel %vm297, %v1839, 0.0
    %1851 = vadd.xlane.f32.xlu0 %v1850
    %v1852 = vpop.xlane.xlu0 %1851
    %v1853 = vsel %vm297, %v1841, 0.0
    %1854 = vadd.xlane.f32.xlu0 %v1853
    %v1855 = vpop.xlane.xlu0 %1854
    %v1856 = vsel %vm297, %v1843, 0.0
    %1857 = vadd.xlane.f32.xlu0 %v1856
    %v1858 = vpop.xlane.xlu0 %1857
    %v1859 = vsel %vm297, %v1845, 0.0
    %1860 = vadd.xlane.f32.xlu0 %v1859
    %v1861 = vpop.xlane.xlu0 %1860
    %v1862 = vsel %vm297, %v1847, 0.0
    %1863 = vadd.xlane.f32.xlu0 %v1862
    %v1864 = vpop.xlane.xlu0 %1863
    %v1865 = vsel %vm297, %v1849, 0.0
    %1866 = vadd.xlane.f32.xlu0 %v1865
    %v1867 = vpop.xlane.xlu0 %1866
    %v1868 = vrcp.pop %v1852
    %v1869 = vmul.f32 %v1852, %v1868
    %v1870 = vsub.f32 1.0, %v1869
    %v1871 = vmul.f32 %v1868, %v1870
    %v1872 = vadd.f32 %v1868, %v1871
    %vm1873 = vweird.f32 %v1852
    %vm1874 = vweird.f32 %v1868
    %vm1875 = vmor %vm1873, %vm1874
    %v1876 = vsel %vm1875, %v1868, %v1872
    %v1877 = vand.u32 2147483647, %v1852
    %vm1878 = vcmp.eq.f32.partialorder %v1877, 8.507059e+37
    %v1879 = vand.u32 %v1852, 2147483648
    %v1880 = vor.u32 1.1754944e-38, %v1879
    %v1881 = vsel %vm1878, %v1880, %v1876
    %v1882 = vrcp.pop %v1855
    %v1883 = vmul.f32 %v1855, %v1882
    %v1884 = vsub.f32 1.0, %v1883
    %v1885 = vmul.f32 %v1882, %v1884
    %v1886 = vadd.f32 %v1882, %v1885
    %vm1887 = vweird.f32 %v1855
    %vm1888 = vweird.f32 %v1882
    %vm1889 = vmor %vm1887, %vm1888
    %v1890 = vsel %vm1889, %v1882, %v1886
    %v1891 = vand.u32 2147483647, %v1855
    %vm1892 = vcmp.eq.f32.partialorder %v1891, 8.507059e+37
    %v1893 = vand.u32 %v1855, 2147483648
    %v1894 = vor.u32 1.1754944e-38, %v1893
    %v1895 = vsel %vm1892, %v1894, %v1890
    %v1896 = vrcp.pop %v1858
    %v1897 = vmul.f32 %v1858, %v1896
    %v1898 = vsub.f32 1.0, %v1897
    %v1899 = vmul.f32 %v1896, %v1898
    %v1900 = vadd.f32 %v1896, %v1899
    %vm1901 = vweird.f32 %v1858
    %vm1902 = vweird.f32 %v1896
    %vm1903 = vmor %vm1901, %vm1902
    %v1904 = vsel %vm1903, %v1896, %v1900
    %v1905 = vand.u32 2147483647, %v1858
    %vm1906 = vcmp.eq.f32.partialorder %v1905, 8.507059e+37
    %v1907 = vand.u32 %v1858, 2147483648
    %v1908 = vor.u32 1.1754944e-38, %v1907
    %v1909 = vsel %vm1906, %v1908, %v1904
    %v1910 = vrcp.pop %v1861
    %v1911 = vmul.f32 %v1861, %v1910
    %v1912 = vsub.f32 1.0, %v1911
    %v1913 = vmul.f32 %v1910, %v1912
    %v1914 = vadd.f32 %v1910, %v1913
    %vm1915 = vweird.f32 %v1861
    %vm1916 = vweird.f32 %v1910
    %vm1917 = vmor %vm1915, %vm1916
    %v1918 = vsel %vm1917, %v1910, %v1914
    %v1919 = vand.u32 2147483647, %v1861
    %vm1920 = vcmp.eq.f32.partialorder %v1919, 8.507059e+37
    %v1921 = vand.u32 %v1861, 2147483648
    %v1922 = vor.u32 1.1754944e-38, %v1921
    %v1923 = vsel %vm1920, %v1922, %v1918
    %v1924 = vrcp.pop %v1864
    %v1925 = vmul.f32 %v1864, %v1924
    %v1926 = vsub.f32 1.0, %v1925
    %v1927 = vmul.f32 %v1924, %v1926
    %v1928 = vadd.f32 %v1924, %v1927
    %vm1929 = vweird.f32 %v1864
    %vm1930 = vweird.f32 %v1924
    %vm1931 = vmor %vm1929, %vm1930
    %v1932 = vsel %vm1931, %v1924, %v1928
    %v1933 = vand.u32 2147483647, %v1864
    %vm1934 = vcmp.eq.f32.partialorder %v1933, 8.507059e+37
    %v1935 = vand.u32 %v1864, 2147483648
    %v1936 = vor.u32 1.1754944e-38, %v1935
    %v1937 = vsel %vm1934, %v1936, %v1932
    %v1938 = vrcp.pop %v1867
    %v1939 = vmul.f32 %v1867, %v1938
    %v1940 = vsub.f32 1.0, %v1939
    %v1941 = vmul.f32 %v1938, %v1940
    %v1942 = vadd.f32 %v1938, %v1941
    %vm1943 = vweird.f32 %v1867
    %vm1944 = vweird.f32 %v1938
    %vm1945 = vmor %vm1943, %vm1944
    %v1946 = vsel %vm1945, %v1938, %v1942
    %v1947 = vand.u32 2147483647, %v1867
    %vm1948 = vcmp.eq.f32.partialorder %v1947, 8.507059e+37
    %v1949 = vand.u32 %v1867, 2147483648
    %v1950 = vor.u32 1.1754944e-38, %v1949
    %v1951 = vsel %vm1948, %v1950, %v1946
    %v1952 = vmul.f32 %v1839, %v1881
    %v1953 = vmul.f32 %v1841, %v1895
    %v1954 = vmul.f32 %v1843, %v1909
    %v1955 = vmul.f32 %v1845, %v1923
    %v1956 = vmul.f32 %v1847, %v1937
    %v1957 = vmul.f32 %v1849, %v1951
    %v1958 = vpack.c.bf16 %v1952, %v1952
    %v1959 = vpack.c.bf16 %v1953, %v1953
    %v1960 = vpack.c.bf16 %v1954, %v1954
    %v1961 = vpack.c.bf16 %v1955, %v1955
    %v1962 = vpack.c.bf16 %v1956, %v1956
    %v1963 = vpack.c.bf16 %v1957, %v1957
    %1964 = vrot.lane.b32.xlu0 %v294, 40
    %v1965 = vpop.permute.xlu0 %1964
    %v1967 = vsel %vm297, %v1958, 0
    %v1970 = vsel %vm622, %v1965, 0
    %1972 = vmatpush.bf16.msra.mxu0 0
    %1973 = vmatpush.bf16.msra.mxu0 0
    %1974 = vmatpush.bf16.msra.mxu0 0
    %1975 = vmatpush.bf16.msra.mxu0 0
    %1976 = vmatpush.bf16.msra.mxu0 0
    %1977 = vmatpush.bf16.msra.mxu0 0
    %1978 = vmatpush.bf16.msra.mxu0 0
    %1979 = vmatpush.bf16.msra.mxu0 %v1970
    %1980 = vmatmul.bf16.gmra.mxu0 %v1967
    %v1981 = vpop.f32.mrf.mxu0
    %v1982 = vadd.f32 0.0, %v1981
    %v1983 = vpop.f32.mrf.mxu0
    %1984 = vdwg.mxu0
    %1985 = vrot.lane.b32.xlu0 %v319, 40
    %v1986 = vpop.permute.xlu0 %1985
    %v1988 = vsel %vm297, %v1959, 0
    %v1991 = vsel %vm622, %v1986, 0
    %1993 = vmatpush.bf16.msra.mxu0 0
    %1994 = vmatpush.bf16.msra.mxu0 0
    %1995 = vmatpush.bf16.msra.mxu0 0
    %1996 = vmatpush.bf16.msra.mxu0 0
    %1997 = vmatpush.bf16.msra.mxu0 0
    %1998 = vmatpush.bf16.msra.mxu0 0
    %1999 = vmatpush.bf16.msra.mxu0 0
    %2000 = vmatpush.bf16.msra.mxu0 %v1991
    %2001 = vmatmul.bf16.gmra.mxu0 %v1988
    %v2002 = vpop.f32.mrf.mxu0
    %v2003 = vadd.f32 0.0, %v2002
    %v2004 = vpop.f32.mrf.mxu0
    %2005 = vdwg.mxu0
    %2006 = vrot.lane.b32.xlu0 %v343, 40
    %v2007 = vpop.permute.xlu0 %2006
    %v2009 = vsel %vm297, %v1960, 0
    %v2012 = vsel %vm622, %v2007, 0
    %2014 = vmatpush.bf16.msra.mxu0 0
    %2015 = vmatpush.bf16.msra.mxu0 0
    %2016 = vmatpush.bf16.msra.mxu0 0
    %2017 = vmatpush.bf16.msra.mxu0 0
    %2018 = vmatpush.bf16.msra.mxu0 0
    %2019 = vmatpush.bf16.msra.mxu0 0
    %2020 = vmatpush.bf16.msra.mxu0 0
    %2021 = vmatpush.bf16.msra.mxu0 %v2012
    %2022 = vmatmul.bf16.gmra.mxu0 %v2009
    %v2023 = vpop.f32.mrf.mxu0
    %v2024 = vadd.f32 0.0, %v2023
    %v2025 = vpop.f32.mrf.mxu0
    %2026 = vdwg.mxu0
    %2027 = vrot.lane.b32.xlu0 %v367, 40
    %v2028 = vpop.permute.xlu0 %2027
    %v2030 = vsel %vm297, %v1961, 0
    %v2033 = vsel %vm622, %v2028, 0
    %2035 = vmatpush.bf16.msra.mxu0 0
    %2036 = vmatpush.bf16.msra.mxu0 0
    %2037 = vmatpush.bf16.msra.mxu0 0
    %2038 = vmatpush.bf16.msra.mxu0 0
    %2039 = vmatpush.bf16.msra.mxu0 0
    %2040 = vmatpush.bf16.msra.mxu0 0
    %2041 = vmatpush.bf16.msra.mxu0 0
    %2042 = vmatpush.bf16.msra.mxu0 %v2033
    %2043 = vmatmul.bf16.gmra.mxu0 %v2030
    %v2044 = vpop.f32.mrf.mxu0
    %v2045 = vadd.f32 0.0, %v2044
    %v2046 = vpop.f32.mrf.mxu0
    %2047 = vdwg.mxu0
    %2048 = vrot.lane.b32.xlu0 %v391, 40
    %v2049 = vpop.permute.xlu0 %2048
    %v2051 = vsel %vm297, %v1962, 0
    %v2054 = vsel %vm622, %v2049, 0
    %2056 = vmatpush.bf16.msra.mxu0 0
    %2057 = vmatpush.bf16.msra.mxu0 0
    %2058 = vmatpush.bf16.msra.mxu0 0
    %2059 = vmatpush.bf16.msra.mxu0 0
    %2060 = vmatpush.bf16.msra.mxu0 0
    %2061 = vmatpush.bf16.msra.mxu0 0
    %2062 = vmatpush.bf16.msra.mxu0 0
    %2063 = vmatpush.bf16.msra.mxu0 %v2054
    %2064 = vmatmul.bf16.gmra.mxu0 %v2051
    %v2065 = vpop.f32.mrf.mxu0
    %v2066 = vadd.f32 0.0, %v2065
    %v2067 = vpop.f32.mrf.mxu0
    %2068 = vdwg.mxu0
    %2069 = vrot.lane.b32.xlu0 %v415, 40
    %v2070 = vpop.permute.xlu0 %2069
    %v2072 = vsel %vm297, %v1963, 0
    %v2075 = vsel %vm622, %v2070, 0
    %2077 = vmatpush.bf16.msra.mxu0 0
    %2078 = vmatpush.bf16.msra.mxu0 0
    %2079 = vmatpush.bf16.msra.mxu0 0
    %2080 = vmatpush.bf16.msra.mxu0 0
    %2081 = vmatpush.bf16.msra.mxu0 0
    %2082 = vmatpush.bf16.msra.mxu0 0
    %2083 = vmatpush.bf16.msra.mxu0 0
    %2084 = vmatpush.bf16.msra.mxu0 %v2075
    %2085 = vmatmul.bf16.gmra.mxu0 %v2072
    %v2086 = vpop.f32.mrf.mxu0
    %v2087 = vadd.f32 0.0, %v2086
    %v2088 = vpop.f32.mrf.mxu0
    %2089 = vdwg.mxu0
    %2096 = vrot.lane.b32.xlu0 %v1982, 24
    %v2097 = vpop.permute.xlu0 %2096
    %2098 = vrot.lane.b32.xlu0 %v2003, 24
    %v2099 = vpop.permute.xlu0 %2098
    %2100 = vrot.lane.b32.xlu0 %v2024, 24
    %v2101 = vpop.permute.xlu0 %2100
    %2102 = vrot.lane.b32.xlu0 %v2045, 24
    %v2103 = vpop.permute.xlu0 %2102
    %2104 = vrot.lane.b32.xlu0 %v2066, 24
    %v2105 = vpop.permute.xlu0 %2104
    %2106 = vrot.lane.b32.xlu0 %v2087, 24
    %v2107 = vpop.permute.xlu0 %2106
    %vm2114 = vcmask 261312
    %2115 = vst.msk [vmem:[#allocation2] sm:$0xff] %vm2114, %v2097
    %2116 = vst.msk [vmem:[#allocation2 + $0x8] sm:$0xff] %vm2114, %v2099
    %2117 = vst.msk [vmem:[#allocation2 + $0x10] sm:$0xff] %vm2114, %v2101
    %2118 = vst.msk [vmem:[#allocation2 + $0x18] sm:$0xff] %vm2114, %v2103
    %2119 = vst.msk [vmem:[#allocation2 + $0x20] sm:$0xff] %vm2114, %v2105
    %2120 = vst.msk [vmem:[#allocation2 + $0x28] sm:$0xff] %vm2114, %v2107
    %v2121 = vld [vmem:[#allocation2] sm:$0xff]
    %v2122 = vld [vmem:[#allocation2 + $0x8] sm:$0xff]
    %v2123 = vld [vmem:[#allocation2 + $0x10] sm:$0xff]
    %v2124 = vld [vmem:[#allocation2 + $0x18] sm:$0xff]
    %v2125 = vld [vmem:[#allocation2 + $0x20] sm:$0xff]
    %v2126 = vld [vmem:[#allocation2 + $0x28] sm:$0xff]
    %v2127 = vpack.c.bf16 %v2122, %v2121
    %v2128 = vpack.c.bf16 %v2124, %v2123
    %v2129 = vpack.c.bf16 %v2126, %v2125
    %v2130 = vld [vmem:[%s8] sm:$0xf]
    %v2131 = vld [vmem:[%s8 + $0x4] sm:$0xf]
    %v2132 = vld [vmem:[%s8 + $0x8] sm:$0xf]
    %v2133 = vld [vmem:[%s8 + $0xc] sm:$0xf]
    %v2134 = vld [vmem:[%s9] sm:$0x1]
    %v2136 = vperm.slane %v2134, 0
    %v2142 = vunpack.c.l.b16 %v2130
    %v2143 = vunpack.c.l.b16 %v2131
    %v2144 = vunpack.c.l.b16 %v2132
    %v2145 = vunpack.c.l.b16 %v2133
    %v2146 = vpack.c.b16 %v2143, %v2142
    %v2147 = vpack.c.b16 %v2145, %v2144
    %v2151 = vsel %vm252, %v2127, 0
    %v2154 = vsel %vm252, %v2128, 0
    %v2157 = vsel %vm252, %v2129, 0
    %2159 = vmatpush.bf16.msra.mxu0 0
    %2160 = vmatpush.bf16.msra.mxu0 0
    %2161 = vmatpush.bf16.msra.mxu0 0
    %2162 = vmatpush.bf16.msra.mxu0 0
    %2163 = vmatpush.bf16.msra.mxu0 0
    %2164 = vmatpush.bf16.msra.mxu0 0
    %2165 = vmatpush.bf16.msra.mxu0 %v2147
    %2166 = vmatpush.bf16.msra.mxu0 %v2146
    %2167 = vmatmul.bf16.gmra.mxu0 %v2151
    %v2168 = vpop.f32.mrf.mxu0
    %v2169 = vadd.f32 %v2136, %v2168
    %v2170 = vpop.f32.mrf.mxu0
    %v2171 = vadd.f32 %v2136, %v2170
    %2172 = vmatmul.bf16.gmra.mxu0 %v2154
    %v2173 = vpop.f32.mrf.mxu0
    %v2174 = vadd.f32 %v2136, %v2173
    %v2175 = vpop.f32.mrf.mxu0
    %v2176 = vadd.f32 %v2136, %v2175
    %2177 = vmatmul.bf16.gmra.mxu0 %v2157
    %v2178 = vpop.f32.mrf.mxu0
    %v2179 = vadd.f32 %v2136, %v2178
    %v2180 = vpop.f32.mrf.mxu0
    %v2181 = vadd.f32 %v2136, %v2180
    %2182 = vdwg.mxu0
    %v2183 = vadd.f32 %v217, %v2169
    %v2184 = vadd.f32 %v218, %v2171
    %v2185 = vadd.f32 %v219, %v2174
    %v2186 = vadd.f32 %v220, %v2176
    %v2187 = vadd.f32 %v221, %v2179
    %v2188 = vadd.f32 %v222, %v2181
    %v2189 = vsel %vm252, %v2183, 0.0
    %2190 = vadd.xlane.f32.xlu0 %v2189
    %v2191 = vpop.xlane.xlu0 %2190
    %v2192 = vsel %vm252, %v2184, 0.0
    %2193 = vadd.xlane.f32.xlu0 %v2192
    %v2194 = vpop.xlane.xlu0 %2193
    %v2195 = vsel %vm252, %v2185, 0.0
    %2196 = vadd.xlane.f32.xlu0 %v2195
    %v2197 = vpop.xlane.xlu0 %2196
    %v2198 = vsel %vm252, %v2186, 0.0
    %2199 = vadd.xlane.f32.xlu0 %v2198
    %v2200 = vpop.xlane.xlu0 %2199
    %v2201 = vsel %vm252, %v2187, 0.0
    %2202 = vadd.xlane.f32.xlu0 %v2201
    %v2203 = vpop.xlane.xlu0 %2202
    %v2204 = vsel %vm252, %v2188, 0.0
    %2205 = vadd.xlane.f32.xlu0 %v2204
    %v2206 = vpop.xlane.xlu0 %2205
    %v2207 = vrcp.pop 32.0
    %v2208 = vmul.f32 32.0, %v2207
    %v2209 = vsub.f32 1.0, %v2208
    %v2210 = vmul.f32 %v2207, %v2209
    %v2211 = vadd.f32 %v2207, %v2210
    %vm2212 = vweird.f32 %v2207
    %v2213 = vsel %vm2212, %v2207, %v2211
    %v2214 = vmul.f32 %v2191, %v2213
    %v2215 = vmul.f32 %v2194, %v2213
    %v2216 = vmul.f32 %v2197, %v2213
    %v2217 = vmul.f32 %v2200, %v2213
    %v2218 = vmul.f32 %v2203, %v2213
    %v2219 = vmul.f32 %v2206, %v2213
    %v2220 = vsub.f32 %v2183, %v2214
    %v2221 = vsub.f32 %v2184, %v2215
    %v2222 = vsub.f32 %v2185, %v2216
    %v2223 = vsub.f32 %v2186, %v2217
    %v2224 = vsub.f32 %v2187, %v2218
    %v2225 = vsub.f32 %v2188, %v2219
    %v2226 = vmul.f32 %v2220, %v2220
    %v2227 = vmul.f32 %v2221, %v2221
    %v2228 = vmul.f32 %v2222, %v2222
    %v2229 = vmul.f32 %v2223, %v2223
    %v2230 = vmul.f32 %v2224, %v2224
    %v2231 = vmul.f32 %v2225, %v2225
    %v2232 = vsel %vm252, %v2226, 0.0
    %2233 = vadd.xlane.f32.xlu0 %v2232
    %v2234 = vpop.xlane.xlu0 %2233
    %v2235 = vsel %vm252, %v2227, 0.0
    %2236 = vadd.xlane.f32.xlu0 %v2235
    %v2237 = vpop.xlane.xlu0 %2236
    %v2238 = vsel %vm252, %v2228, 0.0
    %2239 = vadd.xlane.f32.xlu0 %v2238
    %v2240 = vpop.xlane.xlu0 %2239
    %v2241 = vsel %vm252, %v2229, 0.0
    %2242 = vadd.xlane.f32.xlu0 %v2241
    %v2243 = vpop.xlane.xlu0 %2242
    %v2244 = vsel %vm252, %v2230, 0.0
    %2245 = vadd.xlane.f32.xlu0 %v2244
    %v2246 = vpop.xlane.xlu0 %2245
    %v2247 = vsel %vm252, %v2231, 0.0
    %2248 = vadd.xlane.f32.xlu0 %v2247
    %v2249 = vpop.xlane.xlu0 %2248
    %v2250 = vmul.f32 %v2234, %v2213
    %v2251 = vmul.f32 %v2237, %v2213
    %v2252 = vmul.f32 %v2240, %v2213
    %v2253 = vmul.f32 %v2243, %v2213
    %v2254 = vmul.f32 %v2246, %v2213
    %v2255 = vmul.f32 %v2249, %v2213
    %v2256 = vadd.f32 %v2250, 1e-05
    %v2257 = vadd.f32 %v2251, 1e-05
    %v2258 = vadd.f32 %v2252, 1e-05
    %v2259 = vadd.f32 %v2253, 1e-05
    %v2260 = vadd.f32 %v2254, 1e-05
    %v2261 = vadd.f32 %v2255, 1e-05
    %v2262 = vrsqrt.pop %v2256
    %v2263 = vmul.f32 %v2262, %v2256
    %v2264 = vmul.f32 %v2263, %v2262
    %v2265 = vmul.f32 0.5, %v2264
    %v2266 = vsub.f32 1.5, %v2265
    %v2267 = vmul.f32 %v2262, %v2266
    %vm2268 = vweird.f32 %v2256
    %vm2269 = vweird.f32 %v2262
    %vm2270 = vmor %vm2268, %vm2269
    %v2271 = vsel %vm2270, %v2262, %v2267
    %v2272 = vrsqrt.pop %v2257
    %v2273 = vmul.f32 %v2272, %v2257
    %v2274 = vmul.f32 %v2273, %v2272
    %v2275 = vmul.f32 0.5, %v2274
    %v2276 = vsub.f32 1.5, %v2275
    %v2277 = vmul.f32 %v2272, %v2276
    %vm2278 = vweird.f32 %v2257
    %vm2279 = vweird.f32 %v2272
    %vm2280 = vmor %vm2278, %vm2279
    %v2281 = vsel %vm2280, %v2272, %v2277
    %v2282 = vrsqrt.pop %v2258
    %v2283 = vmul.f32 %v2282, %v2258
    %v2284 = vmul.f32 %v2283, %v2282
    %v2285 = vmul.f32 0.5, %v2284
    %v2286 = vsub.f32 1.5, %v2285
    %v2287 = vmul.f32 %v2282, %v2286
    %vm2288 = vweird.f32 %v2258
    %vm2289 = vweird.f32 %v2282
    %vm2290 = vmor %vm2288, %vm2289
    %v2291 = vsel %vm2290, %v2282, %v2287
    %v2292 = vrsqrt.pop %v2259
    %v2293 = vmul.f32 %v2292, %v2259
    %v2294 = vmul.f32 %v2293, %v2292
    %v2295 = vmul.f32 0.5, %v2294
    %v2296 = vsub.f32 1.5, %v2295
    %v2297 = vmul.f32 %v2292, %v2296
    %vm2298 = vweird.f32 %v2259
    %vm2299 = vweird.f32 %v2292
    %vm2300 = vmor %vm2298, %vm2299
    %v2301 = vsel %vm2300, %v2292, %v2297
    %v2302 = vrsqrt.pop %v2260
    %v2303 = vmul.f32 %v2302, %v2260
    %v2304 = vmul.f32 %v2303, %v2302
    %v2305 = vmul.f32 0.5, %v2304
    %v2306 = vsub.f32 1.5, %v2305
    %v2307 = vmul.f32 %v2302, %v2306
    %vm2308 = vweird.f32 %v2260
    %vm2309 = vweird.f32 %v2302
    %vm2310 = vmor %vm2308, %vm2309
    %v2311 = vsel %vm2310, %v2302, %v2307
    %v2312 = vrsqrt.pop %v2261
    %v2313 = vmul.f32 %v2312, %v2261
    %v2314 = vmul.f32 %v2313, %v2312
    %v2315 = vmul.f32 0.5, %v2314
    %v2316 = vsub.f32 1.5, %v2315
    %v2317 = vmul.f32 %v2312, %v2316
    %vm2318 = vweird.f32 %v2261
    %vm2319 = vweird.f32 %v2312
    %vm2320 = vmor %vm2318, %vm2319
    %v2321 = vsel %vm2320, %v2312, %v2317
    %v2322 = vmul.f32 %v2220, %v2271
    %v2323 = vmul.f32 %v2221, %v2281
    %v2324 = vmul.f32 %v2222, %v2291
    %v2325 = vmul.f32 %v2223, %v2301
    %v2326 = vmul.f32 %v2224, %v2311
    %v2327 = vmul.f32 %v2225, %v2321
    %v2328 = vld [vmem:[%s10] sm:$0x1]
    %v2330 = vperm.slane %v2328, 0
    %v2332 = vmul.f32 %v2322, %v2330
    %v2333 = vmul.f32 %v2323, %v2330
    %v2334 = vmul.f32 %v2324, %v2330
    %v2335 = vmul.f32 %v2325, %v2330
    %v2336 = vmul.f32 %v2326, %v2330
    %v2337 = vmul.f32 %v2327, %v2330
    %v2338 = vld [vmem:[%s11] sm:$0x1]
    %v2340 = vperm.slane %v2338, 0
    %v2342 = vadd.f32 %v2332, %v2340
    %v2343 = vadd.f32 %v2333, %v2340
    %v2344 = vadd.f32 %v2334, %v2340
    %v2345 = vadd.f32 %v2335, %v2340
    %v2346 = vadd.f32 %v2336, %v2340
    %v2347 = vadd.f32 %v2337, %v2340
    %v2348 = vpack.c.bf16 %v2343, %v2342
    %v2349 = vpack.c.bf16 %v2345, %v2344
    %v2350 = vpack.c.bf16 %v2347, %v2346
    %v2351 = vld [vmem:[%s12] sm:$0xf]
    %v2352 = vld [vmem:[%s12 + $0x4] sm:$0xf]
    %v2353 = vld [vmem:[%s12 + $0x8] sm:$0xf]
    %v2354 = vld [vmem:[%s12 + $0xc] sm:$0xf]
    %v2355 = vld [vmem:[%s13] sm:$0x1]
    %v2357 = vperm.slane %v2355, 0
    %v2363 = vunpack.c.l.b16 %v2351
    %v2364 = vunpack.c.l.b16 %v2352
    %v2365 = vunpack.c.l.b16 %v2353
    %v2366 = vunpack.c.l.b16 %v2354
    %v2367 = vpack.c.b16 %v2364, %v2363
    %v2368 = vpack.c.b16 %v2366, %v2365
    %v2372 = vsel %vm252, %v2348, 0
    %v2375 = vsel %vm252, %v2349, 0
    %v2378 = vsel %vm252, %v2350, 0
    %2380 = vmatpush.bf16.msra.mxu0 0
    %2381 = vmatpush.bf16.msra.mxu0 0
    %2382 = vmatpush.bf16.msra.mxu0 0
    %2383 = vmatpush.bf16.msra.mxu0 0
    %2384 = vmatpush.bf16.msra.mxu0 0
    %2385 = vmatpush.bf16.msra.mxu0 0
    %2386 = vmatpush.bf16.msra.mxu0 %v2368
    %2387 = vmatpush.bf16.msra.mxu0 %v2367
    %2388 = vmatmul.bf16.gmra.mxu0 %v2372
    %v2389 = vpop.f32.mrf.mxu0
    %v2390 = vadd.f32 %v2357, %v2389
    %v2391 = vpop.f32.mrf.mxu0
    %v2392 = vadd.f32 %v2357, %v2391
    %2393 = vmatmul.bf16.gmra.mxu0 %v2375
    %v2394 = vpop.f32.mrf.mxu0
    %v2395 = vadd.f32 %v2357, %v2394
    %v2396 = vpop.f32.mrf.mxu0
    %v2397 = vadd.f32 %v2357, %v2396
    %2398 = vmatmul.bf16.gmra.mxu0 %v2378
    %v2399 = vpop.f32.mrf.mxu0
    %v2400 = vadd.f32 %v2357, %v2399
    %v2401 = vpop.f32.mrf.mxu0
    %v2402 = vadd.f32 %v2357, %v2401
    %2403 = vdwg.mxu0
    %v2404 = vmax.f32 %v2390, 0.0
    %v2405 = vmax.f32 %v2392, 0.0
    %v2406 = vmax.f32 %v2395, 0.0
    %v2407 = vmax.f32 %v2397, 0.0
    %v2408 = vmax.f32 %v2400, 0.0
    %v2409 = vmax.f32 %v2402, 0.0
    %v2410 = vpack.c.bf16 %v2405, %v2404
    %v2411 = vpack.c.bf16 %v2407, %v2406
    %v2412 = vpack.c.bf16 %v2409, %v2408
    %v2413 = vld [vmem:[%s14] sm:$0xf]
    %v2414 = vld [vmem:[%s14 + $0x4] sm:$0xf]
    %v2415 = vld [vmem:[%s14 + $0x8] sm:$0xf]
    %v2416 = vld [vmem:[%s14 + $0xc] sm:$0xf]
    %v2417 = vld [vmem:[%s14 + $0x10] sm:$0xf]
    %v2418 = vld [vmem:[%s14 + $0x14] sm:$0xf]
    %v2419 = vld [vmem:[%s14 + $0x18] sm:$0xf]
    %v2420 = vld [vmem:[%s14 + $0x1c] sm:$0xf]
    %v2421 = vld [vmem:[%s15] sm:$0x1]
    %v2423 = vperm.slane %v2421, 0
    %v2433 = vunpack.c.l.b16 %v2413
    %v2434 = vunpack.c.l.b16 %v2414
    %v2435 = vunpack.c.l.b16 %v2415
    %v2436 = vunpack.c.l.b16 %v2416
    %v2437 = vunpack.c.l.b16 %v2417
    %v2438 = vunpack.c.l.b16 %v2418
    %v2439 = vunpack.c.l.b16 %v2419
    %v2440 = vunpack.c.l.b16 %v2420
    %v2441 = vpack.c.b16 %v2434, %v2433
    %v2442 = vpack.c.b16 %v2436, %v2435
    %v2443 = vpack.c.b16 %v2438, %v2437
    %v2444 = vpack.c.b16 %v2440, %v2439
    %vm2449 = vcmask 523264
    %v2451 = vsel %vm2449, %v2410, 0
    %v2454 = vsel %vm2449, %v2411, 0
    %v2457 = vsel %vm2449, %v2412, 0
    %2459 = vmatpush.bf16.msra.mxu0 0
    %2460 = vmatpush.bf16.msra.mxu0 0
    %2461 = vmatpush.bf16.msra.mxu0 0
    %2462 = vmatpush.bf16.msra.mxu0 0
    %2463 = vmatpush.bf16.msra.mxu0 %v2444
    %2464 = vmatpush.bf16.msra.mxu0 %v2443
    %2465 = vmatpush.bf16.msra.mxu0 %v2442
    %2466 = vmatpush.bf16.msra.mxu0 %v2441
    %2467 = vmatmul.bf16.gmra.mxu0 %v2451
    %v2468 = vpop.f32.mrf.mxu0
    %v2469 = vadd.f32 %v2423, %v2468
    %v2470 = vpop.f32.mrf.mxu0
    %v2471 = vadd.f32 %v2423, %v2470
    %2472 = vmatmul.bf16.gmra.mxu0 %v2454
    %v2473 = vpop.f32.mrf.mxu0
    %v2474 = vadd.f32 %v2423, %v2473
    %v2475 = vpop.f32.mrf.mxu0
    %v2476 = vadd.f32 %v2423, %v2475
    %2477 = vmatmul.bf16.gmra.mxu0 %v2457
    %v2478 = vpop.f32.mrf.mxu0
    %v2479 = vadd.f32 %v2423, %v2478
    %v2480 = vpop.f32.mrf.mxu0
    %v2481 = vadd.f32 %v2423, %v2480
    %2482 = vdwg.mxu0
    %v2483 = vadd.f32 %v2342, %v2469
    %v2484 = vadd.f32 %v2343, %v2471
    %v2485 = vadd.f32 %v2344, %v2474
    %v2486 = vadd.f32 %v2345, %v2476
    %v2487 = vadd.f32 %v2346, %v2479
    %v2488 = vadd.f32 %v2347, %v2481
    %v2489 = vsel %vm252, %v2483, 0.0
    %2490 = vadd.xlane.f32.xlu0 %v2489
    %v2491 = vpop.xlane.xlu0 %2490
    %v2492 = vsel %vm252, %v2484, 0.0
    %2493 = vadd.xlane.f32.xlu0 %v2492
    %v2494 = vpop.xlane.xlu0 %2493
    %v2495 = vsel %vm252, %v2485, 0.0
    %2496 = vadd.xlane.f32.xlu0 %v2495
    %v2497 = vpop.xlane.xlu0 %2496
    %v2498 = vsel %vm252, %v2486, 0.0
    %2499 = vadd.xlane.f32.xlu0 %v2498
    %v2500 = vpop.xlane.xlu0 %2499
    %v2501 = vsel %vm252, %v2487, 0.0
    %2502 = vadd.xlane.f32.xlu0 %v2501
    %v2503 = vpop.xlane.xlu0 %2502
    %v2504 = vsel %vm252, %v2488, 0.0
    %2505 = vadd.xlane.f32.xlu0 %v2504
    %v2506 = vpop.xlane.xlu0 %2505
    %v2507 = vmul.f32 %v2491, %v2213
    %v2508 = vmul.f32 %v2494, %v2213
    %v2509 = vmul.f32 %v2497, %v2213
    %v2510 = vmul.f32 %v2500, %v2213
    %v2511 = vmul.f32 %v2503, %v2213
    %v2512 = vmul.f32 %v2506, %v2213
    %v2513 = vsub.f32 %v2483, %v2507
    %v2514 = vsub.f32 %v2484, %v2508
    %v2515 = vsub.f32 %v2485, %v2509
    %v2516 = vsub.f32 %v2486, %v2510
    %v2517 = vsub.f32 %v2487, %v2511
    %v2518 = vsub.f32 %v2488, %v2512
    %v2519 = vmul.f32 %v2513, %v2513
    %v2520 = vmul.f32 %v2514, %v2514
    %v2521 = vmul.f32 %v2515, %v2515
    %v2522 = vmul.f32 %v2516, %v2516
    %v2523 = vmul.f32 %v2517, %v2517
    %v2524 = vmul.f32 %v2518, %v2518
    %v2525 = vsel %vm252, %v2519, 0.0
    %2526 = vadd.xlane.f32.xlu0 %v2525
    %v2527 = vpop.xlane.xlu0 %2526
    %v2528 = vsel %vm252, %v2520, 0.0
    %2529 = vadd.xlane.f32.xlu0 %v2528
    %v2530 = vpop.xlane.xlu0 %2529
    %v2531 = vsel %vm252, %v2521, 0.0
    %2532 = vadd.xlane.f32.xlu0 %v2531
    %v2533 = vpop.xlane.xlu0 %2532
    %v2534 = vsel %vm252, %v2522, 0.0
    %2535 = vadd.xlane.f32.xlu0 %v2534
    %v2536 = vpop.xlane.xlu0 %2535
    %v2537 = vsel %vm252, %v2523, 0.0
    %2538 = vadd.xlane.f32.xlu0 %v2537
    %v2539 = vpop.xlane.xlu0 %2538
    %v2540 = vsel %vm252, %v2524, 0.0
    %2541 = vadd.xlane.f32.xlu0 %v2540
    %v2542 = vpop.xlane.xlu0 %2541
    %v2543 = vmul.f32 %v2527, %v2213
    %v2544 = vmul.f32 %v2530, %v2213
    %v2545 = vmul.f32 %v2533, %v2213
    %v2546 = vmul.f32 %v2536, %v2213
    %v2547 = vmul.f32 %v2539, %v2213
    %v2548 = vmul.f32 %v2542, %v2213
    %v2549 = vadd.f32 %v2543, 1e-05
    %v2550 = vadd.f32 %v2544, 1e-05
    %v2551 = vadd.f32 %v2545, 1e-05
    %v2552 = vadd.f32 %v2546, 1e-05
    %v2553 = vadd.f32 %v2547, 1e-05
    %v2554 = vadd.f32 %v2548, 1e-05
    %v2555 = vrsqrt.pop %v2549
    %v2556 = vmul.f32 %v2555, %v2549
    %v2557 = vmul.f32 %v2556, %v2555
    %v2558 = vmul.f32 0.5, %v2557
    %v2559 = vsub.f32 1.5, %v2558
    %v2560 = vmul.f32 %v2555, %v2559
    %vm2561 = vweird.f32 %v2549
    %vm2562 = vweird.f32 %v2555
    %vm2563 = vmor %vm2561, %vm2562
    %v2564 = vsel %vm2563, %v2555, %v2560
    %v2565 = vrsqrt.pop %v2550
    %v2566 = vmul.f32 %v2565, %v2550
    %v2567 = vmul.f32 %v2566, %v2565
    %v2568 = vmul.f32 0.5, %v2567
    %v2569 = vsub.f32 1.5, %v2568
    %v2570 = vmul.f32 %v2565, %v2569
    %vm2571 = vweird.f32 %v2550
    %vm2572 = vweird.f32 %v2565
    %vm2573 = vmor %vm2571, %vm2572
    %v2574 = vsel %vm2573, %v2565, %v2570
    %v2575 = vrsqrt.pop %v2551
    %v2576 = vmul.f32 %v2575, %v2551
    %v2577 = vmul.f32 %v2576, %v2575
    %v2578 = vmul.f32 0.5, %v2577
    %v2579 = vsub.f32 1.5, %v2578
    %v2580 = vmul.f32 %v2575, %v2579
    %vm2581 = vweird.f32 %v2551
    %vm2582 = vweird.f32 %v2575
    %vm2583 = vmor %vm2581, %vm2582
    %v2584 = vsel %vm2583, %v2575, %v2580
    %v2585 = vrsqrt.pop %v2552
    %v2586 = vmul.f32 %v2585, %v2552
    %v2587 = vmul.f32 %v2586, %v2585
    %v2588 = vmul.f32 0.5, %v2587
    %v2589 = vsub.f32 1.5, %v2588
    %v2590 = vmul.f32 %v2585, %v2589
    %vm2591 = vweird.f32 %v2552
    %vm2592 = vweird.f32 %v2585
    %vm2593 = vmor %vm2591, %vm2592
    %v2594 = vsel %vm2593, %v2585, %v2590
    %v2595 = vrsqrt.pop %v2553
    %v2596 = vmul.f32 %v2595, %v2553
    %v2597 = vmul.f32 %v2596, %v2595
    %v2598 = vmul.f32 0.5, %v2597
    %v2599 = vsub.f32 1.5, %v2598
    %v2600 = vmul.f32 %v2595, %v2599
    %vm2601 = vweird.f32 %v2553
    %vm2602 = vweird.f32 %v2595
    %vm2603 = vmor %vm2601, %vm2602
    %v2604 = vsel %vm2603, %v2595, %v2600
    %v2605 = vrsqrt.pop %v2554
    %v2606 = vmul.f32 %v2605, %v2554
    %v2607 = vmul.f32 %v2606, %v2605
    %v2608 = vmul.f32 0.5, %v2607
    %v2609 = vsub.f32 1.5, %v2608
    %v2610 = vmul.f32 %v2605, %v2609
    %vm2611 = vweird.f32 %v2554
    %vm2612 = vweird.f32 %v2605
    %vm2613 = vmor %vm2611, %vm2612
    %v2614 = vsel %vm2613, %v2605, %v2610
    %v2615 = vmul.f32 %v2513, %v2564
    %v2616 = vmul.f32 %v2514, %v2574
    %v2617 = vmul.f32 %v2515, %v2584
    %v2618 = vmul.f32 %v2516, %v2594
    %v2619 = vmul.f32 %v2517, %v2604
    %v2620 = vmul.f32 %v2518, %v2614
    %v2621 = vld [vmem:[%s16] sm:$0x1]
    %v2623 = vperm.slane %v2621, 0
    %v2625 = vmul.f32 %v2615, %v2623
    %v2626 = vmul.f32 %v2616, %v2623
    %v2627 = vmul.f32 %v2617, %v2623
    %v2628 = vmul.f32 %v2618, %v2623
    %v2629 = vmul.f32 %v2619, %v2623
    %v2630 = vmul.f32 %v2620, %v2623
    %v2631 = vld [vmem:[%s17] sm:$0x1]
    %v2633 = vperm.slane %v2631, 0
    %v2635 = vadd.f32 %v2625, %v2633
    %v2636 = vadd.f32 %v2626, %v2633
    %v2637 = vadd.f32 %v2627, %v2633
    %v2638 = vadd.f32 %v2628, %v2633
    %v2639 = vadd.f32 %v2629, %v2633
    %v2640 = vadd.f32 %v2630, %v2633
    %2641 = vst.msk [vmem:[#allocation3] sm:$0xff] %vm252, %v2635
    %2642 = vst.msk [vmem:[#allocation3 + $0x8] sm:$0xff] %vm252, %v2636
    %2643 = vst.msk [vmem:[#allocation3 + $0x10] sm:$0xff] %vm252, %v2637
    %2644 = vst.msk [vmem:[#allocation3 + $0x18] sm:$0xff] %vm252, %v2638
    %2645 = vst.msk [vmem:[#allocation3 + $0x20] sm:$0xff] %vm252, %v2639
    %2646 = vst.msk [vmem:[#allocation3 + $0x28] sm:$0xff] %vm252, %v2640
    // Predicated region
    $region74: #{tpu_custom_call.1} parent=1 // pred_check
      _
    $region75: #{tpu_custom_call.1} parent=1 // pred_check_branch
      %2648 = sbr.rel (0) target = $region77
    $region76: #{tpu_custom_call.1} parent=1 // pred_region
      %2650 = vsyncadd [#allocation4], 0
      %s2651 = sshll.u32 [#allocation3], 4
      %s2652 = int_to_ptr.vmem [resolvable:$true] %s2651
      %s2653 = sshll.u32 %s18, 4
      %s2654 = int_to_ptr.hbm [resolvable:$true] %s2653
      %2659 = dma.vmem_to_hbm [thread:$0]  %s2652, 768, %s2654, [#allocation4], 128, 128, 8
    $region77: #{tpu_custom_call.1} parent=1 // pred_fallthru
      _
    // Predicated region
    $region78: #{tpu_custom_call.1} parent=1 // pred_check
      _
    $region79: #{tpu_custom_call.1} parent=1 // pred_check_branch
      %2661 = sbr.rel (0) target = $region81
    $region80: #{tpu_custom_call.1} parent=1 // pred_region
      %2663 = dma.done [#allocation4], 768
    $region81: #{tpu_custom_call.1} parent=1 // pred_fallthru
      _
    %2664 = vsyncpa [#allocation4], 1

</llo_original>
